<compile_context>
chip_gen: v7x
topology: tpu7x:2x2x1
jax: 0.10.0
libtpu: 0.0.40
codegen_flags: <defaults>
</compile_context>

<pallas_src>
import functools

import jax
import jax.numpy as jnp
from jax.experimental import pallas as pl
from jax.experimental.pallas import tpu as pltpu


# ------------------------------- helpers ----------------------------------- #

def _cparams(dim_sem):
    return pltpu.CompilerParams(
        dimension_semantics=dim_sem,
        vmem_limit_bytes=32 * 1024 * 1024,
    )


def _row_tile(n):
    """Largest row tile (multiple of 8, <=512) that divides n."""
    for t in (512, 256, 128, 64, 32, 16, 8):
        if n % t == 0:
            return t
    return n


# ----------------------------- Pallas kernels ------------------------------ #

def _qkv_proj_kernel(x_ref, w_ref, b_ref, q_ref, k_ref, v_ref, *, d_model, in_scale):
    x = x_ref[...]
    if in_scale != 1.0:
        x = x * in_scale
    acc = jnp.dot(x, w_ref[...], preferred_element_type=jnp.float32) + b_ref[...]
    q_ref[...] = acc[:, :d_model].astype(q_ref.dtype)
    k_ref[...] = acc[:, d_model:2 * d_model].astype(k_ref.dtype)
    v_ref[...] = acc[:, 2 * d_model:3 * d_model].astype(v_ref.dtype)


def _kv_proj_kernel(x_ref, w_ref, b_ref, k_ref, v_ref, *, d_model):
    acc = jnp.dot(x_ref[...], w_ref[...], preferred_element_type=jnp.float32) + b_ref[...]
    k_ref[...] = acc[:, :d_model].astype(k_ref.dtype)
    v_ref[...] = acc[:, d_model:2 * d_model].astype(v_ref.dtype)


def _linear_kernel(x_ref, w_ref, b_ref, o_ref):
    acc = jnp.dot(x_ref[...], w_ref[...], preferred_element_type=jnp.float32)
    o_ref[...] = (acc + b_ref[...]).astype(o_ref.dtype)


def _attn_kernel(q_ref, k_ref, v_ref, o_ref, *, num_heads, scale):
    # One batch element per grid step; all heads processed from the packed
    # (S, d_model) tiles so K/V are DMA'd once per batch element and the
    # output is written as one lane-dense (S, d_model) slab.
    q = q_ref[0]            # (Sq, D)
    k = k_ref[0]            # (Sk, D)
    v = v_ref[0]            # (Sk, D)
    dp = q.shape[-1] // num_heads
    outs = []
    for h in range(num_heads):
        sl = slice(h * dp, (h + 1) * dp)
        qh = q[:, sl]
        kh = k[:, sl]
        vh = v[:, sl]
        logits = jnp.dot(qh, kh.T, preferred_element_type=jnp.float32) * scale
        logits = logits - jnp.max(logits, axis=-1, keepdims=True)
        p = jnp.exp(logits)
        p = p * pl.reciprocal(jnp.sum(p, axis=-1, keepdims=True), approx=True)
        outs.append(jnp.dot(p, vh, preferred_element_type=jnp.float32))
    o_ref[0] = jnp.concatenate(outs, axis=-1).astype(o_ref.dtype)


def _proj_add_ln_kernel(x_ref, w_ref, b_ref, res_ref, g_ref, beta_ref, o_ref,
                        *, eps, res_scale):
    # LayerNorm((x @ W + b) + res_scale * residual) fused into the matmul epilogue.
    acc = jnp.dot(x_ref[...], w_ref[...], preferred_element_type=jnp.float32) + b_ref[...]
    res = res_ref[...]
    if res_scale != 1.0:
        res = res * res_scale
    y = acc + res
    mu = jnp.mean(y, axis=-1, keepdims=True)
    var = jnp.mean(jnp.square(y - mu), axis=-1, keepdims=True)
    yn = (y - mu) * jax.lax.rsqrt(var + eps)
    o_ref[...] = (yn * g_ref[...] + beta_ref[...]).astype(o_ref.dtype)


def _ffn_add_ln_kernel(x_ref, w1_ref, b1_ref, w2_ref, b2_ref, g_ref, beta_ref, o_ref,
                       *, eps):
    # LayerNorm(relu(x @ W1 + b1) @ W2 + b2 + x) fused in one kernel.
    x = x_ref[...]
    h = jnp.maximum(
        jnp.dot(x, w1_ref[...], preferred_element_type=jnp.float32) + b1_ref[...], 0.0)
    y = jnp.dot(h, w2_ref[...], preferred_element_type=jnp.float32) + b2_ref[...] + x
    mu = jnp.mean(y, axis=-1, keepdims=True)
    var = jnp.mean(jnp.square(y - mu), axis=-1, keepdims=True)
    yn = (y - mu) * jax.lax.rsqrt(var + eps)
    o_ref[...] = (yn * g_ref[...] + beta_ref[...]).astype(o_ref.dtype)


# ----------------------------- Pallas wrappers ----------------------------- #

def pallas_qkv_proj(x2d, w, b, d_model, in_scale=1.0):
    N, din = x2d.shape
    tm = _row_tile(N)
    out_sd = jax.ShapeDtypeStruct((N, d_model), x2d.dtype)
    o_spec = pl.BlockSpec((tm, d_model), lambda i: (i, 0))
    return pl.pallas_call(
        functools.partial(_qkv_proj_kernel, d_model=d_model, in_scale=float(in_scale)),
        out_shape=(out_sd, out_sd, out_sd),
        grid=(N // tm,),
        in_specs=[pl.BlockSpec((tm, din), lambda i: (i, 0)),
                  pl.BlockSpec((din, 3 * d_model), lambda i: (0, 0)),
                  pl.BlockSpec((1, 3 * d_model), lambda i: (0, 0))],
        out_specs=(o_spec, o_spec, o_spec),
        compiler_params=_cparams(("parallel",)),
    )(x2d, w, b.reshape(1, -1))


def pallas_kv_proj(x2d, w, b, d_model):
    N, din = x2d.shape
    tm = _row_tile(N)
    out_sd = jax.ShapeDtypeStruct((N, d_model), x2d.dtype)
    o_spec = pl.BlockSpec((tm, d_model), lambda i: (i, 0))
    return pl.pallas_call(
        functools.partial(_kv_proj_kernel, d_model=d_model),
        out_shape=(out_sd, out_sd),
        grid=(N // tm,),
        in_specs=[pl.BlockSpec((tm, din), lambda i: (i, 0)),
                  pl.BlockSpec((din, 2 * d_model), lambda i: (0, 0)),
                  pl.BlockSpec((1, 2 * d_model), lambda i: (0, 0))],
        out_specs=(o_spec, o_spec),
        compiler_params=_cparams(("parallel",)),
    )(x2d, w, b.reshape(1, -1))


def pallas_linear(x2d, w, b):
    N, din = x2d.shape
    dout = w.shape[1]
    tm = _row_tile(N)
    return pl.pallas_call(
        _linear_kernel,
        out_shape=jax.ShapeDtypeStruct((N, dout), x2d.dtype),
        grid=(N // tm,),
        in_specs=[pl.BlockSpec((tm, din), lambda i: (i, 0)),
                  pl.BlockSpec((din, dout), lambda i: (0, 0)),
                  pl.BlockSpec((1, dout), lambda i: (0, 0))],
        out_specs=pl.BlockSpec((tm, dout), lambda i: (i, 0)),
        compiler_params=_cparams(("parallel",)),
    )(x2d, w, b.reshape(1, -1))


def pallas_attention(q, k, v, num_heads):
    # q: (B, Sq, D), k/v: (B, Sk, D) packed head layout; output (B, Sq, D).
    B, Sq, D = q.shape
    Sk = k.shape[1]
    dp = D // num_heads
    scale = 1.0 / float(dp) ** 0.5
    return pl.pallas_call(
        functools.partial(_attn_kernel, num_heads=num_heads, scale=scale),
        out_shape=jax.ShapeDtypeStruct((B, Sq, D), q.dtype),
        grid=(B,),
        in_specs=[pl.BlockSpec((1, Sq, D), lambda b: (b, 0, 0)),
                  pl.BlockSpec((1, Sk, D), lambda b: (b, 0, 0)),
                  pl.BlockSpec((1, Sk, D), lambda b: (b, 0, 0))],
        out_specs=pl.BlockSpec((1, Sq, D), lambda b: (b, 0, 0)),
        compiler_params=_cparams(("parallel",)),
    )(q, k, v)


def pallas_proj_add_ln(x2d, w, b, res2d, gamma, beta, *, res_scale=1.0, eps=1e-6):
    N, din = x2d.shape
    dout = w.shape[1]
    tm = _row_tile(N)
    return pl.pallas_call(
        functools.partial(_proj_add_ln_kernel, eps=eps, res_scale=float(res_scale)),
        out_shape=jax.ShapeDtypeStruct((N, dout), x2d.dtype),
        grid=(N // tm,),
        in_specs=[pl.BlockSpec((tm, din), lambda i: (i, 0)),
                  pl.BlockSpec((din, dout), lambda i: (0, 0)),
                  pl.BlockSpec((1, dout), lambda i: (0, 0)),
                  pl.BlockSpec((tm, dout), lambda i: (i, 0)),
                  pl.BlockSpec((1, dout), lambda i: (0, 0)),
                  pl.BlockSpec((1, dout), lambda i: (0, 0))],
        out_specs=pl.BlockSpec((tm, dout), lambda i: (i, 0)),
        compiler_params=_cparams(("parallel",)),
    )(x2d, w, b.reshape(1, -1), res2d, gamma.reshape(1, -1), beta.reshape(1, -1))


def pallas_ffn_add_ln(x2d, w1, b1, w2, b2, gamma, beta, *, eps=1e-6):
    N, din = x2d.shape
    dff = w1.shape[1]
    dout = w2.shape[1]
    tm = _row_tile(N)
    return pl.pallas_call(
        functools.partial(_ffn_add_ln_kernel, eps=eps),
        out_shape=jax.ShapeDtypeStruct((N, dout), x2d.dtype),
        grid=(N // tm,),
        in_specs=[pl.BlockSpec((tm, din), lambda i: (i, 0)),
                  pl.BlockSpec((din, dff), lambda i: (0, 0)),
                  pl.BlockSpec((1, dff), lambda i: (0, 0)),
                  pl.BlockSpec((dff, dout), lambda i: (0, 0)),
                  pl.BlockSpec((1, dout), lambda i: (0, 0)),
                  pl.BlockSpec((1, dout), lambda i: (0, 0)),
                  pl.BlockSpec((1, dout), lambda i: (0, 0))],
        out_specs=pl.BlockSpec((tm, dout), lambda i: (i, 0)),
        compiler_params=_cparams(("parallel",)),
    )(x2d, w1, b1.reshape(1, -1), w2, b2.reshape(1, -1),
      gamma.reshape(1, -1), beta.reshape(1, -1))


# --------------------------- Model composition ------------------------------ #

def decoder_layer(p, x, enc, num_heads, d_model, in_scale=1.0):
    B, S, D = x.shape
    Se = enc.shape[1]
    x2d = x.reshape(B * S, D)

    # --- self attention block (fused QKV projection; scale folded in) ---
    m1 = p["mha1"]
    w_qkv = jnp.concatenate([m1["wq"], m1["wk"], m1["wv"]], axis=1)
    b_qkv = jnp.concatenate([m1["bq"], m1["bk"], m1["bv"]])
    q1, k1, v1 = pallas_qkv_proj(x2d, w_qkv, b_qkv, d_model, in_scale=in_scale)
    attn1 = pallas_attention(q1.reshape(B, S, d_model),
                             k1.reshape(B, S, d_model),
                             v1.reshape(B, S, d_model), num_heads)
    out1 = pallas_proj_add_ln(attn1.reshape(B * S, d_model), m1["wo"], m1["bo"],
                              x2d, p["ln1_g"], p["ln1_b"], res_scale=in_scale)

    # --- cross attention block (fused KV projection of encoder output) ---
    m2 = p["mha2"]
    q2 = pallas_linear(out1, m2["wq"], m2["bq"])
    w_kv = jnp.concatenate([m2["wk"], m2["wv"]], axis=1)
    b_kv = jnp.concatenate([m2["bk"], m2["bv"]])
    k2, v2 = pallas_kv_proj(enc.reshape(B * Se, d_model), w_kv, b_kv, d_model)
    attn2 = pallas_attention(q2.reshape(B, S, d_model),
                             k2.reshape(B, Se, d_model),
                             v2.reshape(B, Se, d_model), num_heads)
    out2 = pallas_proj_add_ln(attn2.reshape(B * S, d_model), m2["wo"], m2["bo"],
                              out1, p["ln2_g"], p["ln2_b"], res_scale=1.0)

    # --- fused FFN + residual + LayerNorm ---
    out3 = pallas_ffn_add_ln(out2, p["ffn_w1"], p["ffn_b1"],
                             p["ffn_w2"], p["ffn_b2"],
                             p["ln3_g"], p["ln3_b"])
    return out3.reshape(B, S, d_model)


def transformer_decoder(params, x, enc_output, d_model, num_heads, num_layers):
    # net = x * sqrt(d_model) is folded into layer 0's QKV projection + residual.
    # TODO(synk): dropout is identity (eval mode).
    scale = float(d_model) ** 0.5
    net = x
    for i in range(num_layers):
        in_scale = scale if i == 0 else 1.0
        net = decoder_layer(params["layers"][i], net, enc_output,
                            num_heads, d_model, in_scale=in_scale)
    return net


# ------------------------- Deterministic param init ------------------------- #

def init_linear(key, d_in, d_out):
    k1, k2 = jax.random.split(key)
    bound = 1.0 / float(d_in) ** 0.5
    w = jax.random.uniform(k1, (d_in, d_out), jnp.float32, -bound, bound)
    b = jax.random.uniform(k2, (d_out,), jnp.float32, -bound, bound)
    return w, b


def init_mha(key, d_q, d_k, d_v, d_model):
    ks = jax.random.split(key, 4)
    wq, bq = init_linear(ks[0], d_q, d_model)
    wk, bk = init_linear(ks[1], d_k, d_model)
    wv, bv = init_linear(ks[2], d_v, d_model)
    wo, bo = init_linear(ks[3], d_model, d_model)
    return dict(wq=wq, bq=bq, wk=wk, bk=bk, wv=wv, bv=bv, wo=wo, bo=bo)


def init_decoder_layer(key, d_x, d_model, d_ff):
    ks = jax.random.split(key, 4)
    p = {}
    p["mha1"] = init_mha(ks[0], d_x, d_x, d_x, d_model)
    p["mha2"] = init_mha(ks[1], d_model, d_model, d_model, d_model)
    p["ffn_w1"], p["ffn_b1"] = init_linear(ks[2], d_model, d_ff)
    p["ffn_w2"], p["ffn_b2"] = init_linear(ks[3], d_ff, d_model)
    for n in ("1", "2", "3"):
        p["ln" + n + "_g"] = jnp.ones((d_model,), jnp.float32)
        p["ln" + n + "_b"] = jnp.zeros((d_model,), jnp.float32)
    return p


def init_decoder(key, d_x, d_model, d_ff, num_layers):
    ks = jax.random.split(key, num_layers)
    return {"layers": [init_decoder_layer(ks[i], d_x, d_model, d_ff)
                       for i in range(num_layers)]}


# ------------------------------ Pure-JAX reference --------------------------- #

def ref_mha(p, q_in, k_in, v_in, num_heads, d_model):
    B, Sq, _ = q_in.shape
    Sk = k_in.shape[1]
    dp = d_model // num_heads
    q = q_in @ p["wq"] + p["bq"]
    k = k_in @ p["wk"] + p["bk"]
    v = v_in @ p["wv"] + p["bv"]
    q = q.reshape(B, Sq, num_heads, dp).transpose(0, 2, 1, 3)
    k = k.reshape(B, Sk, num_heads, dp).transpose(0, 2, 1, 3)
    v = v.reshape(B, Sk, num_heads, dp).transpose(0, 2, 1, 3)
    logits = jnp.einsum("bhqd,bhkd->bhqk", q, k) / float(dp) ** 0.5
    w = jax.nn.softmax(logits, axis=-1)
    attn = jnp.einsum("bhqk,bhkd->bhqd", w, v)
    attn = attn.transpose(0, 2, 1, 3).reshape(B, Sq, d_model)
    return attn @ p["wo"] + p["bo"]


def ref_layernorm(x, g, b, eps=1e-6):
    mu = jnp.mean(x, axis=-1, keepdims=True)
    var = jnp.mean(jnp.square(x - mu), axis=-1, keepdims=True)
    return (x - mu) / jnp.sqrt(var + eps) * g + b


def ref_decoder(params, x, enc, d_model, num_heads, num_layers):
    net = x * float(d_model) ** 0.5
    for i in range(num_layers):
        p = params["layers"][i]
        a1 = ref_mha(p["mha1"], net, net, net, num_heads, d_model)
        o1 = ref_layernorm(a1 + net, p["ln1_g"], p["ln1_b"])
        a2 = ref_mha(p["mha2"], o1, enc, enc, num_heads, d_model)
        o2 = ref_layernorm(a2 + o1, p["ln2_g"], p["ln2_b"])
        h = jnp.maximum(o2 @ p["ffn_w1"] + p["ffn_b1"], 0.0)
        f = h @ p["ffn_w2"] + p["ffn_b2"]
        net = ref_layernorm(f + o2, p["ln3_g"], p["ln3_b"])
    return net


# ----------------------------------- main ----------------------------------- #

if __name__ == "__main__":
    B, S, Se = 2, 8, 8
    d_x = d_model = 32
    num_heads = 4
    d_ff = 64
    num_layers = 2

    key = jax.random.PRNGKey(0)
    k_params, k_x, k_enc = jax.random.split(key, 3)
    params = init_decoder(k_params, d_x, d_model, d_ff, num_layers)
    x = jax.random.normal(k_x, (B, S, d_x), jnp.float32)
    enc_output = jax.random.normal(k_enc, (B, Se, d_model), jnp.float32)

    fwd = jax.jit(functools.partial(transformer_decoder, d_model=d_model,
                                    num_heads=num_heads, num_layers=num_layers))
    out = jax.block_until_ready(fwd(params, x, enc_output))

    ref = ref_decoder(params, x, enc_output, d_model, num_heads, num_layers)
    assert out.shape == (B, S, d_model)
    # Tolerance accounts for default (bf16-pass) MXU precision and the EUP
    # approximate reciprocal in the softmax (f32 accumulation kept throughout).
    assert jnp.allclose(out, ref, rtol=2e-2, atol=2e-2), (
        f"max abs diff {jnp.max(jnp.abs(out - ref))}")
    print("KERNEL_OK")
</pallas_src>

<mosaic_0001>
module attributes {stable_mosaic.version = 11 : i64} {
  func.func @_qkv_proj_kernel(%arg0: i32, %arg1: memref<16x32xf32, #tpu.memory_space<vmem>>, %arg2: memref<32x96xf32, #tpu.memory_space<vmem>>, %arg3: memref<1x96xf32, #tpu.memory_space<vmem>>, %arg4: memref<16x32xf32, #tpu.memory_space<vmem>>, %arg5: memref<16x32xf32, #tpu.memory_space<vmem>>, %arg6: memref<16x32xf32, #tpu.memory_space<vmem>>) attributes {dimension_semantics = [#tpu.dimension_semantics<parallel>], iteration_bounds = array<i64: 1>, scalar_prefetch = 0 : i64, scratch_operands = 0 : i64, tpu.core_type = #tpu.core_type<tc>, window_params = [{transform_indices = @transform_0, window_bounds = array<i64: 16, 32>}, {pipeline_mode = #tpu.pipeline_mode<synchronous>, transform_indices = @transform_1, window_bounds = array<i64: 32, 96>}, {pipeline_mode = #tpu.pipeline_mode<synchronous>, transform_indices = @transform_2, window_bounds = array<i64: 1, 96>}, {transform_indices = @transform_3, window_bounds = array<i64: 16, 32>}, {transform_indices = @transform_4, window_bounds = array<i64: 16, 32>}, {transform_indices = @transform_5, window_bounds = array<i64: 16, 32>}]} {
    %c0 = arith.constant 0 : index
    %c0_0 = arith.constant 0 : index
    %0 = vector.load %arg1[%c0, %c0_0] : memref<16x32xf32, #tpu.memory_space<vmem>>, vector<16x32xf32>
    %cst = arith.constant 5.65685415 : f32
    %1 = vector.broadcast %cst : f32 to vector<16x32xf32>
    %2 = arith.mulf %0, %1 : vector<16x32xf32>
    %c0_1 = arith.constant 0 : index
    %c0_2 = arith.constant 0 : index
    %3 = vector.load %arg2[%c0_1, %c0_2] : memref<32x96xf32, #tpu.memory_space<vmem>>, vector<32x96xf32>
    %cst_3 = arith.constant dense<0.000000e+00> : vector<16x96xf32>
    %4 = tpu.matmul %2, %3, %cst_3 {dimension_numbers = #tpu.dot_dimension_numbers<[1], [0], [0], [1], [0, 0, 1, 1], [], []>} : vector<16x32xf32>, vector<32x96xf32>, vector<16x96xf32> -> vector<16x96xf32>
    %c0_4 = arith.constant 0 : index
    %c0_5 = arith.constant 0 : index
    %5 = vector.load %arg3[%c0_4, %c0_5] : memref<1x96xf32, #tpu.memory_space<vmem>>, vector<1x96xf32>
    %6 = vector.broadcast %5 : vector<1x96xf32> to vector<16x96xf32>
    %7 = arith.addf %4, %6 : vector<16x96xf32>
    %8 = vector.extract_strided_slice %7 {offsets = [0, 0], sizes = [16, 32], strides = [1, 1]} : vector<16x96xf32> to vector<16x32xf32>
    %c0_6 = arith.constant 0 : index
    %c0_7 = arith.constant 0 : index
    %9 = vector.load %arg4[%c0_6, %c0_7] : memref<16x32xf32, #tpu.memory_space<vmem>>, vector<16x32xf32>
    tpu.vector_store %arg4[%c0_6, %c0_7], %8 {strides = array<i32>} : memref<16x32xf32, #tpu.memory_space<vmem>>, vector<16x32xf32>,
    %10 = vector.extract_strided_slice %7 {offsets = [0, 32], sizes = [16, 32], strides = [1, 1]} : vector<16x96xf32> to vector<16x32xf32>
    %c0_8 = arith.constant 0 : index
    %c0_9 = arith.constant 0 : index
    %11 = vector.load %arg5[%c0_8, %c0_9] : memref<16x32xf32, #tpu.memory_space<vmem>>, vector<16x32xf32>
    tpu.vector_store %arg5[%c0_8, %c0_9], %10 {strides = array<i32>} : memref<16x32xf32, #tpu.memory_space<vmem>>, vector<16x32xf32>,
    %12 = vector.extract_strided_slice %7 {offsets = [0, 64], sizes = [16, 32], strides = [1, 1]} : vector<16x96xf32> to vector<16x32xf32>
    %c0_10 = arith.constant 0 : index
    %c0_11 = arith.constant 0 : index
    %13 = vector.load %arg6[%c0_10, %c0_11] : memref<16x32xf32, #tpu.memory_space<vmem>>, vector<16x32xf32>
    tpu.vector_store %arg6[%c0_10, %c0_11], %12 {strides = array<i32>} : memref<16x32xf32, #tpu.memory_space<vmem>>, vector<16x32xf32>,
    return
  }
  func.func @transform_0(%arg0: i32) -> (i32, i32) {
    %c0_i32 = arith.constant 0 : i32
    %c0_i32_0 = arith.constant 0 : i32
    return %arg0, %c0_i32 : i32, i32
  }
  func.func @transform_1(%arg0: i32) -> (i32, i32) {
    %c0_i32 = arith.constant 0 : i32
    %c0_i32_0 = arith.constant 0 : i32
    %c0_i32_1 = arith.constant 0 : i32
    return %c0_i32, %c0_i32_0 : i32, i32
  }
  func.func @transform_2(%arg0: i32) -> (i32, i32) {
    %c0_i32 = arith.constant 0 : i32
    %c0_i32_0 = arith.constant 0 : i32
    %c0_i32_1 = arith.constant 0 : i32
    return %c0_i32, %c0_i32_0 : i32, i32
  }
  func.func @transform_3(%arg0: i32) -> (i32, i32) {
    %c0_i32 = arith.constant 0 : i32
    %c0_i32_0 = arith.constant 0 : i32
    return %arg0, %c0_i32 : i32, i32
  }
  func.func @transform_4(%arg0: i32) -> (i32, i32) {
    %c0_i32 = arith.constant 0 : i32
    %c0_i32_0 = arith.constant 0 : i32
    return %arg0, %c0_i32 : i32, i32
  }
  func.func @transform_5(%arg0: i32) -> (i32, i32) {
    %c0_i32 = arith.constant 0 : i32
    %c0_i32_0 = arith.constant 0 : i32
    return %arg0, %c0_i32 : i32, i32
  }
}

module attributes {stable_mosaic.version = 11 : i64} {
  func.func @_attn_kernel(%arg0: i32, %arg1: memref<1x8x32xf32, #tpu.memory_space<vmem>>, %arg2: memref<1x8x32xf32, #tpu.memory_space<vmem>>, %arg3: memref<1x8x32xf32, #tpu.memory_space<vmem>>, %arg4: memref<1x8x32xf32, #tpu.memory_space<vmem>>) attributes {dimension_semantics = [#tpu.dimension_semantics<parallel>], iteration_bounds = array<i64: 2>, scalar_prefetch = 0 : i64, scratch_operands = 0 : i64, tpu.core_type = #tpu.core_type<tc>, window_params = [{transform_indices = @transform_0, window_bounds = array<i64: 1, 8, 32>}, {transform_indices = @transform_1, window_bounds = array<i64: 1, 8, 32>}, {transform_indices = @transform_2, window_bounds = array<i64: 1, 8, 32>}, {transform_indices = @transform_3, window_bounds = array<i64: 1, 8, 32>}]} {
    %c0 = arith.constant 0 : index
    %c0_0 = arith.constant 0 : index
    %c0_1 = arith.constant 0 : index
    %0 = vector.load %arg1[%c0, %c0_0, %c0_1] : memref<1x8x32xf32, #tpu.memory_space<vmem>>, vector<1x8x32xf32>
    %1 = vector.shape_cast %0 : vector<1x8x32xf32> to vector<8x32xf32>
    %c0_2 = arith.constant 0 : index
    %c0_3 = arith.constant 0 : index
    %c0_4 = arith.constant 0 : index
    %2 = vector.load %arg2[%c0_2, %c0_3, %c0_4] : memref<1x8x32xf32, #tpu.memory_space<vmem>>, vector<1x8x32xf32>
    %3 = vector.shape_cast %2 : vector<1x8x32xf32> to vector<8x32xf32>
    %c0_5 = arith.constant 0 : index
    %c0_6 = arith.constant 0 : index
    %c0_7 = arith.constant 0 : index
    %4 = vector.load %arg3[%c0_5, %c0_6, %c0_7] : memref<1x8x32xf32, #tpu.memory_space<vmem>>, vector<1x8x32xf32>
    %5 = vector.shape_cast %4 : vector<1x8x32xf32> to vector<8x32xf32>
    %6 = vector.extract_strided_slice %1 {offsets = [0, 0], sizes = [8, 8], strides = [1, 1]} : vector<8x32xf32> to vector<8x8xf32>
    %7 = vector.extract_strided_slice %3 {offsets = [0, 0], sizes = [8, 8], strides = [1, 1]} : vector<8x32xf32> to vector<8x8xf32>
    %8 = vector.extract_strided_slice %5 {offsets = [0, 0], sizes = [8, 8], strides = [1, 1]} : vector<8x32xf32> to vector<8x8xf32>
    %9 = tpu.transpose %7, [1, 0] : vector<8x8xf32> -> vector<8x8xf32>
    %cst = arith.constant dense<0.000000e+00> : vector<8x8xf32>
    %10 = tpu.matmul %6, %9, %cst {dimension_numbers = #tpu.dot_dimension_numbers<[1], [0], [0], [1], [0, 0, 1, 1], [], []>} : vector<8x8xf32>, vector<8x8xf32>, vector<8x8xf32> -> vector<8x8xf32>
    %cst_8 = arith.constant 0.353553385 : f32
    %11 = vector.broadcast %cst_8 : f32 to vector<8x8xf32>
    %12 = arith.mulf %10, %11 : vector<8x8xf32>
    %cst_9 = arith.constant dense<0xFF800000> : vector<8xf32>
    %13 = vector.multi_reduction <maximumf>, %12, %cst_9 [1] : vector<8x8xf32> to vector<8xf32>
    %14 = vector.shape_cast %13 : vector<8xf32> to vector<8x1xf32>
    %15 = vector.broadcast %14 : vector<8x1xf32> to vector<8x8xf32>
    %16 = arith.subf %12, %15 : vector<8x8xf32>
    %17 = math.exp %16 : vector<8x8xf32>
    %cst_10 = arith.constant dense<0.000000e+00> : vector<8xf32>
    %18 = vector.multi_reduction <add>, %17, %cst_10 [1] : vector<8x8xf32> to vector<8xf32>
    %19 = vector.shape_cast %18 : vector<8xf32> to vector<8x1xf32>
    %20 = tpu.reciprocal %19 {approx = true} : vector<8x1xf32> -> vector<8x1xf32>
    %21 = vector.broadcast %20 : vector<8x1xf32> to vector<8x8xf32>
    %22 = arith.mulf %17, %21 : vector<8x8xf32>
    %cst_11 = arith.constant dense<0.000000e+00> : vector<8x8xf32>
    %23 = tpu.matmul %22, %8, %cst_11 {dimension_numbers = #tpu.dot_dimension_numbers<[1], [0], [0], [1], [0, 0, 1, 1], [], []>} : vector<8x8xf32>, vector<8x8xf32>, vector<8x8xf32> -> vector<8x8xf32>
    %24 = vector.extract_strided_slice %1 {offsets = [0, 8], sizes = [8, 8], strides = [1, 1]} : vector<8x32xf32> to vector<8x8xf32>
    %25 = vector.extract_strided_slice %3 {offsets = [0, 8], sizes = [8, 8], strides = [1, 1]} : vector<8x32xf32> to vector<8x8xf32>
    %26 = vector.extract_strided_slice %5 {offsets = [0, 8], sizes = [8, 8], strides = [1, 1]} : vector<8x32xf32> to vector<8x8xf32>
    %27 = tpu.transpose %25, [1, 0] : vector<8x8xf32> -> vector<8x8xf32>
    %cst_12 = arith.constant dense<0.000000e+00> : vector<8x8xf32>
    %28 = tpu.matmul %24, %27, %cst_12 {dimension_numbers = #tpu.dot_dimension_numbers<[1], [0], [0], [1], [0, 0, 1, 1], [], []>} : vector<8x8xf32>, vector<8x8xf32>, vector<8x8xf32> -> vector<8x8xf32>
    %cst_13 = arith.constant 0.353553385 : f32
    %29 = vector.broadcast %cst_13 : f32 to vector<8x8xf32>
    %30 = arith.mulf %28, %29 : vector<8x8xf32>
    %cst_14 = arith.constant dense<0xFF800000> : vector<8xf32>
    %31 = vector.multi_reduction <maximumf>, %30, %cst_14 [1] : vector<8x8xf32> to vector<8xf32>
    %32 = vector.shape_cast %31 : vector<8xf32> to vector<8x1xf32>
    %33 = vector.broadcast %32 : vector<8x1xf32> to vector<8x8xf32>
    %34 = arith.subf %30, %33 : vector<8x8xf32>
    %35 = math.exp %34 : vector<8x8xf32>
    %cst_15 = arith.constant dense<0.000000e+00> : vector<8xf32>
    %36 = vector.multi_reduction <add>, %35, %cst_15 [1] : vector<8x8xf32> to vector<8xf32>
    %37 = vector.shape_cast %36 : vector<8xf32> to vector<8x1xf32>
    %38 = tpu.reciprocal %37 {approx = true} : vector<8x1xf32> -> vector<8x1xf32>
    %39 = vector.broadcast %38 : vector<8x1xf32> to vector<8x8xf32>
    %40 = arith.mulf %35, %39 : vector<8x8xf32>
    %cst_16 = arith.constant dense<0.000000e+00> : vector<8x8xf32>
    %41 = tpu.matmul %40, %26, %cst_16 {dimension_numbers = #tpu.dot_dimension_numbers<[1], [0], [0], [1], [0, 0, 1, 1], [], []>} : vector<8x8xf32>, vector<8x8xf32>, vector<8x8xf32> -> vector<8x8xf32>
    %42 = vector.extract_strided_slice %1 {offsets = [0, 16], sizes = [8, 8], strides = [1, 1]} : vector<8x32xf32> to vector<8x8xf32>
    %43 = vector.extract_strided_slice %3 {offsets = [0, 16], sizes = [8, 8], strides = [1, 1]} : vector<8x32xf32> to vector<8x8xf32>
    %44 = vector.extract_strided_slice %5 {offsets = [0, 16], sizes = [8, 8], strides = [1, 1]} : vector<8x32xf32> to vector<8x8xf32>
    %45 = tpu.transpose %43, [1, 0] : vector<8x8xf32> -> vector<8x8xf32>
    %cst_17 = arith.constant dense<0.000000e+00> : vector<8x8xf32>
    %46 = tpu.matmul %42, %45, %cst_17 {dimension_numbers = #tpu.dot_dimension_numbers<[1], [0], [0], [1], [0, 0, 1, 1], [], []>} : vector<8x8xf32>, vector<8x8xf32>, vector<8x8xf32> -> vector<8x8xf32>
    %cst_18 = arith.constant 0.353553385 : f32
    %47 = vector.broadcast %cst_18 : f32 to vector<8x8xf32>
    %48 = arith.mulf %46, %47 : vector<8x8xf32>
    %cst_19 = arith.constant dense<0xFF800000> : vector<8xf32>
    %49 = vector.multi_reduction <maximumf>, %48, %cst_19 [1] : vector<8x8xf32> to vector<8xf32>
    %50 = vector.shape_cast %49 : vector<8xf32> to vector<8x1xf32>
    %51 = vector.broadcast %50 : vector<8x1xf32> to vector<8x8xf32>
    %52 = arith.subf %48, %51 : vector<8x8xf32>
    %53 = math.exp %52 : vector<8x8xf32>
    %cst_20 = arith.constant dense<0.000000e+00> : vector<8xf32>
    %54 = vector.multi_reduction <add>, %53, %cst_20 [1] : vector<8x8xf32> to vector<8xf32>
    %55 = vector.shape_cast %54 : vector<8xf32> to vector<8x1xf32>
    %56 = tpu.reciprocal %55 {approx = true} : vector<8x1xf32> -> vector<8x1xf32>
    %57 = vector.broadcast %56 : vector<8x1xf32> to vector<8x8xf32>
    %58 = arith.mulf %53, %57 : vector<8x8xf32>
    %cst_21 = arith.constant dense<0.000000e+00> : vector<8x8xf32>
    %59 = tpu.matmul %58, %44, %cst_21 {dimension_numbers = #tpu.dot_dimension_numbers<[1], [0], [0], [1], [0, 0, 1, 1], [], []>} : vector<8x8xf32>, vector<8x8xf32>, vector<8x8xf32> -> vector<8x8xf32>
    %60 = vector.extract_strided_slice %1 {offsets = [0, 24], sizes = [8, 8], strides = [1, 1]} : vector<8x32xf32> to vector<8x8xf32>
    %61 = vector.extract_strided_slice %3 {offsets = [0, 24], sizes = [8, 8], strides = [1, 1]} : vector<8x32xf32> to vector<8x8xf32>
    %62 = vector.extract_strided_slice %5 {offsets = [0, 24], sizes = [8, 8], strides = [1, 1]} : vector<8x32xf32> to vector<8x8xf32>
    %63 = tpu.transpose %61, [1, 0] : vector<8x8xf32> -> vector<8x8xf32>
    %cst_22 = arith.constant dense<0.000000e+00> : vector<8x8xf32>
    %64 = tpu.matmul %60, %63, %cst_22 {dimension_numbers = #tpu.dot_dimension_numbers<[1], [0], [0], [1], [0, 0, 1, 1], [], []>} : vector<8x8xf32>, vector<8x8xf32>, vector<8x8xf32> -> vector<8x8xf32>
    %cst_23 = arith.constant 0.353553385 : f32
    %65 = vector.broadcast %cst_23 : f32 to vector<8x8xf32>
    %66 = arith.mulf %64, %65 : vector<8x8xf32>
    %cst_24 = arith.constant dense<0xFF800000> : vector<8xf32>
    %67 = vector.multi_reduction <maximumf>, %66, %cst_24 [1] : vector<8x8xf32> to vector<8xf32>
    %68 = vector.shape_cast %67 : vector<8xf32> to vector<8x1xf32>
    %69 = vector.broadcast %68 : vector<8x1xf32> to vector<8x8xf32>
    %70 = arith.subf %66, %69 : vector<8x8xf32>
    %71 = math.exp %70 : vector<8x8xf32>
    %cst_25 = arith.constant dense<0.000000e+00> : vector<8xf32>
    %72 = vector.multi_reduction <add>, %71, %cst_25 [1] : vector<8x8xf32> to vector<8xf32>
    %73 = vector.shape_cast %72 : vector<8xf32> to vector<8x1xf32>
    %74 = tpu.reciprocal %73 {approx = true} : vector<8x1xf32> -> vector<8x1xf32>
    %75 = vector.broadcast %74 : vector<8x1xf32> to vector<8x8xf32>
    %76 = arith.mulf %71, %75 : vector<8x8xf32>
    %cst_26 = arith.constant dense<0.000000e+00> : vector<8x8xf32>
    %77 = tpu.matmul %76, %62, %cst_26 {dimension_numbers = #tpu.dot_dimension_numbers<[1], [0], [0], [1], [0, 0, 1, 1], [], []>} : vector<8x8xf32>, vector<8x8xf32>, vector<8x8xf32> -> vector<8x8xf32>
    %78 = tpu.concatenate %23, %41, %59, %77 in 1 : vector<8x8xf32>, vector<8x8xf32>, vector<8x8xf32>, vector<8x8xf32> -> vector<8x32xf32>
    %c0_27 = arith.constant 0 : index
    %c0_28 = arith.constant 0 : index
    %c0_29 = arith.constant 0 : index
    %79 = vector.load %arg4[%c0_27, %c0_28, %c0_29] : memref<1x8x32xf32, #tpu.memory_space<vmem>>, vector<1x8x32xf32>
    %80 = vector.shape_cast %79 : vector<1x8x32xf32> to vector<8x32xf32>
    %81 = vector.shape_cast %78 : vector<8x32xf32> to vector<1x8x32xf32>
    tpu.vector_store %arg4[%c0_27, %c0_28, %c0_29], %81 {strides = array<i32>} : memref<1x8x32xf32, #tpu.memory_space<vmem>>, vector<1x8x32xf32>,
    return
  }
  func.func @transform_0(%arg0: i32) -> (i32, i32, i32) {
    %c0_i32 = arith.constant 0 : i32
    %c0_i32_0 = arith.constant 0 : i32
    %c0_i32_1 = arith.constant 0 : i32
    return %arg0, %c0_i32, %c0_i32_0 : i32, i32, i32
  }
  func.func @transform_1(%arg0: i32) -> (i32, i32, i32) {
    %c0_i32 = arith.constant 0 : i32
    %c0_i32_0 = arith.constant 0 : i32
    %c0_i32_1 = arith.constant 0 : i32
    return %arg0, %c0_i32, %c0_i32_0 : i32, i32, i32
  }
  func.func @transform_2(%arg0: i32) -> (i32, i32, i32) {
    %c0_i32 = arith.constant 0 : i32
    %c0_i32_0 = arith.constant 0 : i32
    %c0_i32_1 = arith.constant 0 : i32
    return %arg0, %c0_i32, %c0_i32_0 : i32, i32, i32
  }
  func.func @transform_3(%arg0: i32) -> (i32, i32, i32) {
    %c0_i32 = arith.constant 0 : i32
    %c0_i32_0 = arith.constant 0 : i32
    %c0_i32_1 = arith.constant 0 : i32
    return %arg0, %c0_i32, %c0_i32_0 : i32, i32, i32
  }
}

module attributes {stable_mosaic.version = 11 : i64} {
  func.func @_linear_kernel(%arg0: i32, %arg1: memref<16x32xf32, #tpu.memory_space<vmem>>, %arg2: memref<32x32xf32, #tpu.memory_space<vmem>>, %arg3: memref<1x32xf32, #tpu.memory_space<vmem>>, %arg4: memref<16x32xf32, #tpu.memory_space<vmem>>) attributes {dimension_semantics = [#tpu.dimension_semantics<parallel>], iteration_bounds = array<i64: 1>, scalar_prefetch = 0 : i64, scratch_operands = 0 : i64, tpu.core_type = #tpu.core_type<tc>, window_params = [{transform_indices = @transform_0, window_bounds = array<i64: 16, 32>}, {pipeline_mode = #tpu.pipeline_mode<synchronous>, transform_indices = @transform_1, window_bounds = array<i64: 32, 32>}, {pipeline_mode = #tpu.pipeline_mode<synchronous>, transform_indices = @transform_2, window_bounds = array<i64: 1, 32>}, {transform_indices = @transform_3, window_bounds = array<i64: 16, 32>}]} {
    %c0 = arith.constant 0 : index
    %c0_0 = arith.constant 0 : index
    %0 = vector.load %arg1[%c0, %c0_0] : memref<16x32xf32, #tpu.memory_space<vmem>>, vector<16x32xf32>
    %c0_1 = arith.constant 0 : index
    %c0_2 = arith.constant 0 : index
    %1 = vector.load %arg2[%c0_1, %c0_2] : memref<32x32xf32, #tpu.memory_space<vmem>>, vector<32x32xf32>
    %cst = arith.constant dense<0.000000e+00> : vector<16x32xf32>
    %2 = tpu.matmul %0, %1, %cst {dimension_numbers = #tpu.dot_dimension_numbers<[1], [0], [0], [1], [0, 0, 1, 1], [], []>} : vector<16x32xf32>, vector<32x32xf32>, vector<16x32xf32> -> vector<16x32xf32>
    %c0_3 = arith.constant 0 : index
    %c0_4 = arith.constant 0 : index
    %3 = vector.load %arg3[%c0_3, %c0_4] : memref<1x32xf32, #tpu.memory_space<vmem>>, vector<1x32xf32>
    %4 = vector.broadcast %3 : vector<1x32xf32> to vector<16x32xf32>
    %5 = arith.addf %2, %4 : vector<16x32xf32>
    %c0_5 = arith.constant 0 : index
    %c0_6 = arith.constant 0 : index
    %6 = vector.load %arg4[%c0_5, %c0_6] : memref<16x32xf32, #tpu.memory_space<vmem>>, vector<16x32xf32>
    tpu.vector_store %arg4[%c0_5, %c0_6], %5 {strides = array<i32>} : memref<16x32xf32, #tpu.memory_space<vmem>>, vector<16x32xf32>,
    return
  }
  func.func @transform_0(%arg0: i32) -> (i32, i32) {
    %c0_i32 = arith.constant 0 : i32
    %c0_i32_0 = arith.constant 0 : i32
    return %arg0, %c0_i32 : i32, i32
  }
  func.func @transform_1(%arg0: i32) -> (i32, i32) {
    %c0_i32 = arith.constant 0 : i32
    %c0_i32_0 = arith.constant 0 : i32
    %c0_i32_1 = arith.constant 0 : i32
    return %c0_i32, %c0_i32_0 : i32, i32
  }
  func.func @transform_2(%arg0: i32) -> (i32, i32) {
    %c0_i32 = arith.constant 0 : i32
    %c0_i32_0 = arith.constant 0 : i32
    %c0_i32_1 = arith.constant 0 : i32
    return %c0_i32, %c0_i32_0 : i32, i32
  }
  func.func @transform_3(%arg0: i32) -> (i32, i32) {
    %c0_i32 = arith.constant 0 : i32
    %c0_i32_0 = arith.constant 0 : i32
    return %arg0, %c0_i32 : i32, i32
  }
}

module attributes {stable_mosaic.version = 11 : i64} {
  func.func @_proj_add_ln_kernel(%arg0: i32, %arg1: memref<16x32xf32, #tpu.memory_space<vmem>>, %arg2: memref<32x32xf32, #tpu.memory_space<vmem>>, %arg3: memref<1x32xf32, #tpu.memory_space<vmem>>, %arg4: memref<16x32xf32, #tpu.memory_space<vmem>>, %arg5: memref<1x32xf32, #tpu.memory_space<vmem>>, %arg6: memref<1x32xf32, #tpu.memory_space<vmem>>, %arg7: memref<16x32xf32, #tpu.memory_space<vmem>>) attributes {dimension_semantics = [#tpu.dimension_semantics<parallel>], iteration_bounds = array<i64: 1>, scalar_prefetch = 0 : i64, scratch_operands = 0 : i64, tpu.core_type = #tpu.core_type<tc>, window_params = [{transform_indices = @transform_0, window_bounds = array<i64: 16, 32>}, {pipeline_mode = #tpu.pipeline_mode<synchronous>, transform_indices = @transform_1, window_bounds = array<i64: 32, 32>}, {pipeline_mode = #tpu.pipeline_mode<synchronous>, transform_indices = @transform_2, window_bounds = array<i64: 1, 32>}, {transform_indices = @transform_3, window_bounds = array<i64: 16, 32>}, {pipeline_mode = #tpu.pipeline_mode<synchronous>, transform_indices = @transform_4, window_bounds = array<i64: 1, 32>}, {pipeline_mode = #tpu.pipeline_mode<synchronous>, transform_indices = @transform_5, window_bounds = array<i64: 1, 32>}, {transform_indices = @transform_6, window_bounds = array<i64: 16, 32>}]} {
    %c0 = arith.constant 0 : index
    %c0_0 = arith.constant 0 : index
    %0 = vector.load %arg1[%c0, %c0_0] : memref<16x32xf32, #tpu.memory_space<vmem>>, vector<16x32xf32>
    %c0_1 = arith.constant 0 : index
    %c0_2 = arith.constant 0 : index
    %1 = vector.load %arg2[%c0_1, %c0_2] : memref<32x32xf32, #tpu.memory_space<vmem>>, vector<32x32xf32>
    %cst = arith.constant dense<0.000000e+00> : vector<16x32xf32>
    %2 = tpu.matmul %0, %1, %cst {dimension_numbers = #tpu.dot_dimension_numbers<[1], [0], [0], [1], [0, 0, 1, 1], [], []>} : vector<16x32xf32>, vector<32x32xf32>, vector<16x32xf32> -> vector<16x32xf32>
    %c0_3 = arith.constant 0 : index
    %c0_4 = arith.constant 0 : index
    %3 = vector.load %arg3[%c0_3, %c0_4] : memref<1x32xf32, #tpu.memory_space<vmem>>, vector<1x32xf32>
    %4 = vector.broadcast %3 : vector<1x32xf32> to vector<16x32xf32>
    %5 = arith.addf %2, %4 : vector<16x32xf32>
    %c0_5 = arith.constant 0 : index
    %c0_6 = arith.constant 0 : index
    %6 = vector.load %arg4[%c0_5, %c0_6] : memref<16x32xf32, #tpu.memory_space<vmem>>, vector<16x32xf32>
    %cst_7 = arith.constant 5.65685415 : f32
    %7 = vector.broadcast %cst_7 : f32 to vector<16x32xf32>
    %8 = arith.mulf %6, %7 : vector<16x32xf32>
    %9 = arith.addf %5, %8 : vector<16x32xf32>
    %cst_8 = arith.constant dense<0.000000e+00> : vector<16xf32>
    %10 = vector.multi_reduction <add>, %9, %cst_8 [1] : vector<16x32xf32> to vector<16xf32>
    %11 = vector.shape_cast %10 : vector<16xf32> to vector<16x1xf32>
    %cst_9 = arith.constant 3.200000e+01 : f32
    %12 = vector.broadcast %cst_9 : f32 to vector<16x1xf32>
    %13 = arith.divf %11, %12 : vector<16x1xf32>
    %14 = vector.broadcast %13 : vector<16x1xf32> to vector<16x32xf32>
    %15 = arith.subf %9, %14 : vector<16x32xf32>
    %16 = arith.mulf %15, %15 : vector<16x32xf32>
    %cst_10 = arith.constant dense<0.000000e+00> : vector<16xf32>
    %17 = vector.multi_reduction <add>, %16, %cst_10 [1] : vector<16x32xf32> to vector<16xf32>
    %18 = vector.shape_cast %17 : vector<16xf32> to vector<16x1xf32>
    %cst_11 = arith.constant 3.200000e+01 : f32
    %19 = vector.broadcast %cst_11 : f32 to vector<16x1xf32>
    %20 = arith.divf %18, %19 : vector<16x1xf32>
    %21 = vector.broadcast %13 : vector<16x1xf32> to vector<16x32xf32>
    %22 = arith.subf %9, %21 : vector<16x32xf32>
    %cst_12 = arith.constant 9.99999997E-7 : f32
    %23 = vector.broadcast %cst_12 : f32 to vector<16x1xf32>
    %24 = arith.addf %20, %23 : vector<16x1xf32>
    %25 = math.rsqrt %24 : vector<16x1xf32>
    %26 = vector.broadcast %25 : vector<16x1xf32> to vector<16x32xf32>
    %27 = arith.mulf %22, %26 : vector<16x32xf32>
    %c0_13 = arith.constant 0 : index
    %c0_14 = arith.constant 0 : index
    %28 = vector.load %arg5[%c0_13, %c0_14] : memref<1x32xf32, #tpu.memory_space<vmem>>, vector<1x32xf32>
    %29 = vector.broadcast %28 : vector<1x32xf32> to vector<16x32xf32>
    %30 = arith.mulf %27, %29 : vector<16x32xf32>
    %c0_15 = arith.constant 0 : index
    %c0_16 = arith.constant 0 : index
    %31 = vector.load %arg6[%c0_15, %c0_16] : memref<1x32xf32, #tpu.memory_space<vmem>>, vector<1x32xf32>
    %32 = vector.broadcast %31 : vector<1x32xf32> to vector<16x32xf32>
    %33 = arith.addf %30, %32 : vector<16x32xf32>
    %c0_17 = arith.constant 0 : index
    %c0_18 = arith.constant 0 : index
    %34 = vector.load %arg7[%c0_17, %c0_18] : memref<16x32xf32, #tpu.memory_space<vmem>>, vector<16x32xf32>
    tpu.vector_store %arg7[%c0_17, %c0_18], %33 {strides = array<i32>} : memref<16x32xf32, #tpu.memory_space<vmem>>, vector<16x32xf32>,
    return
  }
  func.func @transform_0(%arg0: i32) -> (i32, i32) {
    %c0_i32 = arith.constant 0 : i32
    %c0_i32_0 = arith.constant 0 : i32
    return %arg0, %c0_i32 : i32, i32
  }
  func.func @transform_1(%arg0: i32) -> (i32, i32) {
    %c0_i32 = arith.constant 0 : i32
    %c0_i32_0 = arith.constant 0 : i32
    %c0_i32_1 = arith.constant 0 : i32
    return %c0_i32, %c0_i32_0 : i32, i32
  }
  func.func @transform_2(%arg0: i32) -> (i32, i32) {
    %c0_i32 = arith.constant 0 : i32
    %c0_i32_0 = arith.constant 0 : i32
    %c0_i32_1 = arith.constant 0 : i32
    return %c0_i32, %c0_i32_0 : i32, i32
  }
  func.func @transform_3(%arg0: i32) -> (i32, i32) {
    %c0_i32 = arith.constant 0 : i32
    %c0_i32_0 = arith.constant 0 : i32
    return %arg0, %c0_i32 : i32, i32
  }
  func.func @transform_4(%arg0: i32) -> (i32, i32) {
    %c0_i32 = arith.constant 0 : i32
    %c0_i32_0 = arith.constant 0 : i32
    %c0_i32_1 = arith.constant 0 : i32
    return %c0_i32, %c0_i32_0 : i32, i32
  }
  func.func @transform_5(%arg0: i32) -> (i32, i32) {
    %c0_i32 = arith.constant 0 : i32
    %c0_i32_0 = arith.constant 0 : i32
    %c0_i32_1 = arith.constant 0 : i32
    return %c0_i32, %c0_i32_0 : i32, i32
  }
  func.func @transform_6(%arg0: i32) -> (i32, i32) {
    %c0_i32 = arith.constant 0 : i32
    %c0_i32_0 = arith.constant 0 : i32
    return %arg0, %c0_i32 : i32, i32
  }
}

module attributes {stable_mosaic.version = 11 : i64} {
  func.func @_kv_proj_kernel(%arg0: i32, %arg1: memref<16x32xf32, #tpu.memory_space<vmem>>, %arg2: memref<32x64xf32, #tpu.memory_space<vmem>>, %arg3: memref<1x64xf32, #tpu.memory_space<vmem>>, %arg4: memref<16x32xf32, #tpu.memory_space<vmem>>, %arg5: memref<16x32xf32, #tpu.memory_space<vmem>>) attributes {dimension_semantics = [#tpu.dimension_semantics<parallel>], iteration_bounds = array<i64: 1>, scalar_prefetch = 0 : i64, scratch_operands = 0 : i64, tpu.core_type = #tpu.core_type<tc>, window_params = [{transform_indices = @transform_0, window_bounds = array<i64: 16, 32>}, {pipeline_mode = #tpu.pipeline_mode<synchronous>, transform_indices = @transform_1, window_bounds = array<i64: 32, 64>}, {pipeline_mode = #tpu.pipeline_mode<synchronous>, transform_indices = @transform_2, window_bounds = array<i64: 1, 64>}, {transform_indices = @transform_3, window_bounds = array<i64: 16, 32>}, {transform_indices = @transform_4, window_bounds = array<i64: 16, 32>}]} {
    %c0 = arith.constant 0 : index
    %c0_0 = arith.constant 0 : index
    %0 = vector.load %arg1[%c0, %c0_0] : memref<16x32xf32, #tpu.memory_space<vmem>>, vector<16x32xf32>
    %c0_1 = arith.constant 0 : index
    %c0_2 = arith.constant 0 : index
    %1 = vector.load %arg2[%c0_1, %c0_2] : memref<32x64xf32, #tpu.memory_space<vmem>>, vector<32x64xf32>
    %cst = arith.constant dense<0.000000e+00> : vector<16x64xf32>
    %2 = tpu.matmul %0, %1, %cst {dimension_numbers = #tpu.dot_dimension_numbers<[1], [0], [0], [1], [0, 0, 1, 1], [], []>} : vector<16x32xf32>, vector<32x64xf32>, vector<16x64xf32> -> vector<16x64xf32>
    %c0_3 = arith.constant 0 : index
    %c0_4 = arith.constant 0 : index
    %3 = vector.load %arg3[%c0_3, %c0_4] : memref<1x64xf32, #tpu.memory_space<vmem>>, vector<1x64xf32>
    %4 = vector.broadcast %3 : vector<1x64xf32> to vector<16x64xf32>
    %5 = arith.addf %2, %4 : vector<16x64xf32>
    %6 = vector.extract_strided_slice %5 {offsets = [0, 0], sizes = [16, 32], strides = [1, 1]} : vector<16x64xf32> to vector<16x32xf32>
    %c0_5 = arith.constant 0 : index
    %c0_6 = arith.constant 0 : index
    %7 = vector.load %arg4[%c0_5, %c0_6] : memref<16x32xf32, #tpu.memory_space<vmem>>, vector<16x32xf32>
    tpu.vector_store %arg4[%c0_5, %c0_6], %6 {strides = array<i32>} : memref<16x32xf32, #tpu.memory_space<vmem>>, vector<16x32xf32>,
    %8 = vector.extract_strided_slice %5 {offsets = [0, 32], sizes = [16, 32], strides = [1, 1]} : vector<16x64xf32> to vector<16x32xf32>
    %c0_7 = arith.constant 0 : index
    %c0_8 = arith.constant 0 : index
    %9 = vector.load %arg5[%c0_7, %c0_8] : memref<16x32xf32, #tpu.memory_space<vmem>>, vector<16x32xf32>
    tpu.vector_store %arg5[%c0_7, %c0_8], %8 {strides = array<i32>} : memref<16x32xf32, #tpu.memory_space<vmem>>, vector<16x32xf32>,
    return
  }
  func.func @transform_0(%arg0: i32) -> (i32, i32) {
    %c0_i32 = arith.constant 0 : i32
    %c0_i32_0 = arith.constant 0 : i32
    return %arg0, %c0_i32 : i32, i32
  }
  func.func @transform_1(%arg0: i32) -> (i32, i32) {
    %c0_i32 = arith.constant 0 : i32
    %c0_i32_0 = arith.constant 0 : i32
    %c0_i32_1 = arith.constant 0 : i32
    return %c0_i32, %c0_i32_0 : i32, i32
  }
  func.func @transform_2(%arg0: i32) -> (i32, i32) {
    %c0_i32 = arith.constant 0 : i32
    %c0_i32_0 = arith.constant 0 : i32
    %c0_i32_1 = arith.constant 0 : i32
    return %c0_i32, %c0_i32_0 : i32, i32
  }
  func.func @transform_3(%arg0: i32) -> (i32, i32) {
    %c0_i32 = arith.constant 0 : i32
    %c0_i32_0 = arith.constant 0 : i32
    return %arg0, %c0_i32 : i32, i32
  }
  func.func @transform_4(%arg0: i32) -> (i32, i32) {
    %c0_i32 = arith.constant 0 : i32
    %c0_i32_0 = arith.constant 0 : i32
    return %arg0, %c0_i32 : i32, i32
  }
}

module attributes {stable_mosaic.version = 11 : i64} {
  func.func @_ffn_add_ln_kernel(%arg0: i32, %arg1: memref<16x32xf32, #tpu.memory_space<vmem>>, %arg2: memref<32x64xf32, #tpu.memory_space<vmem>>, %arg3: memref<1x64xf32, #tpu.memory_space<vmem>>, %arg4: memref<64x32xf32, #tpu.memory_space<vmem>>, %arg5: memref<1x32xf32, #tpu.memory_space<vmem>>, %arg6: memref<1x32xf32, #tpu.memory_space<vmem>>, %arg7: memref<1x32xf32, #tpu.memory_space<vmem>>, %arg8: memref<16x32xf32, #tpu.memory_space<vmem>>) attributes {dimension_semantics = [#tpu.dimension_semantics<parallel>], iteration_bounds = array<i64: 1>, scalar_prefetch = 0 : i64, scratch_operands = 0 : i64, tpu.core_type = #tpu.core_type<tc>, window_params = [{transform_indices = @transform_0, window_bounds = array<i64: 16, 32>}, {pipeline_mode = #tpu.pipeline_mode<synchronous>, transform_indices = @transform_1, window_bounds = array<i64: 32, 64>}, {pipeline_mode = #tpu.pipeline_mode<synchronous>, transform_indices = @transform_2, window_bounds = array<i64: 1, 64>}, {pipeline_mode = #tpu.pipeline_mode<synchronous>, transform_indices = @transform_3, window_bounds = array<i64: 64, 32>}, {pipeline_mode = #tpu.pipeline_mode<synchronous>, transform_indices = @transform_4, window_bounds = array<i64: 1, 32>}, {pipeline_mode = #tpu.pipeline_mode<synchronous>, transform_indices = @transform_5, window_bounds = array<i64: 1, 32>}, {pipeline_mode = #tpu.pipeline_mode<synchronous>, transform_indices = @transform_6, window_bounds = array<i64: 1, 32>}, {transform_indices = @transform_7, window_bounds = array<i64: 16, 32>}]} {
    %c0 = arith.constant 0 : index
    %c0_0 = arith.constant 0 : index
    %0 = vector.load %arg1[%c0, %c0_0] : memref<16x32xf32, #tpu.memory_space<vmem>>, vector<16x32xf32>
    %c0_1 = arith.constant 0 : index
    %c0_2 = arith.constant 0 : index
    %1 = vector.load %arg2[%c0_1, %c0_2] : memref<32x64xf32, #tpu.memory_space<vmem>>, vector<32x64xf32>
    %cst = arith.constant dense<0.000000e+00> : vector<16x64xf32>
    %2 = tpu.matmul %0, %1, %cst {dimension_numbers = #tpu.dot_dimension_numbers<[1], [0], [0], [1], [0, 0, 1, 1], [], []>} : vector<16x32xf32>, vector<32x64xf32>, vector<16x64xf32> -> vector<16x64xf32>
    %c0_3 = arith.constant 0 : index
    %c0_4 = arith.constant 0 : index
    %3 = vector.load %arg3[%c0_3, %c0_4] : memref<1x64xf32, #tpu.memory_space<vmem>>, vector<1x64xf32>
    %4 = vector.broadcast %3 : vector<1x64xf32> to vector<16x64xf32>
    %5 = arith.addf %2, %4 : vector<16x64xf32>
    %cst_5 = arith.constant 0.000000e+00 : f32
    %6 = vector.broadcast %cst_5 : f32 to vector<16x64xf32>
    %7 = arith.maximumf %5, %6 : vector<16x64xf32>
    %c0_6 = arith.constant 0 : index
    %c0_7 = arith.constant 0 : index
    %8 = vector.load %arg4[%c0_6, %c0_7] : memref<64x32xf32, #tpu.memory_space<vmem>>, vector<64x32xf32>
    %cst_8 = arith.constant dense<0.000000e+00> : vector<16x32xf32>
    %9 = tpu.matmul %7, %8, %cst_8 {dimension_numbers = #tpu.dot_dimension_numbers<[1], [0], [0], [1], [0, 0, 1, 1], [], []>} : vector<16x64xf32>, vector<64x32xf32>, vector<16x32xf32> -> vector<16x32xf32>
    %c0_9 = arith.constant 0 : index
    %c0_10 = arith.constant 0 : index
    %10 = vector.load %arg5[%c0_9, %c0_10] : memref<1x32xf32, #tpu.memory_space<vmem>>, vector<1x32xf32>
    %11 = vector.broadcast %10 : vector<1x32xf32> to vector<16x32xf32>
    %12 = arith.addf %9, %11 : vector<16x32xf32>
    %13 = arith.addf %12, %0 : vector<16x32xf32>
    %cst_11 = arith.constant dense<0.000000e+00> : vector<16xf32>
    %14 = vector.multi_reduction <add>, %13, %cst_11 [1] : vector<16x32xf32> to vector<16xf32>
    %15 = vector.shape_cast %14 : vector<16xf32> to vector<16x1xf32>
    %cst_12 = arith.constant 3.200000e+01 : f32
    %16 = vector.broadcast %cst_12 : f32 to vector<16x1xf32>
    %17 = arith.divf %15, %16 : vector<16x1xf32>
    %18 = vector.broadcast %17 : vector<16x1xf32> to vector<16x32xf32>
    %19 = arith.subf %13, %18 : vector<16x32xf32>
    %20 = arith.mulf %19, %19 : vector<16x32xf32>
    %cst_13 = arith.constant dense<0.000000e+00> : vector<16xf32>
    %21 = vector.multi_reduction <add>, %20, %cst_13 [1] : vector<16x32xf32> to vector<16xf32>
    %22 = vector.shape_cast %21 : vector<16xf32> to vector<16x1xf32>
    %cst_14 = arith.constant 3.200000e+01 : f32
    %23 = vector.broadcast %cst_14 : f32 to vector<16x1xf32>
    %24 = arith.divf %22, %23 : vector<16x1xf32>
    %25 = vector.broadcast %17 : vector<16x1xf32> to vector<16x32xf32>
    %26 = arith.subf %13, %25 : vector<16x32xf32>
    %cst_15 = arith.constant 9.99999997E-7 : f32
    %27 = vector.broadcast %cst_15 : f32 to vector<16x1xf32>
    %28 = arith.addf %24, %27 : vector<16x1xf32>
    %29 = math.rsqrt %28 : vector<16x1xf32>
    %30 = vector.broadcast %29 : vector<16x1xf32> to vector<16x32xf32>
    %31 = arith.mulf %26, %30 : vector<16x32xf32>
    %c0_16 = arith.constant 0 : index
    %c0_17 = arith.constant 0 : index
    %32 = vector.load %arg6[%c0_16, %c0_17] : memref<1x32xf32, #tpu.memory_space<vmem>>, vector<1x32xf32>
    %33 = vector.broadcast %32 : vector<1x32xf32> to vector<16x32xf32>
    %34 = arith.mulf %31, %33 : vector<16x32xf32>
    %c0_18 = arith.constant 0 : index
    %c0_19 = arith.constant 0 : index
    %35 = vector.load %arg7[%c0_18, %c0_19] : memref<1x32xf32, #tpu.memory_space<vmem>>, vector<1x32xf32>
    %36 = vector.broadcast %35 : vector<1x32xf32> to vector<16x32xf32>
    %37 = arith.addf %34, %36 : vector<16x32xf32>
    %c0_20 = arith.constant 0 : index
    %c0_21 = arith.constant 0 : index
    %38 = vector.load %arg8[%c0_20, %c0_21] : memref<16x32xf32, #tpu.memory_space<vmem>>, vector<16x32xf32>
    tpu.vector_store %arg8[%c0_20, %c0_21], %37 {strides = array<i32>} : memref<16x32xf32, #tpu.memory_space<vmem>>, vector<16x32xf32>,
    return
  }
  func.func @transform_0(%arg0: i32) -> (i32, i32) {
    %c0_i32 = arith.constant 0 : i32
    %c0_i32_0 = arith.constant 0 : i32
    return %arg0, %c0_i32 : i32, i32
  }
  func.func @transform_1(%arg0: i32) -> (i32, i32) {
    %c0_i32 = arith.constant 0 : i32
    %c0_i32_0 = arith.constant 0 : i32
    %c0_i32_1 = arith.constant 0 : i32
    return %c0_i32, %c0_i32_0 : i32, i32
  }
  func.func @transform_2(%arg0: i32) -> (i32, i32) {
    %c0_i32 = arith.constant 0 : i32
    %c0_i32_0 = arith.constant 0 : i32
    %c0_i32_1 = arith.constant 0 : i32
    return %c0_i32, %c0_i32_0 : i32, i32
  }
  func.func @transform_3(%arg0: i32) -> (i32, i32) {
    %c0_i32 = arith.constant 0 : i32
    %c0_i32_0 = arith.constant 0 : i32
    %c0_i32_1 = arith.constant 0 : i32
    return %c0_i32, %c0_i32_0 : i32, i32
  }
  func.func @transform_4(%arg0: i32) -> (i32, i32) {
    %c0_i32 = arith.constant 0 : i32
    %c0_i32_0 = arith.constant 0 : i32
    %c0_i32_1 = arith.constant 0 : i32
    return %c0_i32, %c0_i32_0 : i32, i32
  }
  func.func @transform_5(%arg0: i32) -> (i32, i32) {
    %c0_i32 = arith.constant 0 : i32
    %c0_i32_0 = arith.constant 0 : i32
    %c0_i32_1 = arith.constant 0 : i32
    return %c0_i32, %c0_i32_0 : i32, i32
  }
  func.func @transform_6(%arg0: i32) -> (i32, i32) {
    %c0_i32 = arith.constant 0 : i32
    %c0_i32_0 = arith.constant 0 : i32
    %c0_i32_1 = arith.constant 0 : i32
    return %c0_i32, %c0_i32_0 : i32, i32
  }
  func.func @transform_7(%arg0: i32) -> (i32, i32) {
    %c0_i32 = arith.constant 0 : i32
    %c0_i32_0 = arith.constant 0 : i32
    return %arg0, %c0_i32 : i32, i32
  }
}

module attributes {stable_mosaic.version = 11 : i64} {
  func.func @_qkv_proj_kernel(%arg0: i32, %arg1: memref<16x32xf32, #tpu.memory_space<vmem>>, %arg2: memref<32x96xf32, #tpu.memory_space<vmem>>, %arg3: memref<1x96xf32, #tpu.memory_space<vmem>>, %arg4: memref<16x32xf32, #tpu.memory_space<vmem>>, %arg5: memref<16x32xf32, #tpu.memory_space<vmem>>, %arg6: memref<16x32xf32, #tpu.memory_space<vmem>>) attributes {dimension_semantics = [#tpu.dimension_semantics<parallel>], iteration_bounds = array<i64: 1>, scalar_prefetch = 0 : i64, scratch_operands = 0 : i64, tpu.core_type = #tpu.core_type<tc>, window_params = [{transform_indices = @transform_0, window_bounds = array<i64: 16, 32>}, {pipeline_mode = #tpu.pipeline_mode<synchronous>, transform_indices = @transform_1, window_bounds = array<i64: 32, 96>}, {pipeline_mode = #tpu.pipeline_mode<synchronous>, transform_indices = @transform_2, window_bounds = array<i64: 1, 96>}, {transform_indices = @transform_3, window_bounds = array<i64: 16, 32>}, {transform_indices = @transform_4, window_bounds = array<i64: 16, 32>}, {transform_indices = @transform_5, window_bounds = array<i64: 16, 32>}]} {
    %c0 = arith.constant 0 : index
    %c0_0 = arith.constant 0 : index
    %0 = vector.load %arg1[%c0, %c0_0] : memref<16x32xf32, #tpu.memory_space<vmem>>, vector<16x32xf32>
    %c0_1 = arith.constant 0 : index
    %c0_2 = arith.constant 0 : index
    %1 = vector.load %arg2[%c0_1, %c0_2] : memref<32x96xf32, #tpu.memory_space<vmem>>, vector<32x96xf32>
    %cst = arith.constant dense<0.000000e+00> : vector<16x96xf32>
    %2 = tpu.matmul %0, %1, %cst {dimension_numbers = #tpu.dot_dimension_numbers<[1], [0], [0], [1], [0, 0, 1, 1], [], []>} : vector<16x32xf32>, vector<32x96xf32>, vector<16x96xf32> -> vector<16x96xf32>
    %c0_3 = arith.constant 0 : index
    %c0_4 = arith.constant 0 : index
    %3 = vector.load %arg3[%c0_3, %c0_4] : memref<1x96xf32, #tpu.memory_space<vmem>>, vector<1x96xf32>
    %4 = vector.broadcast %3 : vector<1x96xf32> to vector<16x96xf32>
    %5 = arith.addf %2, %4 : vector<16x96xf32>
    %6 = vector.extract_strided_slice %5 {offsets = [0, 0], sizes = [16, 32], strides = [1, 1]} : vector<16x96xf32> to vector<16x32xf32>
    %c0_5 = arith.constant 0 : index
    %c0_6 = arith.constant 0 : index
    %7 = vector.load %arg4[%c0_5, %c0_6] : memref<16x32xf32, #tpu.memory_space<vmem>>, vector<16x32xf32>
    tpu.vector_store %arg4[%c0_5, %c0_6], %6 {strides = array<i32>} : memref<16x32xf32, #tpu.memory_space<vmem>>, vector<16x32xf32>,
    %8 = vector.extract_strided_slice %5 {offsets = [0, 32], sizes = [16, 32], strides = [1, 1]} : vector<16x96xf32> to vector<16x32xf32>
    %c0_7 = arith.constant 0 : index
    %c0_8 = arith.constant 0 : index
    %9 = vector.load %arg5[%c0_7, %c0_8] : memref<16x32xf32, #tpu.memory_space<vmem>>, vector<16x32xf32>
    tpu.vector_store %arg5[%c0_7, %c0_8], %8 {strides = array<i32>} : memref<16x32xf32, #tpu.memory_space<vmem>>, vector<16x32xf32>,
    %10 = vector.extract_strided_slice %5 {offsets = [0, 64], sizes = [16, 32], strides = [1, 1]} : vector<16x96xf32> to vector<16x32xf32>
    %c0_9 = arith.constant 0 : index
    %c0_10 = arith.constant 0 : index
    %11 = vector.load %arg6[%c0_9, %c0_10] : memref<16x32xf32, #tpu.memory_space<vmem>>, vector<16x32xf32>
    tpu.vector_store %arg6[%c0_9, %c0_10], %10 {strides = array<i32>} : memref<16x32xf32, #tpu.memory_space<vmem>>, vector<16x32xf32>,
    return
  }
  func.func @transform_0(%arg0: i32) -> (i32, i32) {
    %c0_i32 = arith.constant 0 : i32
    %c0_i32_0 = arith.constant 0 : i32
    return %arg0, %c0_i32 : i32, i32
  }
  func.func @transform_1(%arg0: i32) -> (i32, i32) {
    %c0_i32 = arith.constant 0 : i32
    %c0_i32_0 = arith.constant 0 : i32
    %c0_i32_1 = arith.constant 0 : i32
    return %c0_i32, %c0_i32_0 : i32, i32
  }
  func.func @transform_2(%arg0: i32) -> (i32, i32) {
    %c0_i32 = arith.constant 0 : i32
    %c0_i32_0 = arith.constant 0 : i32
    %c0_i32_1 = arith.constant 0 : i32
    return %c0_i32, %c0_i32_0 : i32, i32
  }
  func.func @transform_3(%arg0: i32) -> (i32, i32) {
    %c0_i32 = arith.constant 0 : i32
    %c0_i32_0 = arith.constant 0 : i32
    return %arg0, %c0_i32 : i32, i32
  }
  func.func @transform_4(%arg0: i32) -> (i32, i32) {
    %c0_i32 = arith.constant 0 : i32
    %c0_i32_0 = arith.constant 0 : i32
    return %arg0, %c0_i32 : i32, i32
  }
  func.func @transform_5(%arg0: i32) -> (i32, i32) {
    %c0_i32 = arith.constant 0 : i32
    %c0_i32_0 = arith.constant 0 : i32
    return %arg0, %c0_i32 : i32, i32
  }
}

module attributes {stable_mosaic.version = 11 : i64} {
  func.func @_proj_add_ln_kernel(%arg0: i32, %arg1: memref<16x32xf32, #tpu.memory_space<vmem>>, %arg2: memref<32x32xf32, #tpu.memory_space<vmem>>, %arg3: memref<1x32xf32, #tpu.memory_space<vmem>>, %arg4: memref<16x32xf32, #tpu.memory_space<vmem>>, %arg5: memref<1x32xf32, #tpu.memory_space<vmem>>, %arg6: memref<1x32xf32, #tpu.memory_space<vmem>>, %arg7: memref<16x32xf32, #tpu.memory_space<vmem>>) attributes {dimension_semantics = [#tpu.dimension_semantics<parallel>], iteration_bounds = array<i64: 1>, scalar_prefetch = 0 : i64, scratch_operands = 0 : i64, tpu.core_type = #tpu.core_type<tc>, window_params = [{transform_indices = @transform_0, window_bounds = array<i64: 16, 32>}, {pipeline_mode = #tpu.pipeline_mode<synchronous>, transform_indices = @transform_1, window_bounds = array<i64: 32, 32>}, {pipeline_mode = #tpu.pipeline_mode<synchronous>, transform_indices = @transform_2, window_bounds = array<i64: 1, 32>}, {transform_indices = @transform_3, window_bounds = array<i64: 16, 32>}, {pipeline_mode = #tpu.pipeline_mode<synchronous>, transform_indices = @transform_4, window_bounds = array<i64: 1, 32>}, {pipeline_mode = #tpu.pipeline_mode<synchronous>, transform_indices = @transform_5, window_bounds = array<i64: 1, 32>}, {transform_indices = @transform_6, window_bounds = array<i64: 16, 32>}]} {
    %c0 = arith.constant 0 : index
    %c0_0 = arith.constant 0 : index
    %0 = vector.load %arg1[%c0, %c0_0] : memref<16x32xf32, #tpu.memory_space<vmem>>, vector<16x32xf32>
    %c0_1 = arith.constant 0 : index
    %c0_2 = arith.constant 0 : index
    %1 = vector.load %arg2[%c0_1, %c0_2] : memref<32x32xf32, #tpu.memory_space<vmem>>, vector<32x32xf32>
    %cst = arith.constant dense<0.000000e+00> : vector<16x32xf32>
    %2 = tpu.matmul %0, %1, %cst {dimension_numbers = #tpu.dot_dimension_numbers<[1], [0], [0], [1], [0, 0, 1, 1], [], []>} : vector<16x32xf32>, vector<32x32xf32>, vector<16x32xf32> -> vector<16x32xf32>
    %c0_3 = arith.constant 0 : index
    %c0_4 = arith.constant 0 : index
    %3 = vector.load %arg3[%c0_3, %c0_4] : memref<1x32xf32, #tpu.memory_space<vmem>>, vector<1x32xf32>
    %4 = vector.broadcast %3 : vector<1x32xf32> to vector<16x32xf32>
    %5 = arith.addf %2, %4 : vector<16x32xf32>
    %c0_5 = arith.constant 0 : index
    %c0_6 = arith.constant 0 : index
    %6 = vector.load %arg4[%c0_5, %c0_6] : memref<16x32xf32, #tpu.memory_space<vmem>>, vector<16x32xf32>
    %7 = arith.addf %5, %6 : vector<16x32xf32>
    %cst_7 = arith.constant dense<0.000000e+00> : vector<16xf32>
    %8 = vector.multi_reduction <add>, %7, %cst_7 [1] : vector<16x32xf32> to vector<16xf32>
    %9 = vector.shape_cast %8 : vector<16xf32> to vector<16x1xf32>
    %cst_8 = arith.constant 3.200000e+01 : f32
    %10 = vector.broadcast %cst_8 : f32 to vector<16x1xf32>
    %11 = arith.divf %9, %10 : vector<16x1xf32>
    %12 = vector.broadcast %11 : vector<16x1xf32> to vector<16x32xf32>
    %13 = arith.subf %7, %12 : vector<16x32xf32>
    %14 = arith.mulf %13, %13 : vector<16x32xf32>
    %cst_9 = arith.constant dense<0.000000e+00> : vector<16xf32>
    %15 = vector.multi_reduction <add>, %14, %cst_9 [1] : vector<16x32xf32> to vector<16xf32>
    %16 = vector.shape_cast %15 : vector<16xf32> to vector<16x1xf32>
    %cst_10 = arith.constant 3.200000e+01 : f32
    %17 = vector.broadcast %cst_10 : f32 to vector<16x1xf32>
    %18 = arith.divf %16, %17 : vector<16x1xf32>
    %19 = vector.broadcast %11 : vector<16x1xf32> to vector<16x32xf32>
    %20 = arith.subf %7, %19 : vector<16x32xf32>
    %cst_11 = arith.constant 9.99999997E-7 : f32
    %21 = vector.broadcast %cst_11 : f32 to vector<16x1xf32>
    %22 = arith.addf %18, %21 : vector<16x1xf32>
    %23 = math.rsqrt %22 : vector<16x1xf32>
    %24 = vector.broadcast %23 : vector<16x1xf32> to vector<16x32xf32>
    %25 = arith.mulf %20, %24 : vector<16x32xf32>
    %c0_12 = arith.constant 0 : index
    %c0_13 = arith.constant 0 : index
    %26 = vector.load %arg5[%c0_12, %c0_13] : memref<1x32xf32, #tpu.memory_space<vmem>>, vector<1x32xf32>
    %27 = vector.broadcast %26 : vector<1x32xf32> to vector<16x32xf32>
    %28 = arith.mulf %25, %27 : vector<16x32xf32>
    %c0_14 = arith.constant 0 : index
    %c0_15 = arith.constant 0 : index
    %29 = vector.load %arg6[%c0_14, %c0_15] : memref<1x32xf32, #tpu.memory_space<vmem>>, vector<1x32xf32>
    %30 = vector.broadcast %29 : vector<1x32xf32> to vector<16x32xf32>
    %31 = arith.addf %28, %30 : vector<16x32xf32>
    %c0_16 = arith.constant 0 : index
    %c0_17 = arith.constant 0 : index
    %32 = vector.load %arg7[%c0_16, %c0_17] : memref<16x32xf32, #tpu.memory_space<vmem>>, vector<16x32xf32>
    tpu.vector_store %arg7[%c0_16, %c0_17], %31 {strides = array<i32>} : memref<16x32xf32, #tpu.memory_space<vmem>>, vector<16x32xf32>,
    return
  }
  func.func @transform_0(%arg0: i32) -> (i32, i32) {
    %c0_i32 = arith.constant 0 : i32
    %c0_i32_0 = arith.constant 0 : i32
    return %arg0, %c0_i32 : i32, i32
  }
  func.func @transform_1(%arg0: i32) -> (i32, i32) {
    %c0_i32 = arith.constant 0 : i32
    %c0_i32_0 = arith.constant 0 : i32
    %c0_i32_1 = arith.constant 0 : i32
    return %c0_i32, %c0_i32_0 : i32, i32
  }
  func.func @transform_2(%arg0: i32) -> (i32, i32) {
    %c0_i32 = arith.constant 0 : i32
    %c0_i32_0 = arith.constant 0 : i32
    %c0_i32_1 = arith.constant 0 : i32
    return %c0_i32, %c0_i32_0 : i32, i32
  }
  func.func @transform_3(%arg0: i32) -> (i32, i32) {
    %c0_i32 = arith.constant 0 : i32
    %c0_i32_0 = arith.constant 0 : i32
    return %arg0, %c0_i32 : i32, i32
  }
  func.func @transform_4(%arg0: i32) -> (i32, i32) {
    %c0_i32 = arith.constant 0 : i32
    %c0_i32_0 = arith.constant 0 : i32
    %c0_i32_1 = arith.constant 0 : i32
    return %c0_i32, %c0_i32_0 : i32, i32
  }
  func.func @transform_5(%arg0: i32) -> (i32, i32) {
    %c0_i32 = arith.constant 0 : i32
    %c0_i32_0 = arith.constant 0 : i32
    %c0_i32_1 = arith.constant 0 : i32
    return %c0_i32, %c0_i32_0 : i32, i32
  }
  func.func @transform_6(%arg0: i32) -> (i32, i32) {
    %c0_i32 = arith.constant 0 : i32
    %c0_i32_0 = arith.constant 0 : i32
    return %arg0, %c0_i32 : i32, i32
  }
}

module attributes {stable_mosaic.version = 11 : i64} {
  func.func @_ffn_add_ln_kernel(%arg0: i32, %arg1: memref<16x32xf32, #tpu.memory_space<vmem>>, %arg2: memref<32x64xf32, #tpu.memory_space<vmem>>, %arg3: memref<1x64xf32, #tpu.memory_space<vmem>>, %arg4: memref<64x32xf32, #tpu.memory_space<vmem>>, %arg5: memref<1x32xf32, #tpu.memory_space<vmem>>, %arg6: memref<1x32xf32, #tpu.memory_space<vmem>>, %arg7: memref<1x32xf32, #tpu.memory_space<vmem>>, %arg8: memref<16x32xf32, #tpu.memory_space<vmem>>) attributes {dimension_semantics = [#tpu.dimension_semantics<parallel>], iteration_bounds = array<i64: 1>, scalar_prefetch = 0 : i64, scratch_operands = 0 : i64, tpu.core_type = #tpu.core_type<tc>, window_params = [{transform_indices = @transform_0, window_bounds = array<i64: 16, 32>}, {pipeline_mode = #tpu.pipeline_mode<synchronous>, transform_indices = @transform_1, window_bounds = array<i64: 32, 64>}, {pipeline_mode = #tpu.pipeline_mode<synchronous>, transform_indices = @transform_2, window_bounds = array<i64: 1, 64>}, {pipeline_mode = #tpu.pipeline_mode<synchronous>, transform_indices = @transform_3, window_bounds = array<i64: 64, 32>}, {pipeline_mode = #tpu.pipeline_mode<synchronous>, transform_indices = @transform_4, window_bounds = array<i64: 1, 32>}, {pipeline_mode = #tpu.pipeline_mode<synchronous>, transform_indices = @transform_5, window_bounds = array<i64: 1, 32>}, {pipeline_mode = #tpu.pipeline_mode<synchronous>, transform_indices = @transform_6, window_bounds = array<i64: 1, 32>}, {transform_indices = @transform_7, window_bounds = array<i64: 16, 32>}]} {
    %c0 = arith.constant 0 : index
    %c0_0 = arith.constant 0 : index
    %0 = vector.load %arg1[%c0, %c0_0] : memref<16x32xf32, #tpu.memory_space<vmem>>, vector<16x32xf32>
    %c0_1 = arith.constant 0 : index
    %c0_2 = arith.constant 0 : index
    %1 = vector.load %arg2[%c0_1, %c0_2] : memref<32x64xf32, #tpu.memory_space<vmem>>, vector<32x64xf32>
    %cst = arith.constant dense<0.000000e+00> : vector<16x64xf32>
    %2 = tpu.matmul %0, %1, %cst {dimension_numbers = #tpu.dot_dimension_numbers<[1], [0], [0], [1], [0, 0, 1, 1], [], []>} : vector<16x32xf32>, vector<32x64xf32>, vector<16x64xf32> -> vector<16x64xf32>
    %c0_3 = arith.constant 0 : index
    %c0_4 = arith.constant 0 : index
    %3 = vector.load %arg3[%c0_3, %c0_4] : memref<1x64xf32, #tpu.memory_space<vmem>>, vector<1x64xf32>
    %4 = vector.broadcast %3 : vector<1x64xf32> to vector<16x64xf32>
    %5 = arith.addf %2, %4 : vector<16x64xf32>
    %cst_5 = arith.constant 0.000000e+00 : f32
    %6 = vector.broadcast %cst_5 : f32 to vector<16x64xf32>
    %7 = arith.maximumf %5, %6 : vector<16x64xf32>
    %c0_6 = arith.constant 0 : index
    %c0_7 = arith.constant 0 : index
    %8 = vector.load %arg4[%c0_6, %c0_7] : memref<64x32xf32, #tpu.memory_space<vmem>>, vector<64x32xf32>
    %cst_8 = arith.constant dense<0.000000e+00> : vector<16x32xf32>
    %9 = tpu.matmul %7, %8, %cst_8 {dimension_numbers = #tpu.dot_dimension_numbers<[1], [0], [0], [1], [0, 0, 1, 1], [], []>} : vector<16x64xf32>, vector<64x32xf32>, vector<16x32xf32> -> vector<16x32xf32>
    %c0_9 = arith.constant 0 : index
    %c0_10 = arith.constant 0 : index
    %10 = vector.load %arg5[%c0_9, %c0_10] : memref<1x32xf32, #tpu.memory_space<vmem>>, vector<1x32xf32>
    %11 = vector.broadcast %10 : vector<1x32xf32> to vector<16x32xf32>
    %12 = arith.addf %9, %11 : vector<16x32xf32>
    %13 = arith.addf %12, %0 : vector<16x32xf32>
    %cst_11 = arith.constant dense<0.000000e+00> : vector<16xf32>
    %14 = vector.multi_reduction <add>, %13, %cst_11 [1] : vector<16x32xf32> to vector<16xf32>
    %15 = vector.shape_cast %14 : vector<16xf32> to vector<16x1xf32>
    %cst_12 = arith.constant 3.200000e+01 : f32
    %16 = vector.broadcast %cst_12 : f32 to vector<16x1xf32>
    %17 = arith.divf %15, %16 : vector<16x1xf32>
    %18 = vector.broadcast %17 : vector<16x1xf32> to vector<16x32xf32>
    %19 = arith.subf %13, %18 : vector<16x32xf32>
    %20 = arith.mulf %19, %19 : vector<16x32xf32>
    %cst_13 = arith.constant dense<0.000000e+00> : vector<16xf32>
    %21 = vector.multi_reduction <add>, %20, %cst_13 [1] : vector<16x32xf32> to vector<16xf32>
    %22 = vector.shape_cast %21 : vector<16xf32> to vector<16x1xf32>
    %cst_14 = arith.constant 3.200000e+01 : f32
    %23 = vector.broadcast %cst_14 : f32 to vector<16x1xf32>
    %24 = arith.divf %22, %23 : vector<16x1xf32>
    %25 = vector.broadcast %17 : vector<16x1xf32> to vector<16x32xf32>
    %26 = arith.subf %13, %25 : vector<16x32xf32>
    %cst_15 = arith.constant 9.99999997E-7 : f32
    %27 = vector.broadcast %cst_15 : f32 to vector<16x1xf32>
    %28 = arith.addf %24, %27 : vector<16x1xf32>
    %29 = math.rsqrt %28 : vector<16x1xf32>
    %30 = vector.broadcast %29 : vector<16x1xf32> to vector<16x32xf32>
    %31 = arith.mulf %26, %30 : vector<16x32xf32>
    %c0_16 = arith.constant 0 : index
    %c0_17 = arith.constant 0 : index
    %32 = vector.load %arg6[%c0_16, %c0_17] : memref<1x32xf32, #tpu.memory_space<vmem>>, vector<1x32xf32>
    %33 = vector.broadcast %32 : vector<1x32xf32> to vector<16x32xf32>
    %34 = arith.mulf %31, %33 : vector<16x32xf32>
    %c0_18 = arith.constant 0 : index
    %c0_19 = arith.constant 0 : index
    %35 = vector.load %arg7[%c0_18, %c0_19] : memref<1x32xf32, #tpu.memory_space<vmem>>, vector<1x32xf32>
    %36 = vector.broadcast %35 : vector<1x32xf32> to vector<16x32xf32>
    %37 = arith.addf %34, %36 : vector<16x32xf32>
    %c0_20 = arith.constant 0 : index
    %c0_21 = arith.constant 0 : index
    %38 = vector.load %arg8[%c0_20, %c0_21] : memref<16x32xf32, #tpu.memory_space<vmem>>, vector<16x32xf32>
    tpu.vector_store %arg8[%c0_20, %c0_21], %37 {strides = array<i32>} : memref<16x32xf32, #tpu.memory_space<vmem>>, vector<16x32xf32>,
    return
  }
  func.func @transform_0(%arg0: i32) -> (i32, i32) {
    %c0_i32 = arith.constant 0 : i32
    %c0_i32_0 = arith.constant 0 : i32
    return %arg0, %c0_i32 : i32, i32
  }
  func.func @transform_1(%arg0: i32) -> (i32, i32) {
    %c0_i32 = arith.constant 0 : i32
    %c0_i32_0 = arith.constant 0 : i32
    %c0_i32_1 = arith.constant 0 : i32
    return %c0_i32, %c0_i32_0 : i32, i32
  }
  func.func @transform_2(%arg0: i32) -> (i32, i32) {
    %c0_i32 = arith.constant 0 : i32
    %c0_i32_0 = arith.constant 0 : i32
    %c0_i32_1 = arith.constant 0 : i32
    return %c0_i32, %c0_i32_0 : i32, i32
  }
  func.func @transform_3(%arg0: i32) -> (i32, i32) {
    %c0_i32 = arith.constant 0 : i32
    %c0_i32_0 = arith.constant 0 : i32
    %c0_i32_1 = arith.constant 0 : i32
    return %c0_i32, %c0_i32_0 : i32, i32
  }
  func.func @transform_4(%arg0: i32) -> (i32, i32) {
    %c0_i32 = arith.constant 0 : i32
    %c0_i32_0 = arith.constant 0 : i32
    %c0_i32_1 = arith.constant 0 : i32
    return %c0_i32, %c0_i32_0 : i32, i32
  }
  func.func @transform_5(%arg0: i32) -> (i32, i32) {
    %c0_i32 = arith.constant 0 : i32
    %c0_i32_0 = arith.constant 0 : i32
    %c0_i32_1 = arith.constant 0 : i32
    return %c0_i32, %c0_i32_0 : i32, i32
  }
  func.func @transform_6(%arg0: i32) -> (i32, i32) {
    %c0_i32 = arith.constant 0 : i32
    %c0_i32_0 = arith.constant 0 : i32
    %c0_i32_1 = arith.constant 0 : i32
    return %c0_i32, %c0_i32_0 : i32, i32
  }
  func.func @transform_7(%arg0: i32) -> (i32, i32) {
    %c0_i32 = arith.constant 0 : i32
    %c0_i32_0 = arith.constant 0 : i32
    return %arg0, %c0_i32 : i32, i32
  }
}

</mosaic_0001>

<llo_original>
// kernel: transformer_decoder.16
$region0: #{transformer_decoder.16}
  #allocation0 [shape = 'u32[]', space=smem, size = 0x4, offset = 0x4, fixed_abs, tag = 'smem constant byte address 0x4 - core index']
  #allocation1 [shape = 'u32[144,128]{1,0:T(1,128)}', space=vmem, size = 0x12000, scoped, tag = 'internal scratch']
  %s0 = inlined_call_operand.vmem [shape: f32[16,32], index: 0, kind: input, shape index: {}]
  %s1 = inlined_call_operand.vmem [shape: f32[32,96], index: 1, kind: input, shape index: {}]
  %s2 = inlined_call_operand.vmem [shape: f32[1,96], index: 2, kind: input, shape index: {}]
  %s3 = inlined_call_operand.vmem [shape: f32[16,32], index: 3, kind: output, shape index: {0}]
  %s4 = inlined_call_operand.vmem [shape: f32[16,32], index: 4, kind: output, shape index: {1}]
  %s5 = inlined_call_operand.vmem [shape: f32[16,32], index: 5, kind: output, shape index: {2}]
  %6 = xla_tuple %s3, %s4, %s5
  %s7 = sld [smem:[#allocation0]]
  $region38: #{transformer_decoder.16} parent=0
    _
  %s9 = ssub.s32 1, %s7
  %s10 = scalar_select 0, %s9, %s7
  // Predicated region
  $region2: #{transformer_decoder.16} parent=0 // pred_check
    _
  $region3: #{transformer_decoder.16} parent=0 // pred_check_branch
    %12 = sbr.rel (0) target = $region5
  $region4: #{transformer_decoder.16} parent=0 // pred_region
    _
  $region5: #{transformer_decoder.16} parent=0 // pred_fallthru
    _
  // Predicated region
  $region6: #{transformer_decoder.16} parent=0 // pred_check
    _
  $region7: #{transformer_decoder.16} parent=0 // pred_check_branch
    %14 = sbr.rel (0) target = $region9
  $region8: #{transformer_decoder.16} parent=0 // pred_region
    _
  $region9: #{transformer_decoder.16} parent=0 // pred_fallthru
    _
  // Predicated region
  $region10: #{transformer_decoder.16} parent=0 // pred_check
    _
  $region11: #{transformer_decoder.16} parent=0 // pred_check_branch
    %16 = sbr.rel (0) target = $region13
  $region12: #{transformer_decoder.16} parent=0 // pred_region
    _
  $region13: #{transformer_decoder.16} parent=0 // pred_fallthru
    _
  %v17 = vld [vmem:[%s0] sm:$0xff]
  %v18 = vld [vmem:[%s0 + $0x8] sm:$0xff]
  %v19 = vmul.f32 %v17, 5.656854
  %v20 = vmul.f32 %v18, 5.656854
  %v21 = vld [vmem:[%s1] sm:$0xff]
  %v22 = vld [vmem:[%s1 + $0x8] sm:$0xff]
  %v23 = vld [vmem:[%s1 + $0x10] sm:$0xff]
  %v24 = vld [vmem:[%s1 + $0x18] sm:$0xff]
  %v25 = vld [vmem:[%s2] sm:$0x1]
  %v27 = vlaneseq
  %v28 = vshrl.u32 %v27, 7
  %v29 = vsub.s32 0, %v28
  %v30 = vrot.slane %v25, %v29
  %vm32 = vcmask 261120
  %v34 = vsel %vm32, %v19, 0
  %v37 = vsel %vm32, %v20, 0
  %39 = vmatprep.subr.mxu0 0.0
  %40 = vmatpush1.msra.mxu0 %v21
  %41 = vmatprep.subr.mxu0 0.0
  %42 = vmatpush1.msra.mxu0 %v22
  %43 = vmatprep.subr.mxu0 0.0
  %44 = vmatpush1.msra.mxu0 %v23
  %45 = vmatprep.subr.mxu0 0.0
  %46 = vmatpush1.msra.mxu0 %v24
  %47 = vmatprep.subr.mxu0 0.0
  %48 = vmatpush1.msra.mxu0 0.0
  %49 = vmatprep.subr.mxu0 0.0
  %50 = vmatpush1.msra.mxu0 0.0
  %51 = vmatprep.subr.mxu0 0.0
  %52 = vmatpush1.msra.mxu0 0.0
  %53 = vmatprep.subr.mxu0 0.0
  %54 = vmatpush1.msra.mxu0 0.0
  %55 = vmatprep.subr.mxu0 0.0
  %56 = vmatpush1.msra.mxu0 0.0
  %57 = vmatprep.subr.mxu0 0.0
  %58 = vmatpush1.msra.mxu0 0.0
  %59 = vmatprep.subr.mxu0 0.0
  %60 = vmatpush1.msra.mxu0 0.0
  %61 = vmatprep.subr.mxu0 0.0
  %62 = vmatpush1.msra.mxu0 0.0
  %63 = vmatprep.subr.mxu0 0.0
  %64 = vmatpush1.msra.mxu0 0.0
  %65 = vmatprep.subr.mxu0 0.0
  %66 = vmatpush1.msra.mxu0 0.0
  %67 = vmatprep.subr.mxu0 0.0
  %68 = vmatpush1.msra.mxu0 0.0
  %69 = vmatprep.subr.mxu0 0.0
  %70 = vmatpush1.msra.mxu0 0.0
  %71 = vmatprep.subr.mxu0 0.0
  %72 = vmatpush1.msra.mxu0 0.0
  %73 = vmatprep.subr.mxu0 0.0
  %74 = vmatpush1.msra.mxu0 0.0
  %75 = vmatprep.subr.mxu0 0.0
  %76 = vmatpush1.msra.mxu0 0.0
  %77 = vmatprep.subr.mxu0 0.0
  %78 = vmatpush1.msra.mxu0 0.0
  %79 = vmatprep.subr.mxu0 0.0
  %80 = vmatpush1.msra.mxu0 0.0
  %81 = vmatprep.subr.mxu0 0.0
  %82 = vmatpush1.msra.mxu0 0.0
  %83 = vmatprep.subr.mxu0 0.0
  %84 = vmatpush1.msra.mxu0 0.0
  %85 = vmatprep.subr.mxu0 0.0
  %86 = vmatpush1.msra.mxu0 0.0
  %87 = vmatprep.subr.mxu0 0.0
  %88 = vmatpush1.msra.mxu0 0.0
  %89 = vmatprep.subr.mxu0 0.0
  %90 = vmatpush1.msra.mxu0 0.0
  %91 = vmatprep.subr.mxu0 0.0
  %92 = vmatpush1.msra.mxu0 0.0
  %93 = vmatprep.subr.mxu0 0.0
  %94 = vmatpush1.msra.mxu0 0.0
  %95 = vmatprep.subr.mxu0 0.0
  %96 = vmatpush1.msra.mxu0 0.0
  %97 = vmatprep.subr.mxu0 0.0
  %98 = vmatpush1.msra.mxu0 0.0
  %99 = vmatprep.subr.mxu0 0.0
  %100 = vmatpush1.msra.mxu0 0.0
  %101 = vmatprep.subr.mxu0 0.0
  %102 = vmatpush1.msra.mxu0 0.0
  %103 = vmatprep.mubr.f32.mxu0 0.0
  %104 = vmatmul.mubr.f32.gmra.mrb[0].mxu0 %v34
  %v105 = vpop.f32.mrb[0].mxu0
  %v106 = vadd.f32 %v30, %v105
  %v107 = vpop.f32.mrb[0].mxu0
  %108 = vmatprep.mubr.f32.mxu0 0.0
  %109 = vmatmul.mubr.f32.gmra.mrb[0].mxu0 %v37
  %v110 = vpop.f32.mrb[0].mxu0
  %v111 = vadd.f32 %v30, %v110
  %v112 = vpop.f32.mrb[0].mxu0
  %113 = vdwg.mxu0
  %114 = vst.msk [vmem:[%s3] sm:$0xff] %vm32, %v106
  %115 = vst.msk [vmem:[%s3 + $0x8] sm:$0xff] %vm32, %v111
  %118 = vrot.lane.b32.xlu0 %v106, 96
  %v119 = vpop.permute.xlu0 %118
  %120 = vrot.lane.b32.xlu0 %v111, 96
  %v121 = vpop.permute.xlu0 %120
  %124 = vst.msk [vmem:[%s4] sm:$0xff] %vm32, %v119
  %125 = vst.msk [vmem:[%s4 + $0x8] sm:$0xff] %vm32, %v121
  %126 = vrot.lane.b32.xlu0 %v106, 64
  %v127 = vpop.permute.xlu0 %126
  %128 = vrot.lane.b32.xlu0 %v111, 64
  %v129 = vpop.permute.xlu0 %128
  %132 = vst.msk [vmem:[%s5] sm:$0xff] %vm32, %v127
  %133 = vst.msk [vmem:[%s5 + $0x8] sm:$0xff] %vm32, %v129
  // Predicated region
  $region14: #{transformer_decoder.16} parent=0 // pred_check
    _
  $region15: #{transformer_decoder.16} parent=0 // pred_check_branch
    %135 = sbr.rel (0) target = $region17
  $region16: #{transformer_decoder.16} parent=0 // pred_region
    _
  $region17: #{transformer_decoder.16} parent=0 // pred_fallthru
    _
  // Predicated region
  $region18: #{transformer_decoder.16} parent=0 // pred_check
    _
  $region19: #{transformer_decoder.16} parent=0 // pred_check_branch
    %137 = sbr.rel (0) target = $region21
  $region20: #{transformer_decoder.16} parent=0 // pred_region
    _
  $region21: #{transformer_decoder.16} parent=0 // pred_fallthru
    _
  // Predicated region
  $region22: #{transformer_decoder.16} parent=0 // pred_check
    _
  $region23: #{transformer_decoder.16} parent=0 // pred_check_branch
    %139 = sbr.rel (0) target = $region25
  $region24: #{transformer_decoder.16} parent=0 // pred_region
    _
  $region25: #{transformer_decoder.16} parent=0 // pred_fallthru
    _
  // Predicated region
  $region26: #{transformer_decoder.16} parent=0 // pred_check
    _
  $region27: #{transformer_decoder.16} parent=0 // pred_check_branch
    %141 = sbr.rel (0) target = $region29
  $region28: #{transformer_decoder.16} parent=0 // pred_region
    _
  $region29: #{transformer_decoder.16} parent=0 // pred_fallthru
    _
  // Predicated region
  $region30: #{transformer_decoder.16} parent=0 // pred_check
    _
  $region31: #{transformer_decoder.16} parent=0 // pred_check_branch
    %143 = sbr.rel (0) target = $region33
  $region32: #{transformer_decoder.16} parent=0 // pred_region
    _
  $region33: #{transformer_decoder.16} parent=0 // pred_fallthru
    _
  // Predicated region
  $region34: #{transformer_decoder.16} parent=0 // pred_check
    _
  $region35: #{transformer_decoder.16} parent=0 // pred_check_branch
    %145 = sbr.rel (0) target = $region37
  $region36: #{transformer_decoder.16} parent=0 // pred_region
    _
  $region37: #{transformer_decoder.16} parent=0 // pred_fallthru
    _

// kernel: transformer_decoder.17
$region0: #{transformer_decoder.17}
  #allocation0 [shape = 'u32[]', space=smem, size = 0x4, offset = 0x4, fixed_abs, tag = 'smem constant byte address 0x4 - core index']
  #allocation1 [shape = 'u32[144,128]{1,0:T(1,128)}', space=vmem, size = 0x12000, scoped, tag = 'internal scratch']
  %s0 = inlined_call_operand.vmem [shape: f32[2,8,32], index: 0, kind: input, shape index: {}]
  %s1 = inlined_call_operand.vmem [shape: f32[2,8,32], index: 1, kind: input, shape index: {}]
  %s2 = inlined_call_operand.vmem [shape: f32[2,8,32], index: 2, kind: input, shape index: {}]
  %s3 = inlined_call_operand.vmem [shape: f32[2,8,32], index: 3, kind: output, shape index: {}]
  %s4 = sld [smem:[#allocation0]]
  $region45: #{transformer_decoder.17} parent=0
    _
  %s6 = ssub.s32 1, %s4
  %s7 = scalar_select 0, %s6, %s4
  loop: start=0, step=1, limit=4
  $region2: #{transformer_decoder.17} parent=0 // loop_pre_header
    _
  $region3: #{transformer_decoder.17} parent=0 // loop_header
    %s9 = sphi 0, %s13
    %p10 = scmp.ge.s32.totalorder %s9, 4
    %s19 = sphi 0, %s21
    %s22 = sphi 0, %s19
    %s23 = sphi 0, %s22
    %s39 = sphi 0, %s23
    %s45 = sphi 0, %s47
    %s48 = sphi 0, %s45
    %s49 = sphi 0, %s48
    %s65 = sphi 0, %s49
    %s71 = sphi 0, %s73
    %s74 = sphi 0, %s71
    %s75 = sphi 0, %s74
    %s91 = sphi 0, %s75
    %s97 = sphi 0, %s99
    %s100 = sphi 0, %s97
    %s101 = sphi 0, %s100
    %s117 = sphi 0, %s101
  $region4: #{transformer_decoder.17} parent=0 // loop_header_branch
    %12 = sbr.rel (%p10) target = $region8
  $region5: #{transformer_decoder.17} parent=0 // loop_body
    %s14 = ssub.s32 %s9, 1
    %s15 = ssub.s32 %s9, 2
    %s16 = sadd.s32 %s9, 1
    %s17 = ssub.s32 %s9, %s16
    %p18 = scmp.eq.s32.totalorder %s17, 0
    %s20 = sadd.s32 %s19, 1
    %s21 = scalar_select %p18, %s19, %s20
    %p24 = pneg %p18
    %p25 = scmp.eq.s32.totalorder %s9, 1
    %p26 = por %p24, %p25
    %p27 = scmp.ne.s32.totalorder %s19, %s22
    %p28 = scmp.eq.s32.totalorder %s9, 0
    %p29 = por %p27, %p28
    %p30 = scmp.ne.s32.totalorder %s19, %s22
    %p31 = scmp.eq.s32.totalorder %s14, 1
    %p32 = por %p30, %p31
    %p33 = scmp.ne.s32.totalorder %s22, %s23
    %p34 = scmp.eq.s32.totalorder %s14, 0
    %p35 = por %p33, %p34
    %p36 = scmp.ne.s32.totalorder %s22, %s23
    %p37 = scmp.eq.s32.totalorder %s15, 1
    %p38 = por %p36, %p37
    %p40 = scmp.ne.s32.totalorder %s23, %s39
    %p41 = scmp.eq.s32.totalorder %s15, 0
    %p42 = por %p40, %p41
    %s43 = ssub.s32 %s9, %s16
    %p44 = scmp.eq.s32.totalorder %s43, 0
    %s46 = sadd.s32 %s45, 1
    %s47 = scalar_select %p44, %s45, %s46
    %p50 = pneg %p44
    %p51 = scmp.eq.s32.totalorder %s9, 1
    %p52 = por %p50, %p51
    %p53 = scmp.ne.s32.totalorder %s45, %s48
    %p54 = scmp.eq.s32.totalorder %s9, 0
    %p55 = por %p53, %p54
    %p56 = scmp.ne.s32.totalorder %s45, %s48
    %p57 = scmp.eq.s32.totalorder %s14, 1
    %p58 = por %p56, %p57
    %p59 = scmp.ne.s32.totalorder %s48, %s49
    %p60 = scmp.eq.s32.totalorder %s14, 0
    %p61 = por %p59, %p60
    %p62 = scmp.ne.s32.totalorder %s48, %s49
    %p63 = scmp.eq.s32.totalorder %s15, 1
    %p64 = por %p62, %p63
    %p66 = scmp.ne.s32.totalorder %s49, %s65
    %p67 = scmp.eq.s32.totalorder %s15, 0
    %p68 = por %p66, %p67
    %s69 = ssub.s32 %s9, %s16
    %p70 = scmp.eq.s32.totalorder %s69, 0
    %s72 = sadd.s32 %s71, 1
    %s73 = scalar_select %p70, %s71, %s72
    %p76 = pneg %p70
    %p77 = scmp.eq.s32.totalorder %s9, 1
    %p78 = por %p76, %p77
    %p79 = scmp.ne.s32.totalorder %s71, %s74
    %p80 = scmp.eq.s32.totalorder %s9, 0
    %p81 = por %p79, %p80
    %p82 = scmp.ne.s32.totalorder %s71, %s74
    %p83 = scmp.eq.s32.totalorder %s14, 1
    %p84 = por %p82, %p83
    %p85 = scmp.ne.s32.totalorder %s74, %s75
    %p86 = scmp.eq.s32.totalorder %s14, 0
    %p87 = por %p85, %p86
    %p88 = scmp.ne.s32.totalorder %s74, %s75
    %p89 = scmp.eq.s32.totalorder %s15, 1
    %p90 = por %p88, %p89
    %p92 = scmp.ne.s32.totalorder %s75, %s91
    %p93 = scmp.eq.s32.totalorder %s15, 0
    %p94 = por %p92, %p93
    %s95 = ssub.s32 %s9, %s16
    %p96 = scmp.eq.s32.totalorder %s95, 0
    %s98 = sadd.s32 %s97, 1
    %s99 = scalar_select %p96, %s97, %s98
    %p102 = pneg %p96
    %p103 = scmp.eq.s32.totalorder %s9, 1
    %p104 = por %p102, %p103
    %p105 = scmp.ne.s32.totalorder %s97, %s100
    %p106 = scmp.eq.s32.totalorder %s9, 0
    %p107 = por %p105, %p106
    %p108 = scmp.ne.s32.totalorder %s97, %s100
    %p109 = scmp.eq.s32.totalorder %s14, 1
    %p110 = por %p108, %p109
    %p111 = scmp.ne.s32.totalorder %s100, %s101
    %p112 = scmp.eq.s32.totalorder %s14, 0
    %p113 = por %p111, %p112
    %p114 = scmp.ne.s32.totalorder %s100, %s101
    %p115 = scmp.eq.s32.totalorder %s15, 1
    %p116 = por %p114, %p115
    %p118 = scmp.ne.s32.totalorder %s101, %s117
    %p119 = scmp.eq.s32.totalorder %s15, 0
    %p120 = por %p118, %p119
    %p121 = scmp.le.s32.totalorder 1, %s9
    %p122 = scmp.lt.s32.totalorder %s9, 3
    %p123 = pnand %p121, %p122
    %p124 = pneg %p123
    // Predicated region
    $region9: #{transformer_decoder.17} parent=5 // pred_check
      _
    $region10: #{transformer_decoder.17} parent=5 // pred_check_branch
      %126 = sbr.rel (%p123) target = $region12
    $region11: #{transformer_decoder.17} parent=5 // pred_region
      %s127 = ssub.s32 %s9, 1
    $region12: #{transformer_decoder.17} parent=5 // pred_fallthru
      _
    %p128 = scmp.lt.s32.totalorder %s9, 2
    // Predicated region
    $region13: #{transformer_decoder.17} parent=5 // pred_check
      %p129 = pneg %p128
    $region14: #{transformer_decoder.17} parent=5 // pred_check_branch
      %131 = sbr.rel (%p129) target = $region16
    $region15: #{transformer_decoder.17} parent=5 // pred_region
      // Predicated region
      $region17: #{transformer_decoder.17} parent=15 // pred_check
        %p132 = pneg %p29
      $region18: #{transformer_decoder.17} parent=15 // pred_check_branch
        %134 = sbr.rel (%p132) target = $region20
      $region19: #{transformer_decoder.17} parent=15 // pred_region
        %p135 = scmp.lt.s32.totalorder %s9, 1
        %s136 = scalar_select %p135, %s9, 1
        %s137 = smul.addr %s136, 8
        %s138 = scalar_lea.vmem %s0, %s137
      $region20: #{transformer_decoder.17} parent=15 // pred_fallthru
        _
      // Predicated region
      $region21: #{transformer_decoder.17} parent=15 // pred_check
        %p139 = pneg %p55
      $region22: #{transformer_decoder.17} parent=15 // pred_check_branch
        %141 = sbr.rel (%p139) target = $region24
      $region23: #{transformer_decoder.17} parent=15 // pred_region
        %p142 = scmp.lt.s32.totalorder %s9, 1
        %s143 = scalar_select %p142, %s9, 1
        %s144 = smul.addr %s143, 8
        %s145 = scalar_lea.vmem %s1, %s144
      $region24: #{transformer_decoder.17} parent=15 // pred_fallthru
        _
      // Predicated region
      $region25: #{transformer_decoder.17} parent=15 // pred_check
        %p146 = pneg %p81
      $region26: #{transformer_decoder.17} parent=15 // pred_check_branch
        %148 = sbr.rel (%p146) target = $region28
      $region27: #{transformer_decoder.17} parent=15 // pred_region
        %p149 = scmp.lt.s32.totalorder %s9, 1
        %s150 = scalar_select %p149, %s9, 1
        %s151 = smul.addr %s150, 8
        %s152 = scalar_lea.vmem %s2, %s151
      $region28: #{transformer_decoder.17} parent=15 // pred_fallthru
        _
    $region16: #{transformer_decoder.17} parent=5 // pred_fallthru
      _
    %p153 = scmp.le.s32.totalorder 1, %s9
    %p154 = scmp.lt.s32.totalorder %s9, 3
    %p155 = pnand %p153, %p154
    %p156 = pneg %p155
    // Predicated region
    $region29: #{transformer_decoder.17} parent=5 // pred_check
      _
    $region30: #{transformer_decoder.17} parent=5 // pred_check_branch
      %158 = sbr.rel (%p155) target = $region32
    $region31: #{transformer_decoder.17} parent=5 // pred_region
      %s159 = ssub.s32 %s9, 1
      %p160 = scmp.lt.s32.totalorder %s14, 1
      %s161 = scalar_select %p160, %s14, 1
      %s162 = smul.addr %s161, 8
      %s163 = scalar_lea.vmem %s0, %s162
      %p164 = pneg %p35
      %p165 = pneg %p32
      %p166 = scmp.lt.s32.totalorder %s14, 1
      %s167 = scalar_select %p166, %s14, 1
      %s168 = smul.addr %s167, 8
      %s169 = scalar_lea.vmem %s1, %s168
      %p170 = pneg %p61
      %p171 = pneg %p58
      %p172 = scmp.lt.s32.totalorder %s14, 1
      %s173 = scalar_select %p172, %s14, 1
      %s174 = smul.addr %s173, 8
      %s175 = scalar_lea.vmem %s2, %s174
      %p176 = pneg %p87
      %p177 = pneg %p84
      %p178 = pneg %p113
      %p179 = pneg %p110
      %p180 = scmp.lt.s32.totalorder %s14, 1
      %s181 = scalar_select %p180, %s14, 1
      %s182 = smul.addr %s181, 8
      %s183 = scalar_lea.vmem %s3, %s182
      %p184 = scmp.lt.s32.totalorder %s14, 1
      %s185 = scalar_select %p184, %s14, 1
      %s186 = smul.addr %s185, 8
      %s187 = scalar_lea.vmem %s0, %s186
      %p188 = scmp.lt.s32.totalorder %s14, 1
      %s189 = scalar_select %p188, %s14, 1
      %s190 = smul.addr %s189, 8
      %s191 = scalar_lea.vmem %s1, %s190
      %p192 = scmp.lt.s32.totalorder %s14, 1
      %s193 = scalar_select %p192, %s14, 1
      %s194 = smul.addr %s193, 8
      %s195 = scalar_lea.vmem %s2, %s194
      %p196 = scmp.lt.s32.totalorder %s14, 1
      %s197 = scalar_select %p196, %s14, 1
      %s198 = smul.addr %s197, 8
      %s199 = scalar_lea.vmem %s3, %s198
      %v200 = vld [vmem:[%s187] sm:$0xff]
      %v201 = vld [vmem:[%s191] sm:$0xff]
      %v202 = vld [vmem:[%s195] sm:$0xff]
      %vm203 = vcmask 64512
      %v205 = vsel %vm203, %v200, 0
      %v208 = vsel %vm203, %v201, 0
      %210 = vmatprep.subr.mxu0 0.0
      %211 = vmatpush1.xpose.msra.mxu0 %v208
      %212 = vmatprep.subr.mxu0 0.0
      %213 = vmatpush1.xpose.msra.mxu0 0.0
      %214 = vmatprep.subr.mxu0 0.0
      %215 = vmatpush1.xpose.msra.mxu0 0.0
      %216 = vmatprep.subr.mxu0 0.0
      %217 = vmatpush1.xpose.msra.mxu0 0.0
      %218 = vmatprep.subr.mxu0 0.0
      %219 = vmatpush1.xpose.msra.mxu0 0.0
      %220 = vmatprep.subr.mxu0 0.0
      %221 = vmatpush1.xpose.msra.mxu0 0.0
      %222 = vmatprep.subr.mxu0 0.0
      %223 = vmatpush1.xpose.msra.mxu0 0.0
      %224 = vmatprep.subr.mxu0 0.0
      %225 = vmatpush1.xpose.msra.mxu0 0.0
      %226 = vmatprep.subr.mxu0 0.0
      %227 = vmatpush1.xpose.msra.mxu0 0.0
      %228 = vmatprep.subr.mxu0 0.0
      %229 = vmatpush1.xpose.msra.mxu0 0.0
      %230 = vmatprep.subr.mxu0 0.0
      %231 = vmatpush1.xpose.msra.mxu0 0.0
      %232 = vmatprep.subr.mxu0 0.0
      %233 = vmatpush1.xpose.msra.mxu0 0.0
      %234 = vmatprep.subr.mxu0 0.0
      %235 = vmatpush1.xpose.msra.mxu0 0.0
      %236 = vmatprep.subr.mxu0 0.0
      %237 = vmatpush1.xpose.msra.mxu0 0.0
      %238 = vmatprep.subr.mxu0 0.0
      %239 = vmatpush1.xpose.msra.mxu0 0.0
      %240 = vmatprep.subr.mxu0 0.0
      %241 = vmatpush1.xpose.msra.mxu0 0.0
      %242 = vmatprep.subr.mxu0 0.0
      %243 = vmatpush1.xpose.msra.mxu0 0.0
      %244 = vmatprep.subr.mxu0 0.0
      %245 = vmatpush1.xpose.msra.mxu0 0.0
      %246 = vmatprep.subr.mxu0 0.0
      %247 = vmatpush1.xpose.msra.mxu0 0.0
      %248 = vmatprep.subr.mxu0 0.0
      %249 = vmatpush1.xpose.msra.mxu0 0.0
      %250 = vmatprep.subr.mxu0 0.0
      %251 = vmatpush1.xpose.msra.mxu0 0.0
      %252 = vmatprep.subr.mxu0 0.0
      %253 = vmatpush1.xpose.msra.mxu0 0.0
      %254 = vmatprep.subr.mxu0 0.0
      %255 = vmatpush1.xpose.msra.mxu0 0.0
      %256 = vmatprep.subr.mxu0 0.0
      %257 = vmatpush1.xpose.msra.mxu0 0.0
      %258 = vmatprep.subr.mxu0 0.0
      %259 = vmatpush1.xpose.msra.mxu0 0.0
      %260 = vmatprep.subr.mxu0 0.0
      %261 = vmatpush1.xpose.msra.mxu0 0.0
      %262 = vmatprep.subr.mxu0 0.0
      %263 = vmatpush1.xpose.msra.mxu0 0.0
      %264 = vmatprep.subr.mxu0 0.0
      %265 = vmatpush1.xpose.msra.mxu0 0.0
      %266 = vmatprep.subr.mxu0 0.0
      %267 = vmatpush1.xpose.msra.mxu0 0.0
      %268 = vmatprep.subr.mxu0 0.0
      %269 = vmatpush1.xpose.msra.mxu0 0.0
      %270 = vmatprep.subr.mxu0 0.0
      %271 = vmatpush1.xpose.msra.mxu0 0.0
      %272 = vmatprep.subr.mxu0 0.0
      %273 = vmatpush1.xpose.msra.mxu0 0.0
      %274 = vmatprep.mubr.f32.mxu0 0.0
      %275 = vmatmul.mubr.f32.gmra.mrb[0].mxu0 %v205
      %v276 = vpop.f32.mrb[0].mxu0
      %v277 = vadd.f32 0.0, %v276
      %v278 = vpop.f32.mrb[0].mxu0
      %279 = vdwg.mxu0
      %v280 = vmul.f32 %v277, 0.35355338
      %v281 = vsel %vm203, %v280, -inf
      %282 = vmax.xlane.f32.xlu0 %v281
      %v283 = vpop.xlane.xlu0 %282
      %v284 = vsub.f32 %v280, %v283
      %v285 = vmul.f32 %v284, 1.442695
      %v286 = vpow.pop %v285
      %v287 = vsel %vm203, %v286, 0.0
      %288 = vadd.xlane.f32.xlu0 %v287
      %v289 = vpop.xlane.xlu0 %288
      %v290 = vrcp.pop %v289
      %v291 = vmul.f32 %v286, %v290
      %v293 = vsel %vm203, %v291, 0
      %295 = vmatprep.subr.mxu0 0.0
      %296 = vmatpush1.msra.mxu0 %v202
      %297 = vmatprep.subr.mxu0 0.0
      %298 = vmatpush1.msra.mxu0 0.0
      %299 = vmatprep.subr.mxu0 0.0
      %300 = vmatpush1.msra.mxu0 0.0
      %301 = vmatprep.subr.mxu0 0.0
      %302 = vmatpush1.msra.mxu0 0.0
      %303 = vmatprep.subr.mxu0 0.0
      %304 = vmatpush1.msra.mxu0 0.0
      %305 = vmatprep.subr.mxu0 0.0
      %306 = vmatpush1.msra.mxu0 0.0
      %307 = vmatprep.subr.mxu0 0.0
      %308 = vmatpush1.msra.mxu0 0.0
      %309 = vmatprep.subr.mxu0 0.0
      %310 = vmatpush1.msra.mxu0 0.0
      %311 = vmatprep.subr.mxu0 0.0
      %312 = vmatpush1.msra.mxu0 0.0
      %313 = vmatprep.subr.mxu0 0.0
      %314 = vmatpush1.msra.mxu0 0.0
      %315 = vmatprep.subr.mxu0 0.0
      %316 = vmatpush1.msra.mxu0 0.0
      %317 = vmatprep.subr.mxu0 0.0
      %318 = vmatpush1.msra.mxu0 0.0
      %319 = vmatprep.subr.mxu0 0.0
      %320 = vmatpush1.msra.mxu0 0.0
      %321 = vmatprep.subr.mxu0 0.0
      %322 = vmatpush1.msra.mxu0 0.0
      %323 = vmatprep.subr.mxu0 0.0
      %324 = vmatpush1.msra.mxu0 0.0
      %325 = vmatprep.subr.mxu0 0.0
      %326 = vmatpush1.msra.mxu0 0.0
      %327 = vmatprep.subr.mxu0 0.0
      %328 = vmatpush1.msra.mxu0 0.0
      %329 = vmatprep.subr.mxu0 0.0
      %330 = vmatpush1.msra.mxu0 0.0
      %331 = vmatprep.subr.mxu0 0.0
      %332 = vmatpush1.msra.mxu0 0.0
      %333 = vmatprep.subr.mxu0 0.0
      %334 = vmatpush1.msra.mxu0 0.0
      %335 = vmatprep.subr.mxu0 0.0
      %336 = vmatpush1.msra.mxu0 0.0
      %337 = vmatprep.subr.mxu0 0.0
      %338 = vmatpush1.msra.mxu0 0.0
      %339 = vmatprep.subr.mxu0 0.0
      %340 = vmatpush1.msra.mxu0 0.0
      %341 = vmatprep.subr.mxu0 0.0
      %342 = vmatpush1.msra.mxu0 0.0
      %343 = vmatprep.subr.mxu0 0.0
      %344 = vmatpush1.msra.mxu0 0.0
      %345 = vmatprep.subr.mxu0 0.0
      %346 = vmatpush1.msra.mxu0 0.0
      %347 = vmatprep.subr.mxu0 0.0
      %348 = vmatpush1.msra.mxu0 0.0
      %349 = vmatprep.subr.mxu0 0.0
      %350 = vmatpush1.msra.mxu0 0.0
      %351 = vmatprep.subr.mxu0 0.0
      %352 = vmatpush1.msra.mxu0 0.0
      %353 = vmatprep.subr.mxu0 0.0
      %354 = vmatpush1.msra.mxu0 0.0
      %355 = vmatprep.subr.mxu0 0.0
      %356 = vmatpush1.msra.mxu0 0.0
      %357 = vmatprep.subr.mxu0 0.0
      %358 = vmatpush1.msra.mxu0 0.0
      %359 = vmatprep.mubr.f32.mxu0 0.0
      %360 = vmatmul.mubr.f32.gmra.mrb[0].mxu0 %v293
      %v361 = vpop.f32.mrb[0].mxu0
      %v362 = vadd.f32 0.0, %v361
      %v363 = vpop.f32.mrb[0].mxu0
      %364 = vdwg.mxu0
      %365 = vrot.lane.b32.xlu0 %v200, 120
      %v366 = vpop.permute.xlu0 %365
      %367 = vrot.lane.b32.xlu0 %v201, 120
      %v368 = vpop.permute.xlu0 %367
      %v369 = vsel %vm203, %v366, 0
      %v371 = vsel %vm203, %v368, 0
      %373 = vmatprep.subr.mxu0 0.0
      %374 = vmatpush1.xpose.msra.mxu0 %v371
      %375 = vmatprep.subr.mxu0 0.0
      %376 = vmatpush1.xpose.msra.mxu0 0.0
      %377 = vmatprep.subr.mxu0 0.0
      %378 = vmatpush1.xpose.msra.mxu0 0.0
      %379 = vmatprep.subr.mxu0 0.0
      %380 = vmatpush1.xpose.msra.mxu0 0.0
      %381 = vmatprep.subr.mxu0 0.0
      %382 = vmatpush1.xpose.msra.mxu0 0.0
      %383 = vmatprep.subr.mxu0 0.0
      %384 = vmatpush1.xpose.msra.mxu0 0.0
      %385 = vmatprep.subr.mxu0 0.0
      %386 = vmatpush1.xpose.msra.mxu0 0.0
      %387 = vmatprep.subr.mxu0 0.0
      %388 = vmatpush1.xpose.msra.mxu0 0.0
      %389 = vmatprep.subr.mxu0 0.0
      %390 = vmatpush1.xpose.msra.mxu0 0.0
      %391 = vmatprep.subr.mxu0 0.0
      %392 = vmatpush1.xpose.msra.mxu0 0.0
      %393 = vmatprep.subr.mxu0 0.0
      %394 = vmatpush1.xpose.msra.mxu0 0.0
      %395 = vmatprep.subr.mxu0 0.0
      %396 = vmatpush1.xpose.msra.mxu0 0.0
      %397 = vmatprep.subr.mxu0 0.0
      %398 = vmatpush1.xpose.msra.mxu0 0.0
      %399 = vmatprep.subr.mxu0 0.0
      %400 = vmatpush1.xpose.msra.mxu0 0.0
      %401 = vmatprep.subr.mxu0 0.0
      %402 = vmatpush1.xpose.msra.mxu0 0.0
      %403 = vmatprep.subr.mxu0 0.0
      %404 = vmatpush1.xpose.msra.mxu0 0.0
      %405 = vmatprep.subr.mxu0 0.0
      %406 = vmatpush1.xpose.msra.mxu0 0.0
      %407 = vmatprep.subr.mxu0 0.0
      %408 = vmatpush1.xpose.msra.mxu0 0.0
      %409 = vmatprep.subr.mxu0 0.0
      %410 = vmatpush1.xpose.msra.mxu0 0.0
      %411 = vmatprep.subr.mxu0 0.0
      %412 = vmatpush1.xpose.msra.mxu0 0.0
      %413 = vmatprep.subr.mxu0 0.0
      %414 = vmatpush1.xpose.msra.mxu0 0.0
      %415 = vmatprep.subr.mxu0 0.0
      %416 = vmatpush1.xpose.msra.mxu0 0.0
      %417 = vmatprep.subr.mxu0 0.0
      %418 = vmatpush1.xpose.msra.mxu0 0.0
      %419 = vmatprep.subr.mxu0 0.0
      %420 = vmatpush1.xpose.msra.mxu0 0.0
      %421 = vmatprep.subr.mxu0 0.0
      %422 = vmatpush1.xpose.msra.mxu0 0.0
      %423 = vmatprep.subr.mxu0 0.0
      %424 = vmatpush1.xpose.msra.mxu0 0.0
      %425 = vmatprep.subr.mxu0 0.0
      %426 = vmatpush1.xpose.msra.mxu0 0.0
      %427 = vmatprep.subr.mxu0 0.0
      %428 = vmatpush1.xpose.msra.mxu0 0.0
      %429 = vmatprep.subr.mxu0 0.0
      %430 = vmatpush1.xpose.msra.mxu0 0.0
      %431 = vmatprep.subr.mxu0 0.0
      %432 = vmatpush1.xpose.msra.mxu0 0.0
      %433 = vmatprep.subr.mxu0 0.0
      %434 = vmatpush1.xpose.msra.mxu0 0.0
      %435 = vmatprep.subr.mxu0 0.0
      %436 = vmatpush1.xpose.msra.mxu0 0.0
      %437 = vmatprep.mubr.f32.mxu0 0.0
      %438 = vmatmul.mubr.f32.gmra.mrb[0].mxu0 %v369
      %v439 = vpop.f32.mrb[0].mxu0
      %v440 = vadd.f32 0.0, %v439
      %v441 = vpop.f32.mrb[0].mxu0
      %442 = vdwg.mxu0
      %v443 = vmul.f32 %v440, 0.35355338
      %v444 = vsel %vm203, %v443, -inf
      %445 = vmax.xlane.f32.xlu0 %v444
      %v446 = vpop.xlane.xlu0 %445
      %v447 = vsub.f32 %v443, %v446
      %v448 = vmul.f32 %v447, 1.442695
      %v449 = vpow.pop %v448
      %v450 = vsel %vm203, %v449, 0.0
      %451 = vadd.xlane.f32.xlu0 %v450
      %v452 = vpop.xlane.xlu0 %451
      %v453 = vrcp.pop %v452
      %v454 = vmul.f32 %v449, %v453
      %456 = vrot.lane.b32.xlu0 %v202, 120
      %v457 = vpop.permute.xlu0 %456
      %v460 = vsel %vm203, %v454, 0
      %462 = vmatprep.subr.mxu0 0.0
      %463 = vmatpush1.msra.mxu0 %v457
      %464 = vmatprep.subr.mxu0 0.0
      %465 = vmatpush1.msra.mxu0 0.0
      %466 = vmatprep.subr.mxu0 0.0
      %467 = vmatpush1.msra.mxu0 0.0
      %468 = vmatprep.subr.mxu0 0.0
      %469 = vmatpush1.msra.mxu0 0.0
      %470 = vmatprep.subr.mxu0 0.0
      %471 = vmatpush1.msra.mxu0 0.0
      %472 = vmatprep.subr.mxu0 0.0
      %473 = vmatpush1.msra.mxu0 0.0
      %474 = vmatprep.subr.mxu0 0.0
      %475 = vmatpush1.msra.mxu0 0.0
      %476 = vmatprep.subr.mxu0 0.0
      %477 = vmatpush1.msra.mxu0 0.0
      %478 = vmatprep.subr.mxu0 0.0
      %479 = vmatpush1.msra.mxu0 0.0
      %480 = vmatprep.subr.mxu0 0.0
      %481 = vmatpush1.msra.mxu0 0.0
      %482 = vmatprep.subr.mxu0 0.0
      %483 = vmatpush1.msra.mxu0 0.0
      %484 = vmatprep.subr.mxu0 0.0
      %485 = vmatpush1.msra.mxu0 0.0
      %486 = vmatprep.subr.mxu0 0.0
      %487 = vmatpush1.msra.mxu0 0.0
      %488 = vmatprep.subr.mxu0 0.0
      %489 = vmatpush1.msra.mxu0 0.0
      %490 = vmatprep.subr.mxu0 0.0
      %491 = vmatpush1.msra.mxu0 0.0
      %492 = vmatprep.subr.mxu0 0.0
      %493 = vmatpush1.msra.mxu0 0.0
      %494 = vmatprep.subr.mxu0 0.0
      %495 = vmatpush1.msra.mxu0 0.0
      %496 = vmatprep.subr.mxu0 0.0
      %497 = vmatpush1.msra.mxu0 0.0
      %498 = vmatprep.subr.mxu0 0.0
      %499 = vmatpush1.msra.mxu0 0.0
      %500 = vmatprep.subr.mxu0 0.0
      %501 = vmatpush1.msra.mxu0 0.0
      %502 = vmatprep.subr.mxu0 0.0
      %503 = vmatpush1.msra.mxu0 0.0
      %504 = vmatprep.subr.mxu0 0.0
      %505 = vmatpush1.msra.mxu0 0.0
      %506 = vmatprep.subr.mxu0 0.0
      %507 = vmatpush1.msra.mxu0 0.0
      %508 = vmatprep.subr.mxu0 0.0
      %509 = vmatpush1.msra.mxu0 0.0
      %510 = vmatprep.subr.mxu0 0.0
      %511 = vmatpush1.msra.mxu0 0.0
      %512 = vmatprep.subr.mxu0 0.0
      %513 = vmatpush1.msra.mxu0 0.0
      %514 = vmatprep.subr.mxu0 0.0
      %515 = vmatpush1.msra.mxu0 0.0
      %516 = vmatprep.subr.mxu0 0.0
      %517 = vmatpush1.msra.mxu0 0.0
      %518 = vmatprep.subr.mxu0 0.0
      %519 = vmatpush1.msra.mxu0 0.0
      %520 = vmatprep.subr.mxu0 0.0
      %521 = vmatpush1.msra.mxu0 0.0
      %522 = vmatprep.subr.mxu0 0.0
      %523 = vmatpush1.msra.mxu0 0.0
      %524 = vmatprep.subr.mxu0 0.0
      %525 = vmatpush1.msra.mxu0 0.0
      %526 = vmatprep.mubr.f32.mxu0 0.0
      %527 = vmatmul.mubr.f32.gmra.mrb[0].mxu0 %v460
      %v528 = vpop.f32.mrb[0].mxu0
      %v529 = vadd.f32 0.0, %v528
      %v530 = vpop.f32.mrb[0].mxu0
      %531 = vdwg.mxu0
      %532 = vrot.lane.b32.xlu0 %v200, 112
      %v533 = vpop.permute.xlu0 %532
      %534 = vrot.lane.b32.xlu0 %v201, 112
      %v535 = vpop.permute.xlu0 %534
      %v536 = vsel %vm203, %v533, 0
      %v538 = vsel %vm203, %v535, 0
      %540 = vmatprep.subr.mxu0 0.0
      %541 = vmatpush1.xpose.msra.mxu0 %v538
      %542 = vmatprep.subr.mxu0 0.0
      %543 = vmatpush1.xpose.msra.mxu0 0.0
      %544 = vmatprep.subr.mxu0 0.0
      %545 = vmatpush1.xpose.msra.mxu0 0.0
      %546 = vmatprep.subr.mxu0 0.0
      %547 = vmatpush1.xpose.msra.mxu0 0.0
      %548 = vmatprep.subr.mxu0 0.0
      %549 = vmatpush1.xpose.msra.mxu0 0.0
      %550 = vmatprep.subr.mxu0 0.0
      %551 = vmatpush1.xpose.msra.mxu0 0.0
      %552 = vmatprep.subr.mxu0 0.0
      %553 = vmatpush1.xpose.msra.mxu0 0.0
      %554 = vmatprep.subr.mxu0 0.0
      %555 = vmatpush1.xpose.msra.mxu0 0.0
      %556 = vmatprep.subr.mxu0 0.0
      %557 = vmatpush1.xpose.msra.mxu0 0.0
      %558 = vmatprep.subr.mxu0 0.0
      %559 = vmatpush1.xpose.msra.mxu0 0.0
      %560 = vmatprep.subr.mxu0 0.0
      %561 = vmatpush1.xpose.msra.mxu0 0.0
      %562 = vmatprep.subr.mxu0 0.0
      %563 = vmatpush1.xpose.msra.mxu0 0.0
      %564 = vmatprep.subr.mxu0 0.0
      %565 = vmatpush1.xpose.msra.mxu0 0.0
      %566 = vmatprep.subr.mxu0 0.0
      %567 = vmatpush1.xpose.msra.mxu0 0.0
      %568 = vmatprep.subr.mxu0 0.0
      %569 = vmatpush1.xpose.msra.mxu0 0.0
      %570 = vmatprep.subr.mxu0 0.0
      %571 = vmatpush1.xpose.msra.mxu0 0.0
      %572 = vmatprep.subr.mxu0 0.0
      %573 = vmatpush1.xpose.msra.mxu0 0.0
      %574 = vmatprep.subr.mxu0 0.0
      %575 = vmatpush1.xpose.msra.mxu0 0.0
      %576 = vmatprep.subr.mxu0 0.0
      %577 = vmatpush1.xpose.msra.mxu0 0.0
      %578 = vmatprep.subr.mxu0 0.0
      %579 = vmatpush1.xpose.msra.mxu0 0.0
      %580 = vmatprep.subr.mxu0 0.0
      %581 = vmatpush1.xpose.msra.mxu0 0.0
      %582 = vmatprep.subr.mxu0 0.0
      %583 = vmatpush1.xpose.msra.mxu0 0.0
      %584 = vmatprep.subr.mxu0 0.0
      %585 = vmatpush1.xpose.msra.mxu0 0.0
      %586 = vmatprep.subr.mxu0 0.0
      %587 = vmatpush1.xpose.msra.mxu0 0.0
      %588 = vmatprep.subr.mxu0 0.0
      %589 = vmatpush1.xpose.msra.mxu0 0.0
      %590 = vmatprep.subr.mxu0 0.0
      %591 = vmatpush1.xpose.msra.mxu0 0.0
      %592 = vmatprep.subr.mxu0 0.0
      %593 = vmatpush1.xpose.msra.mxu0 0.0
      %594 = vmatprep.subr.mxu0 0.0
      %595 = vmatpush1.xpose.msra.mxu0 0.0
      %596 = vmatprep.subr.mxu0 0.0
      %597 = vmatpush1.xpose.msra.mxu0 0.0
      %598 = vmatprep.subr.mxu0 0.0
      %599 = vmatpush1.xpose.msra.mxu0 0.0
      %600 = vmatprep.subr.mxu0 0.0
      %601 = vmatpush1.xpose.msra.mxu0 0.0
      %602 = vmatprep.subr.mxu0 0.0
      %603 = vmatpush1.xpose.msra.mxu0 0.0
      %604 = vmatprep.mubr.f32.mxu0 0.0
      %605 = vmatmul.mubr.f32.gmra.mrb[0].mxu0 %v536
      %v606 = vpop.f32.mrb[0].mxu0
      %v607 = vadd.f32 0.0, %v606
      %v608 = vpop.f32.mrb[0].mxu0
      %609 = vdwg.mxu0
      %v610 = vmul.f32 %v607, 0.35355338
      %v611 = vsel %vm203, %v610, -inf
      %612 = vmax.xlane.f32.xlu0 %v611
      %v613 = vpop.xlane.xlu0 %612
      %v614 = vsub.f32 %v610, %v613
      %v615 = vmul.f32 %v614, 1.442695
      %v616 = vpow.pop %v615
      %v617 = vsel %vm203, %v616, 0.0
      %618 = vadd.xlane.f32.xlu0 %v617
      %v619 = vpop.xlane.xlu0 %618
      %v620 = vrcp.pop %v619
      %v621 = vmul.f32 %v616, %v620
      %622 = vrot.lane.b32.xlu0 %v202, 112
      %v623 = vpop.permute.xlu0 %622
      %v626 = vsel %vm203, %v621, 0
      %628 = vmatprep.subr.mxu0 0.0
      %629 = vmatpush1.msra.mxu0 %v623
      %630 = vmatprep.subr.mxu0 0.0
      %631 = vmatpush1.msra.mxu0 0.0
      %632 = vmatprep.subr.mxu0 0.0
      %633 = vmatpush1.msra.mxu0 0.0
      %634 = vmatprep.subr.mxu0 0.0
      %635 = vmatpush1.msra.mxu0 0.0
      %636 = vmatprep.subr.mxu0 0.0
      %637 = vmatpush1.msra.mxu0 0.0
      %638 = vmatprep.subr.mxu0 0.0
      %639 = vmatpush1.msra.mxu0 0.0
      %640 = vmatprep.subr.mxu0 0.0
      %641 = vmatpush1.msra.mxu0 0.0
      %642 = vmatprep.subr.mxu0 0.0
      %643 = vmatpush1.msra.mxu0 0.0
      %644 = vmatprep.subr.mxu0 0.0
      %645 = vmatpush1.msra.mxu0 0.0
      %646 = vmatprep.subr.mxu0 0.0
      %647 = vmatpush1.msra.mxu0 0.0
      %648 = vmatprep.subr.mxu0 0.0
      %649 = vmatpush1.msra.mxu0 0.0
      %650 = vmatprep.subr.mxu0 0.0
      %651 = vmatpush1.msra.mxu0 0.0
      %652 = vmatprep.subr.mxu0 0.0
      %653 = vmatpush1.msra.mxu0 0.0
      %654 = vmatprep.subr.mxu0 0.0
      %655 = vmatpush1.msra.mxu0 0.0
      %656 = vmatprep.subr.mxu0 0.0
      %657 = vmatpush1.msra.mxu0 0.0
      %658 = vmatprep.subr.mxu0 0.0
      %659 = vmatpush1.msra.mxu0 0.0
      %660 = vmatprep.subr.mxu0 0.0
      %661 = vmatpush1.msra.mxu0 0.0
      %662 = vmatprep.subr.mxu0 0.0
      %663 = vmatpush1.msra.mxu0 0.0
      %664 = vmatprep.subr.mxu0 0.0
      %665 = vmatpush1.msra.mxu0 0.0
      %666 = vmatprep.subr.mxu0 0.0
      %667 = vmatpush1.msra.mxu0 0.0
      %668 = vmatprep.subr.mxu0 0.0
      %669 = vmatpush1.msra.mxu0 0.0
      %670 = vmatprep.subr.mxu0 0.0
      %671 = vmatpush1.msra.mxu0 0.0
      %672 = vmatprep.subr.mxu0 0.0
      %673 = vmatpush1.msra.mxu0 0.0
      %674 = vmatprep.subr.mxu0 0.0
      %675 = vmatpush1.msra.mxu0 0.0
      %676 = vmatprep.subr.mxu0 0.0
      %677 = vmatpush1.msra.mxu0 0.0
      %678 = vmatprep.subr.mxu0 0.0
      %679 = vmatpush1.msra.mxu0 0.0
      %680 = vmatprep.subr.mxu0 0.0
      %681 = vmatpush1.msra.mxu0 0.0
      %682 = vmatprep.subr.mxu0 0.0
      %683 = vmatpush1.msra.mxu0 0.0
      %684 = vmatprep.subr.mxu0 0.0
      %685 = vmatpush1.msra.mxu0 0.0
      %686 = vmatprep.subr.mxu0 0.0
      %687 = vmatpush1.msra.mxu0 0.0
      %688 = vmatprep.subr.mxu0 0.0
      %689 = vmatpush1.msra.mxu0 0.0
      %690 = vmatprep.subr.mxu0 0.0
      %691 = vmatpush1.msra.mxu0 0.0
      %692 = vmatprep.mubr.f32.mxu0 0.0
      %693 = vmatmul.mubr.f32.gmra.mrb[0].mxu0 %v626
      %v694 = vpop.f32.mrb[0].mxu0
      %v695 = vadd.f32 0.0, %v694
      %v696 = vpop.f32.mrb[0].mxu0
      %697 = vdwg.mxu0
      %698 = vrot.lane.b32.xlu0 %v200, 104
      %v699 = vpop.permute.xlu0 %698
      %700 = vrot.lane.b32.xlu0 %v201, 104
      %v701 = vpop.permute.xlu0 %700
      %v702 = vsel %vm203, %v699, 0
      %v704 = vsel %vm203, %v701, 0
      %706 = vmatprep.subr.mxu0 0.0
      %707 = vmatpush1.xpose.msra.mxu0 %v704
      %708 = vmatprep.subr.mxu0 0.0
      %709 = vmatpush1.xpose.msra.mxu0 0.0
      %710 = vmatprep.subr.mxu0 0.0
      %711 = vmatpush1.xpose.msra.mxu0 0.0
      %712 = vmatprep.subr.mxu0 0.0
      %713 = vmatpush1.xpose.msra.mxu0 0.0
      %714 = vmatprep.subr.mxu0 0.0
      %715 = vmatpush1.xpose.msra.mxu0 0.0
      %716 = vmatprep.subr.mxu0 0.0
      %717 = vmatpush1.xpose.msra.mxu0 0.0
      %718 = vmatprep.subr.mxu0 0.0
      %719 = vmatpush1.xpose.msra.mxu0 0.0
      %720 = vmatprep.subr.mxu0 0.0
      %721 = vmatpush1.xpose.msra.mxu0 0.0
      %722 = vmatprep.subr.mxu0 0.0
      %723 = vmatpush1.xpose.msra.mxu0 0.0
      %724 = vmatprep.subr.mxu0 0.0
      %725 = vmatpush1.xpose.msra.mxu0 0.0
      %726 = vmatprep.subr.mxu0 0.0
      %727 = vmatpush1.xpose.msra.mxu0 0.0
      %728 = vmatprep.subr.mxu0 0.0
      %729 = vmatpush1.xpose.msra.mxu0 0.0
      %730 = vmatprep.subr.mxu0 0.0
      %731 = vmatpush1.xpose.msra.mxu0 0.0
      %732 = vmatprep.subr.mxu0 0.0
      %733 = vmatpush1.xpose.msra.mxu0 0.0
      %734 = vmatprep.subr.mxu0 0.0
      %735 = vmatpush1.xpose.msra.mxu0 0.0
      %736 = vmatprep.subr.mxu0 0.0
      %737 = vmatpush1.xpose.msra.mxu0 0.0
      %738 = vmatprep.subr.mxu0 0.0
      %739 = vmatpush1.xpose.msra.mxu0 0.0
      %740 = vmatprep.subr.mxu0 0.0
      %741 = vmatpush1.xpose.msra.mxu0 0.0
      %742 = vmatprep.subr.mxu0 0.0
      %743 = vmatpush1.xpose.msra.mxu0 0.0
      %744 = vmatprep.subr.mxu0 0.0
      %745 = vmatpush1.xpose.msra.mxu0 0.0
      %746 = vmatprep.subr.mxu0 0.0
      %747 = vmatpush1.xpose.msra.mxu0 0.0
      %748 = vmatprep.subr.mxu0 0.0
      %749 = vmatpush1.xpose.msra.mxu0 0.0
      %750 = vmatprep.subr.mxu0 0.0
      %751 = vmatpush1.xpose.msra.mxu0 0.0
      %752 = vmatprep.subr.mxu0 0.0
      %753 = vmatpush1.xpose.msra.mxu0 0.0
      %754 = vmatprep.subr.mxu0 0.0
      %755 = vmatpush1.xpose.msra.mxu0 0.0
      %756 = vmatprep.subr.mxu0 0.0
      %757 = vmatpush1.xpose.msra.mxu0 0.0
      %758 = vmatprep.subr.mxu0 0.0
      %759 = vmatpush1.xpose.msra.mxu0 0.0
      %760 = vmatprep.subr.mxu0 0.0
      %761 = vmatpush1.xpose.msra.mxu0 0.0
      %762 = vmatprep.subr.mxu0 0.0
      %763 = vmatpush1.xpose.msra.mxu0 0.0
      %764 = vmatprep.subr.mxu0 0.0
      %765 = vmatpush1.xpose.msra.mxu0 0.0
      %766 = vmatprep.subr.mxu0 0.0
      %767 = vmatpush1.xpose.msra.mxu0 0.0
      %768 = vmatprep.subr.mxu0 0.0
      %769 = vmatpush1.xpose.msra.mxu0 0.0
      %770 = vmatprep.mubr.f32.mxu0 0.0
      %771 = vmatmul.mubr.f32.gmra.mrb[0].mxu0 %v702
      %v772 = vpop.f32.mrb[0].mxu0
      %v773 = vadd.f32 0.0, %v772
      %v774 = vpop.f32.mrb[0].mxu0
      %775 = vdwg.mxu0
      %v776 = vmul.f32 %v773, 0.35355338
      %v777 = vsel %vm203, %v776, -inf
      %778 = vmax.xlane.f32.xlu0 %v777
      %v779 = vpop.xlane.xlu0 %778
      %v780 = vsub.f32 %v776, %v779
      %v781 = vmul.f32 %v780, 1.442695
      %v782 = vpow.pop %v781
      %v783 = vsel %vm203, %v782, 0.0
      %784 = vadd.xlane.f32.xlu0 %v783
      %v785 = vpop.xlane.xlu0 %784
      %v786 = vrcp.pop %v785
      %v787 = vmul.f32 %v782, %v786
      %788 = vrot.lane.b32.xlu0 %v202, 104
      %v789 = vpop.permute.xlu0 %788
      %v792 = vsel %vm203, %v787, 0
      %794 = vmatprep.subr.mxu0 0.0
      %795 = vmatpush1.msra.mxu0 %v789
      %796 = vmatprep.subr.mxu0 0.0
      %797 = vmatpush1.msra.mxu0 0.0
      %798 = vmatprep.subr.mxu0 0.0
      %799 = vmatpush1.msra.mxu0 0.0
      %800 = vmatprep.subr.mxu0 0.0
      %801 = vmatpush1.msra.mxu0 0.0
      %802 = vmatprep.subr.mxu0 0.0
      %803 = vmatpush1.msra.mxu0 0.0
      %804 = vmatprep.subr.mxu0 0.0
      %805 = vmatpush1.msra.mxu0 0.0
      %806 = vmatprep.subr.mxu0 0.0
      %807 = vmatpush1.msra.mxu0 0.0
      %808 = vmatprep.subr.mxu0 0.0
      %809 = vmatpush1.msra.mxu0 0.0
      %810 = vmatprep.subr.mxu0 0.0
      %811 = vmatpush1.msra.mxu0 0.0
      %812 = vmatprep.subr.mxu0 0.0
      %813 = vmatpush1.msra.mxu0 0.0
      %814 = vmatprep.subr.mxu0 0.0
      %815 = vmatpush1.msra.mxu0 0.0
      %816 = vmatprep.subr.mxu0 0.0
      %817 = vmatpush1.msra.mxu0 0.0
      %818 = vmatprep.subr.mxu0 0.0
      %819 = vmatpush1.msra.mxu0 0.0
      %820 = vmatprep.subr.mxu0 0.0
      %821 = vmatpush1.msra.mxu0 0.0
      %822 = vmatprep.subr.mxu0 0.0
      %823 = vmatpush1.msra.mxu0 0.0
      %824 = vmatprep.subr.mxu0 0.0
      %825 = vmatpush1.msra.mxu0 0.0
      %826 = vmatprep.subr.mxu0 0.0
      %827 = vmatpush1.msra.mxu0 0.0
      %828 = vmatprep.subr.mxu0 0.0
      %829 = vmatpush1.msra.mxu0 0.0
      %830 = vmatprep.subr.mxu0 0.0
      %831 = vmatpush1.msra.mxu0 0.0
      %832 = vmatprep.subr.mxu0 0.0
      %833 = vmatpush1.msra.mxu0 0.0
      %834 = vmatprep.subr.mxu0 0.0
      %835 = vmatpush1.msra.mxu0 0.0
      %836 = vmatprep.subr.mxu0 0.0
      %837 = vmatpush1.msra.mxu0 0.0
      %838 = vmatprep.subr.mxu0 0.0
      %839 = vmatpush1.msra.mxu0 0.0
      %840 = vmatprep.subr.mxu0 0.0
      %841 = vmatpush1.msra.mxu0 0.0
      %842 = vmatprep.subr.mxu0 0.0
      %843 = vmatpush1.msra.mxu0 0.0
      %844 = vmatprep.subr.mxu0 0.0
      %845 = vmatpush1.msra.mxu0 0.0
      %846 = vmatprep.subr.mxu0 0.0
      %847 = vmatpush1.msra.mxu0 0.0
      %848 = vmatprep.subr.mxu0 0.0
      %849 = vmatpush1.msra.mxu0 0.0
      %850 = vmatprep.subr.mxu0 0.0
      %851 = vmatpush1.msra.mxu0 0.0
      %852 = vmatprep.subr.mxu0 0.0
      %853 = vmatpush1.msra.mxu0 0.0
      %854 = vmatprep.subr.mxu0 0.0
      %855 = vmatpush1.msra.mxu0 0.0
      %856 = vmatprep.subr.mxu0 0.0
      %857 = vmatpush1.msra.mxu0 0.0
      %858 = vmatprep.mubr.f32.mxu0 0.0
      %859 = vmatmul.mubr.f32.gmra.mrb[0].mxu0 %v792
      %v860 = vpop.f32.mrb[0].mxu0
      %v861 = vadd.f32 0.0, %v860
      %v862 = vpop.f32.mrb[0].mxu0
      %863 = vdwg.mxu0
      %865 = vrot.lane.b32.xlu0 %v529, 8
      %v866 = vpop.permute.xlu0 %865
      %869 = vrot.lane.b32.xlu0 %v695, 16
      %v870 = vpop.permute.xlu0 %869
      %873 = vrot.lane.b32.xlu0 %v861, 24
      %v874 = vpop.permute.xlu0 %873
      %v876 = vsel %vm203, %v362, %v866
      %vm877 = vcmask 130048
      %v878 = vsel %vm877, %v876, %v870
      %vm879 = vcmask 195584
      %v880 = vsel %vm879, %v878, %v874
      %vm881 = vcmask 261120
      %882 = vst.msk [vmem:[%s199] sm:$0xff] %vm881, %v880
      %p883 = scmp.lt.s32.totalorder %s14, 1
      %s884 = scalar_select %p883, %s14, 1
      %s885 = smul.addr %s884, 8
      %s886 = scalar_lea.vmem %s3, %s885
      // Predicated region
      $region33: #{transformer_decoder.17} parent=31 // pred_check
        %p887 = pneg %p110
      $region34: #{transformer_decoder.17} parent=31 // pred_check_branch
        %889 = sbr.rel (%p887) target = $region36
      $region35: #{transformer_decoder.17} parent=31 // pred_region
        _
      $region36: #{transformer_decoder.17} parent=31 // pred_fallthru
        _
    $region32: #{transformer_decoder.17} parent=5 // pred_fallthru
      _
    %p890 = scmp.le.s32.totalorder 2, %s9
    // Predicated region
    $region37: #{transformer_decoder.17} parent=5 // pred_check
      %p891 = pneg %p890
    $region38: #{transformer_decoder.17} parent=5 // pred_check_branch
      %893 = sbr.rel (%p891) target = $region40
    $region39: #{transformer_decoder.17} parent=5 // pred_region
      %s894 = ssub.s32 %s9, 2
      // Predicated region
      $region41: #{transformer_decoder.17} parent=39 // pred_check
        %p895 = pneg %p116
      $region42: #{transformer_decoder.17} parent=39 // pred_check_branch
        %897 = sbr.rel (%p895) target = $region44
      $region43: #{transformer_decoder.17} parent=39 // pred_region
        %p898 = scmp.lt.s32.totalorder %s15, 1
        %s899 = scalar_select %p898, %s15, 1
        %s900 = smul.addr %s899, 8
        %s901 = scalar_lea.vmem %s3, %s900
      $region44: #{transformer_decoder.17} parent=39 // pred_fallthru
        _
    $region40: #{transformer_decoder.17} parent=5 // pred_fallthru
      _
  $region6: #{transformer_decoder.17} parent=0 // loop_footer
    %s13 = sadd.s32 1, %s9
  $region7: #{transformer_decoder.17} parent=0 // loop_footer_branch
    %8 = sbr.rel target = $region3
  $region8: #{transformer_decoder.17} parent=0 // loop_exit
    _

// kernel: transformer_decoder.19
$region0: #{transformer_decoder.19}
  #allocation0 [shape = 'u32[]', space=smem, size = 0x4, offset = 0x4, fixed_abs, tag = 'smem constant byte address 0x4 - core index']
  #allocation1 [shape = 'u32[144,128]{1,0:T(1,128)}', space=vmem, size = 0x12000, scoped, tag = 'internal scratch']
  %s0 = inlined_call_operand.vmem [shape: f32[16,32], index: 0, kind: input, shape index: {}]
  %s1 = inlined_call_operand.vmem [shape: f32[32,32], index: 1, kind: input, shape index: {}]
  %s2 = inlined_call_operand.vmem [shape: f32[1,32], index: 2, kind: input, shape index: {}]
  %s3 = inlined_call_operand.vmem [shape: f32[16,32], index: 3, kind: output, shape index: {}]
  %s4 = sld [smem:[#allocation0]]
  $region22: #{transformer_decoder.19} parent=0
    _
  %s6 = ssub.s32 1, %s4
  %s7 = scalar_select 0, %s6, %s4
  // Predicated region
  $region2: #{transformer_decoder.19} parent=0 // pred_check
    _
  $region3: #{transformer_decoder.19} parent=0 // pred_check_branch
    %9 = sbr.rel (0) target = $region5
  $region4: #{transformer_decoder.19} parent=0 // pred_region
    _
  $region5: #{transformer_decoder.19} parent=0 // pred_fallthru
    _
  // Predicated region
  $region6: #{transformer_decoder.19} parent=0 // pred_check
    _
  $region7: #{transformer_decoder.19} parent=0 // pred_check_branch
    %11 = sbr.rel (0) target = $region9
  $region8: #{transformer_decoder.19} parent=0 // pred_region
    _
  $region9: #{transformer_decoder.19} parent=0 // pred_fallthru
    _
  // Predicated region
  $region10: #{transformer_decoder.19} parent=0 // pred_check
    _
  $region11: #{transformer_decoder.19} parent=0 // pred_check_branch
    %13 = sbr.rel (0) target = $region13
  $region12: #{transformer_decoder.19} parent=0 // pred_region
    _
  $region13: #{transformer_decoder.19} parent=0 // pred_fallthru
    _
  %v14 = vld [vmem:[%s0] sm:$0xff]
  %v15 = vld [vmem:[%s0 + $0x8] sm:$0xff]
  %v16 = vld [vmem:[%s1] sm:$0xff]
  %v17 = vld [vmem:[%s1 + $0x8] sm:$0xff]
  %v18 = vld [vmem:[%s1 + $0x10] sm:$0xff]
  %v19 = vld [vmem:[%s1 + $0x18] sm:$0xff]
  %v20 = vld [vmem:[%s2] sm:$0x1]
  %v22 = vlaneseq
  %v23 = vshrl.u32 %v22, 7
  %v24 = vsub.s32 0, %v23
  %v25 = vrot.slane %v20, %v24
  %vm27 = vcmask 261120
  %v29 = vsel %vm27, %v14, 0
  %v32 = vsel %vm27, %v15, 0
  %34 = vmatprep.subr.mxu0 0.0
  %35 = vmatpush1.msra.mxu0 %v16
  %36 = vmatprep.subr.mxu0 0.0
  %37 = vmatpush1.msra.mxu0 %v17
  %38 = vmatprep.subr.mxu0 0.0
  %39 = vmatpush1.msra.mxu0 %v18
  %40 = vmatprep.subr.mxu0 0.0
  %41 = vmatpush1.msra.mxu0 %v19
  %42 = vmatprep.subr.mxu0 0.0
  %43 = vmatpush1.msra.mxu0 0.0
  %44 = vmatprep.subr.mxu0 0.0
  %45 = vmatpush1.msra.mxu0 0.0
  %46 = vmatprep.subr.mxu0 0.0
  %47 = vmatpush1.msra.mxu0 0.0
  %48 = vmatprep.subr.mxu0 0.0
  %49 = vmatpush1.msra.mxu0 0.0
  %50 = vmatprep.subr.mxu0 0.0
  %51 = vmatpush1.msra.mxu0 0.0
  %52 = vmatprep.subr.mxu0 0.0
  %53 = vmatpush1.msra.mxu0 0.0
  %54 = vmatprep.subr.mxu0 0.0
  %55 = vmatpush1.msra.mxu0 0.0
  %56 = vmatprep.subr.mxu0 0.0
  %57 = vmatpush1.msra.mxu0 0.0
  %58 = vmatprep.subr.mxu0 0.0
  %59 = vmatpush1.msra.mxu0 0.0
  %60 = vmatprep.subr.mxu0 0.0
  %61 = vmatpush1.msra.mxu0 0.0
  %62 = vmatprep.subr.mxu0 0.0
  %63 = vmatpush1.msra.mxu0 0.0
  %64 = vmatprep.subr.mxu0 0.0
  %65 = vmatpush1.msra.mxu0 0.0
  %66 = vmatprep.subr.mxu0 0.0
  %67 = vmatpush1.msra.mxu0 0.0
  %68 = vmatprep.subr.mxu0 0.0
  %69 = vmatpush1.msra.mxu0 0.0
  %70 = vmatprep.subr.mxu0 0.0
  %71 = vmatpush1.msra.mxu0 0.0
  %72 = vmatprep.subr.mxu0 0.0
  %73 = vmatpush1.msra.mxu0 0.0
  %74 = vmatprep.subr.mxu0 0.0
  %75 = vmatpush1.msra.mxu0 0.0
  %76 = vmatprep.subr.mxu0 0.0
  %77 = vmatpush1.msra.mxu0 0.0
  %78 = vmatprep.subr.mxu0 0.0
  %79 = vmatpush1.msra.mxu0 0.0
  %80 = vmatprep.subr.mxu0 0.0
  %81 = vmatpush1.msra.mxu0 0.0
  %82 = vmatprep.subr.mxu0 0.0
  %83 = vmatpush1.msra.mxu0 0.0
  %84 = vmatprep.subr.mxu0 0.0
  %85 = vmatpush1.msra.mxu0 0.0
  %86 = vmatprep.subr.mxu0 0.0
  %87 = vmatpush1.msra.mxu0 0.0
  %88 = vmatprep.subr.mxu0 0.0
  %89 = vmatpush1.msra.mxu0 0.0
  %90 = vmatprep.subr.mxu0 0.0
  %91 = vmatpush1.msra.mxu0 0.0
  %92 = vmatprep.subr.mxu0 0.0
  %93 = vmatpush1.msra.mxu0 0.0
  %94 = vmatprep.subr.mxu0 0.0
  %95 = vmatpush1.msra.mxu0 0.0
  %96 = vmatprep.subr.mxu0 0.0
  %97 = vmatpush1.msra.mxu0 0.0
  %98 = vmatprep.mubr.f32.mxu0 0.0
  %99 = vmatmul.mubr.f32.gmra.mrb[0].mxu0 %v29
  %v100 = vpop.f32.mrb[0].mxu0
  %v101 = vadd.f32 %v25, %v100
  %v102 = vpop.f32.mrb[0].mxu0
  %103 = vmatprep.mubr.f32.mxu0 0.0
  %104 = vmatmul.mubr.f32.gmra.mrb[0].mxu0 %v32
  %v105 = vpop.f32.mrb[0].mxu0
  %v106 = vadd.f32 %v25, %v105
  %v107 = vpop.f32.mrb[0].mxu0
  %108 = vdwg.mxu0
  %109 = vst.msk [vmem:[%s3] sm:$0xff] %vm27, %v101
  %110 = vst.msk [vmem:[%s3 + $0x8] sm:$0xff] %vm27, %v106
  // Predicated region
  $region14: #{transformer_decoder.19} parent=0 // pred_check
    _
  $region15: #{transformer_decoder.19} parent=0 // pred_check_branch
    %112 = sbr.rel (0) target = $region17
  $region16: #{transformer_decoder.19} parent=0 // pred_region
    _
  $region17: #{transformer_decoder.19} parent=0 // pred_fallthru
    _
  // Predicated region
  $region18: #{transformer_decoder.19} parent=0 // pred_check
    _
  $region19: #{transformer_decoder.19} parent=0 // pred_check_branch
    %114 = sbr.rel (0) target = $region21
  $region20: #{transformer_decoder.19} parent=0 // pred_region
    _
  $region21: #{transformer_decoder.19} parent=0 // pred_fallthru
    _

// kernel: transformer_decoder.18
$region0: #{transformer_decoder.18}
  #allocation0 [shape = 'u32[]', space=smem, size = 0x4, offset = 0x4, fixed_abs, tag = 'smem constant byte address 0x4 - core index']
  #allocation1 [shape = 'u32[144,128]{1,0:T(1,128)}', space=vmem, size = 0x12000, scoped, tag = 'internal scratch']
  %s0 = inlined_call_operand.vmem [shape: f32[16,32], index: 0, kind: input, shape index: {}]
  %s1 = inlined_call_operand.vmem [shape: f32[32,32], index: 1, kind: input, shape index: {}]
  %s2 = inlined_call_operand.vmem [shape: f32[1,32], index: 2, kind: input, shape index: {}]
  %s3 = inlined_call_operand.vmem [shape: f32[16,32], index: 3, kind: input, shape index: {}]
  %s4 = inlined_call_operand.vmem [shape: f32[1,32], index: 4, kind: input, shape index: {}]
  %s5 = inlined_call_operand.vmem [shape: f32[1,32], index: 5, kind: input, shape index: {}]
  %s6 = inlined_call_operand.vmem [shape: f32[16,32], index: 6, kind: output, shape index: {}]
  %s7 = sld [smem:[#allocation0]]
  $region34: #{transformer_decoder.18} parent=0
    _
  %s9 = ssub.s32 1, %s7
  %s10 = scalar_select 0, %s9, %s7
  // Predicated region
  $region2: #{transformer_decoder.18} parent=0 // pred_check
    _
  $region3: #{transformer_decoder.18} parent=0 // pred_check_branch
    %12 = sbr.rel (0) target = $region5
  $region4: #{transformer_decoder.18} parent=0 // pred_region
    _
  $region5: #{transformer_decoder.18} parent=0 // pred_fallthru
    _
  // Predicated region
  $region6: #{transformer_decoder.18} parent=0 // pred_check
    _
  $region7: #{transformer_decoder.18} parent=0 // pred_check_branch
    %14 = sbr.rel (0) target = $region9
  $region8: #{transformer_decoder.18} parent=0 // pred_region
    _
  $region9: #{transformer_decoder.18} parent=0 // pred_fallthru
    _
  // Predicated region
  $region10: #{transformer_decoder.18} parent=0 // pred_check
    _
  $region11: #{transformer_decoder.18} parent=0 // pred_check_branch
    %16 = sbr.rel (0) target = $region13
  $region12: #{transformer_decoder.18} parent=0 // pred_region
    _
  $region13: #{transformer_decoder.18} parent=0 // pred_fallthru
    _
  // Predicated region
  $region14: #{transformer_decoder.18} parent=0 // pred_check
    _
  $region15: #{transformer_decoder.18} parent=0 // pred_check_branch
    %18 = sbr.rel (0) target = $region17
  $region16: #{transformer_decoder.18} parent=0 // pred_region
    _
  $region17: #{transformer_decoder.18} parent=0 // pred_fallthru
    _
  // Predicated region
  $region18: #{transformer_decoder.18} parent=0 // pred_check
    _
  $region19: #{transformer_decoder.18} parent=0 // pred_check_branch
    %20 = sbr.rel (0) target = $region21
  $region20: #{transformer_decoder.18} parent=0 // pred_region
    _
  $region21: #{transformer_decoder.18} parent=0 // pred_fallthru
    _
  // Predicated region
  $region22: #{transformer_decoder.18} parent=0 // pred_check
    _
  $region23: #{transformer_decoder.18} parent=0 // pred_check_branch
    %22 = sbr.rel (0) target = $region25
  $region24: #{transformer_decoder.18} parent=0 // pred_region
    _
  $region25: #{transformer_decoder.18} parent=0 // pred_fallthru
    _
  %v23 = vld [vmem:[%s0] sm:$0xff]
  %v24 = vld [vmem:[%s0 + $0x8] sm:$0xff]
  %v25 = vld [vmem:[%s1] sm:$0xff]
  %v26 = vld [vmem:[%s1 + $0x8] sm:$0xff]
  %v27 = vld [vmem:[%s1 + $0x10] sm:$0xff]
  %v28 = vld [vmem:[%s1 + $0x18] sm:$0xff]
  %v29 = vld [vmem:[%s2] sm:$0x1]
  %v31 = vlaneseq
  %v32 = vshrl.u32 %v31, 7
  %v33 = vsub.s32 0, %v32
  %v34 = vrot.slane %v29, %v33
  %vm36 = vcmask 261120
  %v38 = vsel %vm36, %v23, 0
  %v41 = vsel %vm36, %v24, 0
  %43 = vmatprep.subr.mxu0 0.0
  %44 = vmatpush1.msra.mxu0 %v25
  %45 = vmatprep.subr.mxu0 0.0
  %46 = vmatpush1.msra.mxu0 %v26
  %47 = vmatprep.subr.mxu0 0.0
  %48 = vmatpush1.msra.mxu0 %v27
  %49 = vmatprep.subr.mxu0 0.0
  %50 = vmatpush1.msra.mxu0 %v28
  %51 = vmatprep.subr.mxu0 0.0
  %52 = vmatpush1.msra.mxu0 0.0
  %53 = vmatprep.subr.mxu0 0.0
  %54 = vmatpush1.msra.mxu0 0.0
  %55 = vmatprep.subr.mxu0 0.0
  %56 = vmatpush1.msra.mxu0 0.0
  %57 = vmatprep.subr.mxu0 0.0
  %58 = vmatpush1.msra.mxu0 0.0
  %59 = vmatprep.subr.mxu0 0.0
  %60 = vmatpush1.msra.mxu0 0.0
  %61 = vmatprep.subr.mxu0 0.0
  %62 = vmatpush1.msra.mxu0 0.0
  %63 = vmatprep.subr.mxu0 0.0
  %64 = vmatpush1.msra.mxu0 0.0
  %65 = vmatprep.subr.mxu0 0.0
  %66 = vmatpush1.msra.mxu0 0.0
  %67 = vmatprep.subr.mxu0 0.0
  %68 = vmatpush1.msra.mxu0 0.0
  %69 = vmatprep.subr.mxu0 0.0
  %70 = vmatpush1.msra.mxu0 0.0
  %71 = vmatprep.subr.mxu0 0.0
  %72 = vmatpush1.msra.mxu0 0.0
  %73 = vmatprep.subr.mxu0 0.0
  %74 = vmatpush1.msra.mxu0 0.0
  %75 = vmatprep.subr.mxu0 0.0
  %76 = vmatpush1.msra.mxu0 0.0
  %77 = vmatprep.subr.mxu0 0.0
  %78 = vmatpush1.msra.mxu0 0.0
  %79 = vmatprep.subr.mxu0 0.0
  %80 = vmatpush1.msra.mxu0 0.0
  %81 = vmatprep.subr.mxu0 0.0
  %82 = vmatpush1.msra.mxu0 0.0
  %83 = vmatprep.subr.mxu0 0.0
  %84 = vmatpush1.msra.mxu0 0.0
  %85 = vmatprep.subr.mxu0 0.0
  %86 = vmatpush1.msra.mxu0 0.0
  %87 = vmatprep.subr.mxu0 0.0
  %88 = vmatpush1.msra.mxu0 0.0
  %89 = vmatprep.subr.mxu0 0.0
  %90 = vmatpush1.msra.mxu0 0.0
  %91 = vmatprep.subr.mxu0 0.0
  %92 = vmatpush1.msra.mxu0 0.0
  %93 = vmatprep.subr.mxu0 0.0
  %94 = vmatpush1.msra.mxu0 0.0
  %95 = vmatprep.subr.mxu0 0.0
  %96 = vmatpush1.msra.mxu0 0.0
  %97 = vmatprep.subr.mxu0 0.0
  %98 = vmatpush1.msra.mxu0 0.0
  %99 = vmatprep.subr.mxu0 0.0
  %100 = vmatpush1.msra.mxu0 0.0
  %101 = vmatprep.subr.mxu0 0.0
  %102 = vmatpush1.msra.mxu0 0.0
  %103 = vmatprep.subr.mxu0 0.0
  %104 = vmatpush1.msra.mxu0 0.0
  %105 = vmatprep.subr.mxu0 0.0
  %106 = vmatpush1.msra.mxu0 0.0
  %107 = vmatprep.mubr.f32.mxu0 0.0
  %108 = vmatmul.mubr.f32.gmra.mrb[0].mxu0 %v38
  %v109 = vpop.f32.mrb[0].mxu0
  %v110 = vadd.f32 %v34, %v109
  %v111 = vpop.f32.mrb[0].mxu0
  %112 = vmatprep.mubr.f32.mxu0 0.0
  %113 = vmatmul.mubr.f32.gmra.mrb[0].mxu0 %v41
  %v114 = vpop.f32.mrb[0].mxu0
  %v115 = vadd.f32 %v34, %v114
  %v116 = vpop.f32.mrb[0].mxu0
  %117 = vdwg.mxu0
  %v118 = vld [vmem:[%s3] sm:$0xff]
  %v119 = vld [vmem:[%s3 + $0x8] sm:$0xff]
  %v120 = vmul.f32 %v118, 5.656854
  %v121 = vmul.f32 %v119, 5.656854
  %v122 = vadd.f32 %v110, %v120
  %v123 = vadd.f32 %v115, %v121
  %v124 = vsel %vm36, %v122, 0.0
  %125 = vadd.xlane.f32.xlu0 %v124
  %v126 = vpop.xlane.xlu0 %125
  %v127 = vsel %vm36, %v123, 0.0
  %128 = vadd.xlane.f32.xlu0 %v127
  %v129 = vpop.xlane.xlu0 %128
  %v130 = vrcp.pop 32.0
  %v131 = vmul.f32 %v126, %v130
  %v132 = vmul.f32 %v129, %v130
  %v133 = vsub.f32 %v122, %v131
  %v134 = vsub.f32 %v123, %v132
  %v135 = vmul.f32 %v133, %v133
  %v136 = vmul.f32 %v134, %v134
  %v137 = vsel %vm36, %v135, 0.0
  %138 = vadd.xlane.f32.xlu0 %v137
  %v139 = vpop.xlane.xlu0 %138
  %v140 = vsel %vm36, %v136, 0.0
  %141 = vadd.xlane.f32.xlu0 %v140
  %v142 = vpop.xlane.xlu0 %141
  %v143 = vmul.f32 %v139, %v130
  %v144 = vmul.f32 %v142, %v130
  %v145 = vadd.f32 %v143, 1e-06
  %v146 = vadd.f32 %v144, 1e-06
  %v147 = vrsqrt.pop %v145
  %v148 = vrsqrt.pop %v146
  %v149 = vmul.f32 %v133, %v147
  %v150 = vmul.f32 %v134, %v148
  %v151 = vld [vmem:[%s4] sm:$0x1]
  %v153 = vlaneseq
  %v154 = vshrl.u32 %v153, 7
  %v155 = vsub.s32 0, %v154
  %v156 = vrot.slane %v151, %v155
  %v158 = vmul.f32 %v149, %v156
  %v159 = vmul.f32 %v150, %v156
  %v160 = vld [vmem:[%s5] sm:$0x1]
  %v162 = vlaneseq
  %v163 = vshrl.u32 %v162, 7
  %v164 = vsub.s32 0, %v163
  %v165 = vrot.slane %v160, %v164
  %v167 = vadd.f32 %v158, %v165
  %v168 = vadd.f32 %v159, %v165
  %169 = vst.msk [vmem:[%s6] sm:$0xff] %vm36, %v167
  %170 = vst.msk [vmem:[%s6 + $0x8] sm:$0xff] %vm36, %v168
  // Predicated region
  $region26: #{transformer_decoder.18} parent=0 // pred_check
    _
  $region27: #{transformer_decoder.18} parent=0 // pred_check_branch
    %172 = sbr.rel (0) target = $region29
  $region28: #{transformer_decoder.18} parent=0 // pred_region
    _
  $region29: #{transformer_decoder.18} parent=0 // pred_fallthru
    _
  // Predicated region
  $region30: #{transformer_decoder.18} parent=0 // pred_check
    _
  $region31: #{transformer_decoder.18} parent=0 // pred_check_branch
    %174 = sbr.rel (0) target = $region33
  $region32: #{transformer_decoder.18} parent=0 // pred_region
    _
  $region33: #{transformer_decoder.18} parent=0 // pred_fallthru
    _

// kernel: transformer_decoder.20
$region0: #{transformer_decoder.20}
  #allocation0 [shape = 'u32[]', space=smem, size = 0x4, offset = 0x4, fixed_abs, tag = 'smem constant byte address 0x4 - core index']
  #allocation1 [shape = 'u32[144,128]{1,0:T(1,128)}', space=vmem, size = 0x12000, scoped, tag = 'internal scratch']
  %s0 = inlined_call_operand.vmem [shape: f32[16,32], index: 0, kind: input, shape index: {}]
  %s1 = inlined_call_operand.vmem [shape: f32[32,64], index: 1, kind: input, shape index: {}]
  %s2 = inlined_call_operand.vmem [shape: f32[1,64], index: 2, kind: input, shape index: {}]
  %s3 = inlined_call_operand.vmem [shape: f32[16,32], index: 3, kind: output, shape index: {0}]
  %s4 = inlined_call_operand.vmem [shape: f32[16,32], index: 4, kind: output, shape index: {1}]
  %5 = xla_tuple %s3, %s4
  %s6 = sld [smem:[#allocation0]]
  $region30: #{transformer_decoder.20} parent=0
    _
  %s8 = ssub.s32 1, %s6
  %s9 = scalar_select 0, %s8, %s6
  // Predicated region
  $region2: #{transformer_decoder.20} parent=0 // pred_check
    _
  $region3: #{transformer_decoder.20} parent=0 // pred_check_branch
    %11 = sbr.rel (0) target = $region5
  $region4: #{transformer_decoder.20} parent=0 // pred_region
    _
  $region5: #{transformer_decoder.20} parent=0 // pred_fallthru
    _
  // Predicated region
  $region6: #{transformer_decoder.20} parent=0 // pred_check
    _
  $region7: #{transformer_decoder.20} parent=0 // pred_check_branch
    %13 = sbr.rel (0) target = $region9
  $region8: #{transformer_decoder.20} parent=0 // pred_region
    _
  $region9: #{transformer_decoder.20} parent=0 // pred_fallthru
    _
  // Predicated region
  $region10: #{transformer_decoder.20} parent=0 // pred_check
    _
  $region11: #{transformer_decoder.20} parent=0 // pred_check_branch
    %15 = sbr.rel (0) target = $region13
  $region12: #{transformer_decoder.20} parent=0 // pred_region
    _
  $region13: #{transformer_decoder.20} parent=0 // pred_fallthru
    _
  %v16 = vld [vmem:[%s0] sm:$0xff]
  %v17 = vld [vmem:[%s0 + $0x8] sm:$0xff]
  %v18 = vld [vmem:[%s1] sm:$0xff]
  %v19 = vld [vmem:[%s1 + $0x8] sm:$0xff]
  %v20 = vld [vmem:[%s1 + $0x10] sm:$0xff]
  %v21 = vld [vmem:[%s1 + $0x18] sm:$0xff]
  %v22 = vld [vmem:[%s2] sm:$0x1]
  %v24 = vlaneseq
  %v25 = vshrl.u32 %v24, 7
  %v26 = vsub.s32 0, %v25
  %v27 = vrot.slane %v22, %v26
  %vm29 = vcmask 261120
  %v31 = vsel %vm29, %v16, 0
  %v34 = vsel %vm29, %v17, 0
  %36 = vmatprep.subr.mxu0 0.0
  %37 = vmatpush1.msra.mxu0 %v18
  %38 = vmatprep.subr.mxu0 0.0
  %39 = vmatpush1.msra.mxu0 %v19
  %40 = vmatprep.subr.mxu0 0.0
  %41 = vmatpush1.msra.mxu0 %v20
  %42 = vmatprep.subr.mxu0 0.0
  %43 = vmatpush1.msra.mxu0 %v21
  %44 = vmatprep.subr.mxu0 0.0
  %45 = vmatpush1.msra.mxu0 0.0
  %46 = vmatprep.subr.mxu0 0.0
  %47 = vmatpush1.msra.mxu0 0.0
  %48 = vmatprep.subr.mxu0 0.0
  %49 = vmatpush1.msra.mxu0 0.0
  %50 = vmatprep.subr.mxu0 0.0
  %51 = vmatpush1.msra.mxu0 0.0
  %52 = vmatprep.subr.mxu0 0.0
  %53 = vmatpush1.msra.mxu0 0.0
  %54 = vmatprep.subr.mxu0 0.0
  %55 = vmatpush1.msra.mxu0 0.0
  %56 = vmatprep.subr.mxu0 0.0
  %57 = vmatpush1.msra.mxu0 0.0
  %58 = vmatprep.subr.mxu0 0.0
  %59 = vmatpush1.msra.mxu0 0.0
  %60 = vmatprep.subr.mxu0 0.0
  %61 = vmatpush1.msra.mxu0 0.0
  %62 = vmatprep.subr.mxu0 0.0
  %63 = vmatpush1.msra.mxu0 0.0
  %64 = vmatprep.subr.mxu0 0.0
  %65 = vmatpush1.msra.mxu0 0.0
  %66 = vmatprep.subr.mxu0 0.0
  %67 = vmatpush1.msra.mxu0 0.0
  %68 = vmatprep.subr.mxu0 0.0
  %69 = vmatpush1.msra.mxu0 0.0
  %70 = vmatprep.subr.mxu0 0.0
  %71 = vmatpush1.msra.mxu0 0.0
  %72 = vmatprep.subr.mxu0 0.0
  %73 = vmatpush1.msra.mxu0 0.0
  %74 = vmatprep.subr.mxu0 0.0
  %75 = vmatpush1.msra.mxu0 0.0
  %76 = vmatprep.subr.mxu0 0.0
  %77 = vmatpush1.msra.mxu0 0.0
  %78 = vmatprep.subr.mxu0 0.0
  %79 = vmatpush1.msra.mxu0 0.0
  %80 = vmatprep.subr.mxu0 0.0
  %81 = vmatpush1.msra.mxu0 0.0
  %82 = vmatprep.subr.mxu0 0.0
  %83 = vmatpush1.msra.mxu0 0.0
  %84 = vmatprep.subr.mxu0 0.0
  %85 = vmatpush1.msra.mxu0 0.0
  %86 = vmatprep.subr.mxu0 0.0
  %87 = vmatpush1.msra.mxu0 0.0
  %88 = vmatprep.subr.mxu0 0.0
  %89 = vmatpush1.msra.mxu0 0.0
  %90 = vmatprep.subr.mxu0 0.0
  %91 = vmatpush1.msra.mxu0 0.0
  %92 = vmatprep.subr.mxu0 0.0
  %93 = vmatpush1.msra.mxu0 0.0
  %94 = vmatprep.subr.mxu0 0.0
  %95 = vmatpush1.msra.mxu0 0.0
  %96 = vmatprep.subr.mxu0 0.0
  %97 = vmatpush1.msra.mxu0 0.0
  %98 = vmatprep.subr.mxu0 0.0
  %99 = vmatpush1.msra.mxu0 0.0
  %100 = vmatprep.mubr.f32.mxu0 0.0
  %101 = vmatmul.mubr.f32.gmra.mrb[0].mxu0 %v31
  %v102 = vpop.f32.mrb[0].mxu0
  %v103 = vadd.f32 %v27, %v102
  %v104 = vpop.f32.mrb[0].mxu0
  %105 = vmatprep.mubr.f32.mxu0 0.0
  %106 = vmatmul.mubr.f32.gmra.mrb[0].mxu0 %v34
  %v107 = vpop.f32.mrb[0].mxu0
  %v108 = vadd.f32 %v27, %v107
  %v109 = vpop.f32.mrb[0].mxu0
  %110 = vdwg.mxu0
  %111 = vst.msk [vmem:[%s3] sm:$0xff] %vm29, %v103
  %112 = vst.msk [vmem:[%s3 + $0x8] sm:$0xff] %vm29, %v108
  %115 = vrot.lane.b32.xlu0 %v103, 96
  %v116 = vpop.permute.xlu0 %115
  %117 = vrot.lane.b32.xlu0 %v108, 96
  %v118 = vpop.permute.xlu0 %117
  %121 = vst.msk [vmem:[%s4] sm:$0xff] %vm29, %v116
  %122 = vst.msk [vmem:[%s4 + $0x8] sm:$0xff] %vm29, %v118
  // Predicated region
  $region14: #{transformer_decoder.20} parent=0 // pred_check
    _
  $region15: #{transformer_decoder.20} parent=0 // pred_check_branch
    %124 = sbr.rel (0) target = $region17
  $region16: #{transformer_decoder.20} parent=0 // pred_region
    _
  $region17: #{transformer_decoder.20} parent=0 // pred_fallthru
    _
  // Predicated region
  $region18: #{transformer_decoder.20} parent=0 // pred_check
    _
  $region19: #{transformer_decoder.20} parent=0 // pred_check_branch
    %126 = sbr.rel (0) target = $region21
  $region20: #{transformer_decoder.20} parent=0 // pred_region
    _
  $region21: #{transformer_decoder.20} parent=0 // pred_fallthru
    _
  // Predicated region
  $region22: #{transformer_decoder.20} parent=0 // pred_check
    _
  $region23: #{transformer_decoder.20} parent=0 // pred_check_branch
    %128 = sbr.rel (0) target = $region25
  $region24: #{transformer_decoder.20} parent=0 // pred_region
    _
  $region25: #{transformer_decoder.20} parent=0 // pred_fallthru
    _
  // Predicated region
  $region26: #{transformer_decoder.20} parent=0 // pred_check
    _
  $region27: #{transformer_decoder.20} parent=0 // pred_check_branch
    %130 = sbr.rel (0) target = $region29
  $region28: #{transformer_decoder.20} parent=0 // pred_region
    _
  $region29: #{transformer_decoder.20} parent=0 // pred_fallthru
    _

// kernel: transformer_decoder.24
$region0: #{transformer_decoder.24}
  #allocation0 [shape = 'u32[]', space=smem, size = 0x4, offset = 0x4, fixed_abs, tag = 'smem constant byte address 0x4 - core index']
  #allocation1 [shape = 'u32[144,128]{1,0:T(1,128)}', space=vmem, size = 0x12000, scoped, tag = 'internal scratch']
  %s0 = inlined_call_operand.vmem [shape: f32[16,32], index: 0, kind: input, shape index: {}]
  %s1 = inlined_call_operand.vmem [shape: f32[32,96], index: 1, kind: input, shape index: {}]
  %s2 = inlined_call_operand.vmem [shape: f32[1,96], index: 2, kind: input, shape index: {}]
  %s3 = inlined_call_operand.vmem [shape: f32[16,32], index: 3, kind: output, shape index: {0}]
  %s4 = inlined_call_operand.vmem [shape: f32[16,32], index: 4, kind: output, shape index: {1}]
  %s5 = inlined_call_operand.vmem [shape: f32[16,32], index: 5, kind: output, shape index: {2}]
  %6 = xla_tuple %s3, %s4, %s5
  %s7 = sld [smem:[#allocation0]]
  $region38: #{transformer_decoder.24} parent=0
    _
  %s9 = ssub.s32 1, %s7
  %s10 = scalar_select 0, %s9, %s7
  // Predicated region
  $region2: #{transformer_decoder.24} parent=0 // pred_check
    _
  $region3: #{transformer_decoder.24} parent=0 // pred_check_branch
    %12 = sbr.rel (0) target = $region5
  $region4: #{transformer_decoder.24} parent=0 // pred_region
    _
  $region5: #{transformer_decoder.24} parent=0 // pred_fallthru
    _
  // Predicated region
  $region6: #{transformer_decoder.24} parent=0 // pred_check
    _
  $region7: #{transformer_decoder.24} parent=0 // pred_check_branch
    %14 = sbr.rel (0) target = $region9
  $region8: #{transformer_decoder.24} parent=0 // pred_region
    _
  $region9: #{transformer_decoder.24} parent=0 // pred_fallthru
    _
  // Predicated region
  $region10: #{transformer_decoder.24} parent=0 // pred_check
    _
  $region11: #{transformer_decoder.24} parent=0 // pred_check_branch
    %16 = sbr.rel (0) target = $region13
  $region12: #{transformer_decoder.24} parent=0 // pred_region
    _
  $region13: #{transformer_decoder.24} parent=0 // pred_fallthru
    _
  %v17 = vld [vmem:[%s0] sm:$0xff]
  %v18 = vld [vmem:[%s0 + $0x8] sm:$0xff]
  %v19 = vld [vmem:[%s1] sm:$0xff]
  %v20 = vld [vmem:[%s1 + $0x8] sm:$0xff]
  %v21 = vld [vmem:[%s1 + $0x10] sm:$0xff]
  %v22 = vld [vmem:[%s1 + $0x18] sm:$0xff]
  %v23 = vld [vmem:[%s2] sm:$0x1]
  %v25 = vlaneseq
  %v26 = vshrl.u32 %v25, 7
  %v27 = vsub.s32 0, %v26
  %v28 = vrot.slane %v23, %v27
  %vm30 = vcmask 261120
  %v32 = vsel %vm30, %v17, 0
  %v35 = vsel %vm30, %v18, 0
  %37 = vmatprep.subr.mxu0 0.0
  %38 = vmatpush1.msra.mxu0 %v19
  %39 = vmatprep.subr.mxu0 0.0
  %40 = vmatpush1.msra.mxu0 %v20
  %41 = vmatprep.subr.mxu0 0.0
  %42 = vmatpush1.msra.mxu0 %v21
  %43 = vmatprep.subr.mxu0 0.0
  %44 = vmatpush1.msra.mxu0 %v22
  %45 = vmatprep.subr.mxu0 0.0
  %46 = vmatpush1.msra.mxu0 0.0
  %47 = vmatprep.subr.mxu0 0.0
  %48 = vmatpush1.msra.mxu0 0.0
  %49 = vmatprep.subr.mxu0 0.0
  %50 = vmatpush1.msra.mxu0 0.0
  %51 = vmatprep.subr.mxu0 0.0
  %52 = vmatpush1.msra.mxu0 0.0
  %53 = vmatprep.subr.mxu0 0.0
  %54 = vmatpush1.msra.mxu0 0.0
  %55 = vmatprep.subr.mxu0 0.0
  %56 = vmatpush1.msra.mxu0 0.0
  %57 = vmatprep.subr.mxu0 0.0
  %58 = vmatpush1.msra.mxu0 0.0
  %59 = vmatprep.subr.mxu0 0.0
  %60 = vmatpush1.msra.mxu0 0.0
  %61 = vmatprep.subr.mxu0 0.0
  %62 = vmatpush1.msra.mxu0 0.0
  %63 = vmatprep.subr.mxu0 0.0
  %64 = vmatpush1.msra.mxu0 0.0
  %65 = vmatprep.subr.mxu0 0.0
  %66 = vmatpush1.msra.mxu0 0.0
  %67 = vmatprep.subr.mxu0 0.0
  %68 = vmatpush1.msra.mxu0 0.0
  %69 = vmatprep.subr.mxu0 0.0
  %70 = vmatpush1.msra.mxu0 0.0
  %71 = vmatprep.subr.mxu0 0.0
  %72 = vmatpush1.msra.mxu0 0.0
  %73 = vmatprep.subr.mxu0 0.0
  %74 = vmatpush1.msra.mxu0 0.0
  %75 = vmatprep.subr.mxu0 0.0
  %76 = vmatpush1.msra.mxu0 0.0
  %77 = vmatprep.subr.mxu0 0.0
  %78 = vmatpush1.msra.mxu0 0.0
  %79 = vmatprep.subr.mxu0 0.0
  %80 = vmatpush1.msra.mxu0 0.0
  %81 = vmatprep.subr.mxu0 0.0
  %82 = vmatpush1.msra.mxu0 0.0
  %83 = vmatprep.subr.mxu0 0.0
  %84 = vmatpush1.msra.mxu0 0.0
  %85 = vmatprep.subr.mxu0 0.0
  %86 = vmatpush1.msra.mxu0 0.0
  %87 = vmatprep.subr.mxu0 0.0
  %88 = vmatpush1.msra.mxu0 0.0
  %89 = vmatprep.subr.mxu0 0.0
  %90 = vmatpush1.msra.mxu0 0.0
  %91 = vmatprep.subr.mxu0 0.0
  %92 = vmatpush1.msra.mxu0 0.0
  %93 = vmatprep.subr.mxu0 0.0
  %94 = vmatpush1.msra.mxu0 0.0
  %95 = vmatprep.subr.mxu0 0.0
  %96 = vmatpush1.msra.mxu0 0.0
  %97 = vmatprep.subr.mxu0 0.0
  %98 = vmatpush1.msra.mxu0 0.0
  %99 = vmatprep.subr.mxu0 0.0
  %100 = vmatpush1.msra.mxu0 0.0
  %101 = vmatprep.mubr.f32.mxu0 0.0
  %102 = vmatmul.mubr.f32.gmra.mrb[0].mxu0 %v32
  %v103 = vpop.f32.mrb[0].mxu0
  %v104 = vadd.f32 %v28, %v103
  %v105 = vpop.f32.mrb[0].mxu0
  %106 = vmatprep.mubr.f32.mxu0 0.0
  %107 = vmatmul.mubr.f32.gmra.mrb[0].mxu0 %v35
  %v108 = vpop.f32.mrb[0].mxu0
  %v109 = vadd.f32 %v28, %v108
  %v110 = vpop.f32.mrb[0].mxu0
  %111 = vdwg.mxu0
  %112 = vst.msk [vmem:[%s3] sm:$0xff] %vm30, %v104
  %113 = vst.msk [vmem:[%s3 + $0x8] sm:$0xff] %vm30, %v109
  %116 = vrot.lane.b32.xlu0 %v104, 96
  %v117 = vpop.permute.xlu0 %116
  %118 = vrot.lane.b32.xlu0 %v109, 96
  %v119 = vpop.permute.xlu0 %118
  %122 = vst.msk [vmem:[%s4] sm:$0xff] %vm30, %v117
  %123 = vst.msk [vmem:[%s4 + $0x8] sm:$0xff] %vm30, %v119
  %124 = vrot.lane.b32.xlu0 %v104, 64
  %v125 = vpop.permute.xlu0 %124
  %126 = vrot.lane.b32.xlu0 %v109, 64
  %v127 = vpop.permute.xlu0 %126
  %130 = vst.msk [vmem:[%s5] sm:$0xff] %vm30, %v125
  %131 = vst.msk [vmem:[%s5 + $0x8] sm:$0xff] %vm30, %v127
  // Predicated region
  $region14: #{transformer_decoder.24} parent=0 // pred_check
    _
  $region15: #{transformer_decoder.24} parent=0 // pred_check_branch
    %133 = sbr.rel (0) target = $region17
  $region16: #{transformer_decoder.24} parent=0 // pred_region
    _
  $region17: #{transformer_decoder.24} parent=0 // pred_fallthru
    _
  // Predicated region
  $region18: #{transformer_decoder.24} parent=0 // pred_check
    _
  $region19: #{transformer_decoder.24} parent=0 // pred_check_branch
    %135 = sbr.rel (0) target = $region21
  $region20: #{transformer_decoder.24} parent=0 // pred_region
    _
  $region21: #{transformer_decoder.24} parent=0 // pred_fallthru
    _
  // Predicated region
  $region22: #{transformer_decoder.24} parent=0 // pred_check
    _
  $region23: #{transformer_decoder.24} parent=0 // pred_check_branch
    %137 = sbr.rel (0) target = $region25
  $region24: #{transformer_decoder.24} parent=0 // pred_region
    _
  $region25: #{transformer_decoder.24} parent=0 // pred_fallthru
    _
  // Predicated region
  $region26: #{transformer_decoder.24} parent=0 // pred_check
    _
  $region27: #{transformer_decoder.24} parent=0 // pred_check_branch
    %139 = sbr.rel (0) target = $region29
  $region28: #{transformer_decoder.24} parent=0 // pred_region
    _
  $region29: #{transformer_decoder.24} parent=0 // pred_fallthru
    _
  // Predicated region
  $region30: #{transformer_decoder.24} parent=0 // pred_check
    _
  $region31: #{transformer_decoder.24} parent=0 // pred_check_branch
    %141 = sbr.rel (0) target = $region33
  $region32: #{transformer_decoder.24} parent=0 // pred_region
    _
  $region33: #{transformer_decoder.24} parent=0 // pred_fallthru
    _
  // Predicated region
  $region34: #{transformer_decoder.24} parent=0 // pred_check
    _
  $region35: #{transformer_decoder.24} parent=0 // pred_check_branch
    %143 = sbr.rel (0) target = $region37
  $region36: #{transformer_decoder.24} parent=0 // pred_region
    _
  $region37: #{transformer_decoder.24} parent=0 // pred_fallthru
    _

// kernel: transformer_decoder.23
$region0: #{transformer_decoder.23}
  #allocation0 [shape = 'u32[]', space=smem, size = 0x4, offset = 0x4, fixed_abs, tag = 'smem constant byte address 0x4 - core index']
  #allocation1 [shape = 'u32[144,128]{1,0:T(1,128)}', space=vmem, size = 0x12000, scoped, tag = 'internal scratch']
  %s0 = inlined_call_operand.vmem [shape: f32[16,32], index: 0, kind: input, shape index: {}]
  %s1 = inlined_call_operand.vmem [shape: f32[32,64], index: 1, kind: input, shape index: {}]
  %s2 = inlined_call_operand.vmem [shape: f32[1,64], index: 2, kind: input, shape index: {}]
  %s3 = inlined_call_operand.vmem [shape: f32[64,32], index: 3, kind: input, shape index: {}]
  %s4 = inlined_call_operand.vmem [shape: f32[1,32], index: 4, kind: input, shape index: {}]
  %s5 = inlined_call_operand.vmem [shape: f32[1,32], index: 5, kind: input, shape index: {}]
  %s6 = inlined_call_operand.vmem [shape: f32[1,32], index: 6, kind: input, shape index: {}]
  %s7 = inlined_call_operand.vmem [shape: f32[16,32], index: 7, kind: output, shape index: {}]
  %s8 = sld [smem:[#allocation0]]
  $region38: #{transformer_decoder.23} parent=0
    _
  %s10 = ssub.s32 1, %s8
  %s11 = scalar_select 0, %s10, %s8
  // Predicated region
  $region2: #{transformer_decoder.23} parent=0 // pred_check
    _
  $region3: #{transformer_decoder.23} parent=0 // pred_check_branch
    %13 = sbr.rel (0) target = $region5
  $region4: #{transformer_decoder.23} parent=0 // pred_region
    _
  $region5: #{transformer_decoder.23} parent=0 // pred_fallthru
    _
  // Predicated region
  $region6: #{transformer_decoder.23} parent=0 // pred_check
    _
  $region7: #{transformer_decoder.23} parent=0 // pred_check_branch
    %15 = sbr.rel (0) target = $region9
  $region8: #{transformer_decoder.23} parent=0 // pred_region
    _
  $region9: #{transformer_decoder.23} parent=0 // pred_fallthru
    _
  // Predicated region
  $region10: #{transformer_decoder.23} parent=0 // pred_check
    _
  $region11: #{transformer_decoder.23} parent=0 // pred_check_branch
    %17 = sbr.rel (0) target = $region13
  $region12: #{transformer_decoder.23} parent=0 // pred_region
    _
  $region13: #{transformer_decoder.23} parent=0 // pred_fallthru
    _
  // Predicated region
  $region14: #{transformer_decoder.23} parent=0 // pred_check
    _
  $region15: #{transformer_decoder.23} parent=0 // pred_check_branch
    %19 = sbr.rel (0) target = $region17
  $region16: #{transformer_decoder.23} parent=0 // pred_region
    _
  $region17: #{transformer_decoder.23} parent=0 // pred_fallthru
    _
  // Predicated region
  $region18: #{transformer_decoder.23} parent=0 // pred_check
    _
  $region19: #{transformer_decoder.23} parent=0 // pred_check_branch
    %21 = sbr.rel (0) target = $region21
  $region20: #{transformer_decoder.23} parent=0 // pred_region
    _
  $region21: #{transformer_decoder.23} parent=0 // pred_fallthru
    _
  // Predicated region
  $region22: #{transformer_decoder.23} parent=0 // pred_check
    _
  $region23: #{transformer_decoder.23} parent=0 // pred_check_branch
    %23 = sbr.rel (0) target = $region25
  $region24: #{transformer_decoder.23} parent=0 // pred_region
    _
  $region25: #{transformer_decoder.23} parent=0 // pred_fallthru
    _
  // Predicated region
  $region26: #{transformer_decoder.23} parent=0 // pred_check
    _
  $region27: #{transformer_decoder.23} parent=0 // pred_check_branch
    %25 = sbr.rel (0) target = $region29
  $region28: #{transformer_decoder.23} parent=0 // pred_region
    _
  $region29: #{transformer_decoder.23} parent=0 // pred_fallthru
    _
  %v26 = vld [vmem:[%s0] sm:$0xff]
  %v27 = vld [vmem:[%s0 + $0x8] sm:$0xff]
  %v28 = vld [vmem:[%s1] sm:$0xff]
  %v29 = vld [vmem:[%s1 + $0x8] sm:$0xff]
  %v30 = vld [vmem:[%s1 + $0x10] sm:$0xff]
  %v31 = vld [vmem:[%s1 + $0x18] sm:$0xff]
  %v32 = vld [vmem:[%s2] sm:$0x1]
  %v34 = vlaneseq
  %v35 = vshrl.u32 %v34, 7
  %v36 = vsub.s32 0, %v35
  %v37 = vrot.slane %v32, %v36
  %vm39 = vcmask 261120
  %v41 = vsel %vm39, %v26, 0
  %v44 = vsel %vm39, %v27, 0
  %46 = vmatprep.subr.mxu0 0.0
  %47 = vmatpush1.msra.mxu0 %v28
  %48 = vmatprep.subr.mxu0 0.0
  %49 = vmatpush1.msra.mxu0 %v29
  %50 = vmatprep.subr.mxu0 0.0
  %51 = vmatpush1.msra.mxu0 %v30
  %52 = vmatprep.subr.mxu0 0.0
  %53 = vmatpush1.msra.mxu0 %v31
  %54 = vmatprep.subr.mxu0 0.0
  %55 = vmatpush1.msra.mxu0 0.0
  %56 = vmatprep.subr.mxu0 0.0
  %57 = vmatpush1.msra.mxu0 0.0
  %58 = vmatprep.subr.mxu0 0.0
  %59 = vmatpush1.msra.mxu0 0.0
  %60 = vmatprep.subr.mxu0 0.0
  %61 = vmatpush1.msra.mxu0 0.0
  %62 = vmatprep.subr.mxu0 0.0
  %63 = vmatpush1.msra.mxu0 0.0
  %64 = vmatprep.subr.mxu0 0.0
  %65 = vmatpush1.msra.mxu0 0.0
  %66 = vmatprep.subr.mxu0 0.0
  %67 = vmatpush1.msra.mxu0 0.0
  %68 = vmatprep.subr.mxu0 0.0
  %69 = vmatpush1.msra.mxu0 0.0
  %70 = vmatprep.subr.mxu0 0.0
  %71 = vmatpush1.msra.mxu0 0.0
  %72 = vmatprep.subr.mxu0 0.0
  %73 = vmatpush1.msra.mxu0 0.0
  %74 = vmatprep.subr.mxu0 0.0
  %75 = vmatpush1.msra.mxu0 0.0
  %76 = vmatprep.subr.mxu0 0.0
  %77 = vmatpush1.msra.mxu0 0.0
  %78 = vmatprep.subr.mxu0 0.0
  %79 = vmatpush1.msra.mxu0 0.0
  %80 = vmatprep.subr.mxu0 0.0
  %81 = vmatpush1.msra.mxu0 0.0
  %82 = vmatprep.subr.mxu0 0.0
  %83 = vmatpush1.msra.mxu0 0.0
  %84 = vmatprep.subr.mxu0 0.0
  %85 = vmatpush1.msra.mxu0 0.0
  %86 = vmatprep.subr.mxu0 0.0
  %87 = vmatpush1.msra.mxu0 0.0
  %88 = vmatprep.subr.mxu0 0.0
  %89 = vmatpush1.msra.mxu0 0.0
  %90 = vmatprep.subr.mxu0 0.0
  %91 = vmatpush1.msra.mxu0 0.0
  %92 = vmatprep.subr.mxu0 0.0
  %93 = vmatpush1.msra.mxu0 0.0
  %94 = vmatprep.subr.mxu0 0.0
  %95 = vmatpush1.msra.mxu0 0.0
  %96 = vmatprep.subr.mxu0 0.0
  %97 = vmatpush1.msra.mxu0 0.0
  %98 = vmatprep.subr.mxu0 0.0
  %99 = vmatpush1.msra.mxu0 0.0
  %100 = vmatprep.subr.mxu0 0.0
  %101 = vmatpush1.msra.mxu0 0.0
  %102 = vmatprep.subr.mxu0 0.0
  %103 = vmatpush1.msra.mxu0 0.0
  %104 = vmatprep.subr.mxu0 0.0
  %105 = vmatpush1.msra.mxu0 0.0
  %106 = vmatprep.subr.mxu0 0.0
  %107 = vmatpush1.msra.mxu0 0.0
  %108 = vmatprep.subr.mxu0 0.0
  %109 = vmatpush1.msra.mxu0 0.0
  %110 = vmatprep.mubr.f32.mxu0 0.0
  %111 = vmatmul.mubr.f32.gmra.mrb[0].mxu0 %v41
  %v112 = vpop.f32.mrb[0].mxu0
  %v113 = vadd.f32 %v37, %v112
  %v114 = vpop.f32.mrb[0].mxu0
  %115 = vmatprep.mubr.f32.mxu0 0.0
  %116 = vmatmul.mubr.f32.gmra.mrb[0].mxu0 %v44
  %v117 = vpop.f32.mrb[0].mxu0
  %v118 = vadd.f32 %v37, %v117
  %v119 = vpop.f32.mrb[0].mxu0
  %120 = vdwg.mxu0
  %v121 = vmax.f32 %v113, 0.0
  %v122 = vmax.f32 %v118, 0.0
  %v123 = vld [vmem:[%s3] sm:$0xff]
  %v124 = vld [vmem:[%s3 + $0x8] sm:$0xff]
  %v125 = vld [vmem:[%s3 + $0x10] sm:$0xff]
  %v126 = vld [vmem:[%s3 + $0x18] sm:$0xff]
  %v127 = vld [vmem:[%s3 + $0x20] sm:$0xff]
  %v128 = vld [vmem:[%s3 + $0x28] sm:$0xff]
  %v129 = vld [vmem:[%s3 + $0x30] sm:$0xff]
  %v130 = vld [vmem:[%s3 + $0x38] sm:$0xff]
  %v131 = vld [vmem:[%s4] sm:$0x1]
  %v133 = vlaneseq
  %v134 = vshrl.u32 %v133, 7
  %v135 = vsub.s32 0, %v134
  %v136 = vrot.slane %v131, %v135
  %vm138 = vcmask 523264
  %v140 = vsel %vm138, %v121, 0
  %v143 = vsel %vm138, %v122, 0
  %145 = vmatprep.subr.mxu0 0.0
  %146 = vmatpush1.msra.mxu0 %v123
  %147 = vmatprep.subr.mxu0 0.0
  %148 = vmatpush1.msra.mxu0 %v124
  %149 = vmatprep.subr.mxu0 0.0
  %150 = vmatpush1.msra.mxu0 %v125
  %151 = vmatprep.subr.mxu0 0.0
  %152 = vmatpush1.msra.mxu0 %v126
  %153 = vmatprep.subr.mxu0 0.0
  %154 = vmatpush1.msra.mxu0 %v127
  %155 = vmatprep.subr.mxu0 0.0
  %156 = vmatpush1.msra.mxu0 %v128
  %157 = vmatprep.subr.mxu0 0.0
  %158 = vmatpush1.msra.mxu0 %v129
  %159 = vmatprep.subr.mxu0 0.0
  %160 = vmatpush1.msra.mxu0 %v130
  %161 = vmatprep.subr.mxu0 0.0
  %162 = vmatpush1.msra.mxu0 0.0
  %163 = vmatprep.subr.mxu0 0.0
  %164 = vmatpush1.msra.mxu0 0.0
  %165 = vmatprep.subr.mxu0 0.0
  %166 = vmatpush1.msra.mxu0 0.0
  %167 = vmatprep.subr.mxu0 0.0
  %168 = vmatpush1.msra.mxu0 0.0
  %169 = vmatprep.subr.mxu0 0.0
  %170 = vmatpush1.msra.mxu0 0.0
  %171 = vmatprep.subr.mxu0 0.0
  %172 = vmatpush1.msra.mxu0 0.0
  %173 = vmatprep.subr.mxu0 0.0
  %174 = vmatpush1.msra.mxu0 0.0
  %175 = vmatprep.subr.mxu0 0.0
  %176 = vmatpush1.msra.mxu0 0.0
  %177 = vmatprep.subr.mxu0 0.0
  %178 = vmatpush1.msra.mxu0 0.0
  %179 = vmatprep.subr.mxu0 0.0
  %180 = vmatpush1.msra.mxu0 0.0
  %181 = vmatprep.subr.mxu0 0.0
  %182 = vmatpush1.msra.mxu0 0.0
  %183 = vmatprep.subr.mxu0 0.0
  %184 = vmatpush1.msra.mxu0 0.0
  %185 = vmatprep.subr.mxu0 0.0
  %186 = vmatpush1.msra.mxu0 0.0
  %187 = vmatprep.subr.mxu0 0.0
  %188 = vmatpush1.msra.mxu0 0.0
  %189 = vmatprep.subr.mxu0 0.0
  %190 = vmatpush1.msra.mxu0 0.0
  %191 = vmatprep.subr.mxu0 0.0
  %192 = vmatpush1.msra.mxu0 0.0
  %193 = vmatprep.subr.mxu0 0.0
  %194 = vmatpush1.msra.mxu0 0.0
  %195 = vmatprep.subr.mxu0 0.0
  %196 = vmatpush1.msra.mxu0 0.0
  %197 = vmatprep.subr.mxu0 0.0
  %198 = vmatpush1.msra.mxu0 0.0
  %199 = vmatprep.subr.mxu0 0.0
  %200 = vmatpush1.msra.mxu0 0.0
  %201 = vmatprep.subr.mxu0 0.0
  %202 = vmatpush1.msra.mxu0 0.0
  %203 = vmatprep.subr.mxu0 0.0
  %204 = vmatpush1.msra.mxu0 0.0
  %205 = vmatprep.subr.mxu0 0.0
  %206 = vmatpush1.msra.mxu0 0.0
  %207 = vmatprep.subr.mxu0 0.0
  %208 = vmatpush1.msra.mxu0 0.0
  %209 = vmatprep.mubr.f32.mxu0 0.0
  %210 = vmatmul.mubr.f32.gmra.mrb[0].mxu0 %v140
  %v211 = vpop.f32.mrb[0].mxu0
  %v212 = vadd.f32 %v136, %v211
  %v213 = vpop.f32.mrb[0].mxu0
  %214 = vmatprep.mubr.f32.mxu0 0.0
  %215 = vmatmul.mubr.f32.gmra.mrb[0].mxu0 %v143
  %v216 = vpop.f32.mrb[0].mxu0
  %v217 = vadd.f32 %v136, %v216
  %v218 = vpop.f32.mrb[0].mxu0
  %219 = vdwg.mxu0
  %v220 = vadd.f32 %v212, %v26
  %v221 = vadd.f32 %v217, %v27
  %v222 = vsel %vm39, %v220, 0.0
  %223 = vadd.xlane.f32.xlu0 %v222
  %v224 = vpop.xlane.xlu0 %223
  %v225 = vsel %vm39, %v221, 0.0
  %226 = vadd.xlane.f32.xlu0 %v225
  %v227 = vpop.xlane.xlu0 %226
  %v228 = vrcp.pop 32.0
  %v229 = vmul.f32 %v224, %v228
  %v230 = vmul.f32 %v227, %v228
  %v231 = vsub.f32 %v220, %v229
  %v232 = vsub.f32 %v221, %v230
  %v233 = vmul.f32 %v231, %v231
  %v234 = vmul.f32 %v232, %v232
  %v235 = vsel %vm39, %v233, 0.0
  %236 = vadd.xlane.f32.xlu0 %v235
  %v237 = vpop.xlane.xlu0 %236
  %v238 = vsel %vm39, %v234, 0.0
  %239 = vadd.xlane.f32.xlu0 %v238
  %v240 = vpop.xlane.xlu0 %239
  %v241 = vmul.f32 %v237, %v228
  %v242 = vmul.f32 %v240, %v228
  %v243 = vadd.f32 %v241, 1e-06
  %v244 = vadd.f32 %v242, 1e-06
  %v245 = vrsqrt.pop %v243
  %v246 = vrsqrt.pop %v244
  %v247 = vmul.f32 %v231, %v245
  %v248 = vmul.f32 %v232, %v246
  %v249 = vld [vmem:[%s5] sm:$0x1]
  %v251 = vlaneseq
  %v252 = vshrl.u32 %v251, 7
  %v253 = vsub.s32 0, %v252
  %v254 = vrot.slane %v249, %v253
  %v256 = vmul.f32 %v247, %v254
  %v257 = vmul.f32 %v248, %v254
  %v258 = vld [vmem:[%s6] sm:$0x1]
  %v260 = vlaneseq
  %v261 = vshrl.u32 %v260, 7
  %v262 = vsub.s32 0, %v261
  %v263 = vrot.slane %v258, %v262
  %v265 = vadd.f32 %v256, %v263
  %v266 = vadd.f32 %v257, %v263
  %267 = vst.msk [vmem:[%s7] sm:$0xff] %vm39, %v265
  %268 = vst.msk [vmem:[%s7 + $0x8] sm:$0xff] %vm39, %v266
  // Predicated region
  $region30: #{transformer_decoder.23} parent=0 // pred_check
    _
  $region31: #{transformer_decoder.23} parent=0 // pred_check_branch
    %270 = sbr.rel (0) target = $region33
  $region32: #{transformer_decoder.23} parent=0 // pred_region
    _
  $region33: #{transformer_decoder.23} parent=0 // pred_fallthru
    _
  // Predicated region
  $region34: #{transformer_decoder.23} parent=0 // pred_check
    _
  $region35: #{transformer_decoder.23} parent=0 // pred_check_branch
    %272 = sbr.rel (0) target = $region37
  $region36: #{transformer_decoder.23} parent=0 // pred_region
    _
  $region37: #{transformer_decoder.23} parent=0 // pred_fallthru
    _

// kernel: transformer_decoder.22
$region0: #{transformer_decoder.22}
  #allocation0 [shape = 'u32[]', space=smem, size = 0x4, offset = 0x4, fixed_abs, tag = 'smem constant byte address 0x4 - core index']
  #allocation1 [shape = 'u32[144,128]{1,0:T(1,128)}', space=vmem, size = 0x12000, scoped, tag = 'internal scratch']
  %s0 = inlined_call_operand.vmem [shape: f32[16,32], index: 0, kind: input, shape index: {}]
  %s1 = inlined_call_operand.vmem [shape: f32[32,32], index: 1, kind: input, shape index: {}]
  %s2 = inlined_call_operand.vmem [shape: f32[1,32], index: 2, kind: input, shape index: {}]
  %s3 = inlined_call_operand.vmem [shape: f32[16,32], index: 3, kind: input, shape index: {}]
  %s4 = inlined_call_operand.vmem [shape: f32[1,32], index: 4, kind: input, shape index: {}]
  %s5 = inlined_call_operand.vmem [shape: f32[1,32], index: 5, kind: input, shape index: {}]
  %s6 = inlined_call_operand.vmem [shape: f32[16,32], index: 6, kind: output, shape index: {}]
  %s7 = sld [smem:[#allocation0]]
  $region34: #{transformer_decoder.22} parent=0
    _
  %s9 = ssub.s32 1, %s7
  %s10 = scalar_select 0, %s9, %s7
  // Predicated region
  $region2: #{transformer_decoder.22} parent=0 // pred_check
    _
  $region3: #{transformer_decoder.22} parent=0 // pred_check_branch
    %12 = sbr.rel (0) target = $region5
  $region4: #{transformer_decoder.22} parent=0 // pred_region
    _
  $region5: #{transformer_decoder.22} parent=0 // pred_fallthru
    _
  // Predicated region
  $region6: #{transformer_decoder.22} parent=0 // pred_check
    _
  $region7: #{transformer_decoder.22} parent=0 // pred_check_branch
    %14 = sbr.rel (0) target = $region9
  $region8: #{transformer_decoder.22} parent=0 // pred_region
    _
  $region9: #{transformer_decoder.22} parent=0 // pred_fallthru
    _
  // Predicated region
  $region10: #{transformer_decoder.22} parent=0 // pred_check
    _
  $region11: #{transformer_decoder.22} parent=0 // pred_check_branch
    %16 = sbr.rel (0) target = $region13
  $region12: #{transformer_decoder.22} parent=0 // pred_region
    _
  $region13: #{transformer_decoder.22} parent=0 // pred_fallthru
    _
  // Predicated region
  $region14: #{transformer_decoder.22} parent=0 // pred_check
    _
  $region15: #{transformer_decoder.22} parent=0 // pred_check_branch
    %18 = sbr.rel (0) target = $region17
  $region16: #{transformer_decoder.22} parent=0 // pred_region
    _
  $region17: #{transformer_decoder.22} parent=0 // pred_fallthru
    _
  // Predicated region
  $region18: #{transformer_decoder.22} parent=0 // pred_check
    _
  $region19: #{transformer_decoder.22} parent=0 // pred_check_branch
    %20 = sbr.rel (0) target = $region21
  $region20: #{transformer_decoder.22} parent=0 // pred_region
    _
  $region21: #{transformer_decoder.22} parent=0 // pred_fallthru
    _
  // Predicated region
  $region22: #{transformer_decoder.22} parent=0 // pred_check
    _
  $region23: #{transformer_decoder.22} parent=0 // pred_check_branch
    %22 = sbr.rel (0) target = $region25
  $region24: #{transformer_decoder.22} parent=0 // pred_region
    _
  $region25: #{transformer_decoder.22} parent=0 // pred_fallthru
    _
  %v23 = vld [vmem:[%s0] sm:$0xff]
  %v24 = vld [vmem:[%s0 + $0x8] sm:$0xff]
  %v25 = vld [vmem:[%s1] sm:$0xff]
  %v26 = vld [vmem:[%s1 + $0x8] sm:$0xff]
  %v27 = vld [vmem:[%s1 + $0x10] sm:$0xff]
  %v28 = vld [vmem:[%s1 + $0x18] sm:$0xff]
  %v29 = vld [vmem:[%s2] sm:$0x1]
  %v31 = vlaneseq
  %v32 = vshrl.u32 %v31, 7
  %v33 = vsub.s32 0, %v32
  %v34 = vrot.slane %v29, %v33
  %vm36 = vcmask 261120
  %v38 = vsel %vm36, %v23, 0
  %v41 = vsel %vm36, %v24, 0
  %43 = vmatprep.subr.mxu0 0.0
  %44 = vmatpush1.msra.mxu0 %v25
  %45 = vmatprep.subr.mxu0 0.0
  %46 = vmatpush1.msra.mxu0 %v26
  %47 = vmatprep.subr.mxu0 0.0
  %48 = vmatpush1.msra.mxu0 %v27
  %49 = vmatprep.subr.mxu0 0.0
  %50 = vmatpush1.msra.mxu0 %v28
  %51 = vmatprep.subr.mxu0 0.0
  %52 = vmatpush1.msra.mxu0 0.0
  %53 = vmatprep.subr.mxu0 0.0
  %54 = vmatpush1.msra.mxu0 0.0
  %55 = vmatprep.subr.mxu0 0.0
  %56 = vmatpush1.msra.mxu0 0.0
  %57 = vmatprep.subr.mxu0 0.0
  %58 = vmatpush1.msra.mxu0 0.0
  %59 = vmatprep.subr.mxu0 0.0
  %60 = vmatpush1.msra.mxu0 0.0
  %61 = vmatprep.subr.mxu0 0.0
  %62 = vmatpush1.msra.mxu0 0.0
  %63 = vmatprep.subr.mxu0 0.0
  %64 = vmatpush1.msra.mxu0 0.0
  %65 = vmatprep.subr.mxu0 0.0
  %66 = vmatpush1.msra.mxu0 0.0
  %67 = vmatprep.subr.mxu0 0.0
  %68 = vmatpush1.msra.mxu0 0.0
  %69 = vmatprep.subr.mxu0 0.0
  %70 = vmatpush1.msra.mxu0 0.0
  %71 = vmatprep.subr.mxu0 0.0
  %72 = vmatpush1.msra.mxu0 0.0
  %73 = vmatprep.subr.mxu0 0.0
  %74 = vmatpush1.msra.mxu0 0.0
  %75 = vmatprep.subr.mxu0 0.0
  %76 = vmatpush1.msra.mxu0 0.0
  %77 = vmatprep.subr.mxu0 0.0
  %78 = vmatpush1.msra.mxu0 0.0
  %79 = vmatprep.subr.mxu0 0.0
  %80 = vmatpush1.msra.mxu0 0.0
  %81 = vmatprep.subr.mxu0 0.0
  %82 = vmatpush1.msra.mxu0 0.0
  %83 = vmatprep.subr.mxu0 0.0
  %84 = vmatpush1.msra.mxu0 0.0
  %85 = vmatprep.subr.mxu0 0.0
  %86 = vmatpush1.msra.mxu0 0.0
  %87 = vmatprep.subr.mxu0 0.0
  %88 = vmatpush1.msra.mxu0 0.0
  %89 = vmatprep.subr.mxu0 0.0
  %90 = vmatpush1.msra.mxu0 0.0
  %91 = vmatprep.subr.mxu0 0.0
  %92 = vmatpush1.msra.mxu0 0.0
  %93 = vmatprep.subr.mxu0 0.0
  %94 = vmatpush1.msra.mxu0 0.0
  %95 = vmatprep.subr.mxu0 0.0
  %96 = vmatpush1.msra.mxu0 0.0
  %97 = vmatprep.subr.mxu0 0.0
  %98 = vmatpush1.msra.mxu0 0.0
  %99 = vmatprep.subr.mxu0 0.0
  %100 = vmatpush1.msra.mxu0 0.0
  %101 = vmatprep.subr.mxu0 0.0
  %102 = vmatpush1.msra.mxu0 0.0
  %103 = vmatprep.subr.mxu0 0.0
  %104 = vmatpush1.msra.mxu0 0.0
  %105 = vmatprep.subr.mxu0 0.0
  %106 = vmatpush1.msra.mxu0 0.0
  %107 = vmatprep.mubr.f32.mxu0 0.0
  %108 = vmatmul.mubr.f32.gmra.mrb[0].mxu0 %v38
  %v109 = vpop.f32.mrb[0].mxu0
  %v110 = vadd.f32 %v34, %v109
  %v111 = vpop.f32.mrb[0].mxu0
  %112 = vmatprep.mubr.f32.mxu0 0.0
  %113 = vmatmul.mubr.f32.gmra.mrb[0].mxu0 %v41
  %v114 = vpop.f32.mrb[0].mxu0
  %v115 = vadd.f32 %v34, %v114
  %v116 = vpop.f32.mrb[0].mxu0
  %117 = vdwg.mxu0
  %v118 = vld [vmem:[%s3] sm:$0xff]
  %v119 = vld [vmem:[%s3 + $0x8] sm:$0xff]
  %v120 = vadd.f32 %v110, %v118
  %v121 = vadd.f32 %v115, %v119
  %v122 = vsel %vm36, %v120, 0.0
  %123 = vadd.xlane.f32.xlu0 %v122
  %v124 = vpop.xlane.xlu0 %123
  %v125 = vsel %vm36, %v121, 0.0
  %126 = vadd.xlane.f32.xlu0 %v125
  %v127 = vpop.xlane.xlu0 %126
  %v128 = vrcp.pop 32.0
  %v129 = vmul.f32 %v124, %v128
  %v130 = vmul.f32 %v127, %v128
  %v131 = vsub.f32 %v120, %v129
  %v132 = vsub.f32 %v121, %v130
  %v133 = vmul.f32 %v131, %v131
  %v134 = vmul.f32 %v132, %v132
  %v135 = vsel %vm36, %v133, 0.0
  %136 = vadd.xlane.f32.xlu0 %v135
  %v137 = vpop.xlane.xlu0 %136
  %v138 = vsel %vm36, %v134, 0.0
  %139 = vadd.xlane.f32.xlu0 %v138
  %v140 = vpop.xlane.xlu0 %139
  %v141 = vmul.f32 %v137, %v128
  %v142 = vmul.f32 %v140, %v128
  %v143 = vadd.f32 %v141, 1e-06
  %v144 = vadd.f32 %v142, 1e-06
  %v145 = vrsqrt.pop %v143
  %v146 = vrsqrt.pop %v144
  %v147 = vmul.f32 %v131, %v145
  %v148 = vmul.f32 %v132, %v146
  %v149 = vld [vmem:[%s4] sm:$0x1]
  %v151 = vlaneseq
  %v152 = vshrl.u32 %v151, 7
  %v153 = vsub.s32 0, %v152
  %v154 = vrot.slane %v149, %v153
  %v156 = vmul.f32 %v147, %v154
  %v157 = vmul.f32 %v148, %v154
  %v158 = vld [vmem:[%s5] sm:$0x1]
  %v160 = vlaneseq
  %v161 = vshrl.u32 %v160, 7
  %v162 = vsub.s32 0, %v161
  %v163 = vrot.slane %v158, %v162
  %v165 = vadd.f32 %v156, %v163
  %v166 = vadd.f32 %v157, %v163
  %167 = vst.msk [vmem:[%s6] sm:$0xff] %vm36, %v165
  %168 = vst.msk [vmem:[%s6 + $0x8] sm:$0xff] %vm36, %v166
  // Predicated region
  $region26: #{transformer_decoder.22} parent=0 // pred_check
    _
  $region27: #{transformer_decoder.22} parent=0 // pred_check_branch
    %170 = sbr.rel (0) target = $region29
  $region28: #{transformer_decoder.22} parent=0 // pred_region
    _
  $region29: #{transformer_decoder.22} parent=0 // pred_fallthru
    _
  // Predicated region
  $region30: #{transformer_decoder.22} parent=0 // pred_check
    _
  $region31: #{transformer_decoder.22} parent=0 // pred_check_branch
    %172 = sbr.rel (0) target = $region33
  $region32: #{transformer_decoder.22} parent=0 // pred_region
    _
  $region33: #{transformer_decoder.22} parent=0 // pred_fallthru
    _

// kernel: transformer_decoder.31
$region0: #{transformer_decoder.31}
  #allocation0 [shape = 'u32[]', space=smem, size = 0x4, offset = 0x4, fixed_abs, tag = 'smem constant byte address 0x4 - core index']
  #allocation1 [shape = 'u32[144,128]{1,0:T(1,128)}', space=vmem, size = 0x12000, scoped, tag = 'internal scratch']
  %s0 = inlined_call_operand.vmem [shape: f32[16,32], index: 0, kind: input, shape index: {}]
  %s1 = inlined_call_operand.vmem [shape: f32[32,64], index: 1, kind: input, shape index: {}]
  %s2 = inlined_call_operand.vmem [shape: f32[1,64], index: 2, kind: input, shape index: {}]
  %s3 = inlined_call_operand.vmem [shape: f32[64,32], index: 3, kind: input, shape index: {}]
  %s4 = inlined_call_operand.vmem [shape: f32[1,32], index: 4, kind: input, shape index: {}]
  %s5 = inlined_call_operand.vmem [shape: f32[1,32], index: 5, kind: input, shape index: {}]
  %s6 = inlined_call_operand.vmem [shape: f32[1,32], index: 6, kind: input, shape index: {}]
  %s7 = inlined_call_operand.hbm [shape: f32[16,32], index: 7, kind: output, shape index: {}]
  %s8 = sld [smem:[#allocation0]]
  $region38: #{transformer_decoder.31} parent=0
    _
  %s10 = ssub.s32 1, %s8
  %s11 = scalar_select 0, %s10, %s8
  $region1: #{transformer_decoder.31} parent=0
    #allocation2 [shape = 'u8[8192]{0}', space=vmem, size = 0x2000, scoped, tag = 'output window, operand 0, single buffered']
    #allocation3 [shape = 's32[1]{0}', space=sflag, size = 0x4, scoped, tag = 'scoped memory for transformer_decoder.31']
    %12 = vsyncpa [#allocation3], 0
    // Predicated region
    $region2: #{transformer_decoder.31} parent=1 // pred_check
      _
    $region3: #{transformer_decoder.31} parent=1 // pred_check_branch
      %14 = sbr.rel (0) target = $region5
    $region4: #{transformer_decoder.31} parent=1 // pred_region
      _
    $region5: #{transformer_decoder.31} parent=1 // pred_fallthru
      _
    // Predicated region
    $region6: #{transformer_decoder.31} parent=1 // pred_check
      _
    $region7: #{transformer_decoder.31} parent=1 // pred_check_branch
      %16 = sbr.rel (0) target = $region9
    $region8: #{transformer_decoder.31} parent=1 // pred_region
      _
    $region9: #{transformer_decoder.31} parent=1 // pred_fallthru
      _
    // Predicated region
    $region10: #{transformer_decoder.31} parent=1 // pred_check
      _
    $region11: #{transformer_decoder.31} parent=1 // pred_check_branch
      %18 = sbr.rel (0) target = $region13
    $region12: #{transformer_decoder.31} parent=1 // pred_region
      _
    $region13: #{transformer_decoder.31} parent=1 // pred_fallthru
      _
    // Predicated region
    $region14: #{transformer_decoder.31} parent=1 // pred_check
      _
    $region15: #{transformer_decoder.31} parent=1 // pred_check_branch
      %20 = sbr.rel (0) target = $region17
    $region16: #{transformer_decoder.31} parent=1 // pred_region
      _
    $region17: #{transformer_decoder.31} parent=1 // pred_fallthru
      _
    // Predicated region
    $region18: #{transformer_decoder.31} parent=1 // pred_check
      _
    $region19: #{transformer_decoder.31} parent=1 // pred_check_branch
      %22 = sbr.rel (0) target = $region21
    $region20: #{transformer_decoder.31} parent=1 // pred_region
      _
    $region21: #{transformer_decoder.31} parent=1 // pred_fallthru
      _
    // Predicated region
    $region22: #{transformer_decoder.31} parent=1 // pred_check
      _
    $region23: #{transformer_decoder.31} parent=1 // pred_check_branch
      %24 = sbr.rel (0) target = $region25
    $region24: #{transformer_decoder.31} parent=1 // pred_region
      _
    $region25: #{transformer_decoder.31} parent=1 // pred_fallthru
      _
    // Predicated region
    $region26: #{transformer_decoder.31} parent=1 // pred_check
      _
    $region27: #{transformer_decoder.31} parent=1 // pred_check_branch
      %26 = sbr.rel (0) target = $region29
    $region28: #{transformer_decoder.31} parent=1 // pred_region
      _
    $region29: #{transformer_decoder.31} parent=1 // pred_fallthru
      _
    %v27 = vld [vmem:[%s0] sm:$0xff]
    %v28 = vld [vmem:[%s0 + $0x8] sm:$0xff]
    %v29 = vld [vmem:[%s1] sm:$0xff]
    %v30 = vld [vmem:[%s1 + $0x8] sm:$0xff]
    %v31 = vld [vmem:[%s1 + $0x10] sm:$0xff]
    %v32 = vld [vmem:[%s1 + $0x18] sm:$0xff]
    %v33 = vld [vmem:[%s2] sm:$0x1]
    %v35 = vlaneseq
    %v36 = vshrl.u32 %v35, 7
    %v37 = vsub.s32 0, %v36
    %v38 = vrot.slane %v33, %v37
    %vm40 = vcmask 261120
    %v42 = vsel %vm40, %v27, 0
    %v45 = vsel %vm40, %v28, 0
    %47 = vmatprep.subr.mxu0 0.0
    %48 = vmatpush1.msra.mxu0 %v29
    %49 = vmatprep.subr.mxu0 0.0
    %50 = vmatpush1.msra.mxu0 %v30
    %51 = vmatprep.subr.mxu0 0.0
    %52 = vmatpush1.msra.mxu0 %v31
    %53 = vmatprep.subr.mxu0 0.0
    %54 = vmatpush1.msra.mxu0 %v32
    %55 = vmatprep.subr.mxu0 0.0
    %56 = vmatpush1.msra.mxu0 0.0
    %57 = vmatprep.subr.mxu0 0.0
    %58 = vmatpush1.msra.mxu0 0.0
    %59 = vmatprep.subr.mxu0 0.0
    %60 = vmatpush1.msra.mxu0 0.0
    %61 = vmatprep.subr.mxu0 0.0
    %62 = vmatpush1.msra.mxu0 0.0
    %63 = vmatprep.subr.mxu0 0.0
    %64 = vmatpush1.msra.mxu0 0.0
    %65 = vmatprep.subr.mxu0 0.0
    %66 = vmatpush1.msra.mxu0 0.0
    %67 = vmatprep.subr.mxu0 0.0
    %68 = vmatpush1.msra.mxu0 0.0
    %69 = vmatprep.subr.mxu0 0.0
    %70 = vmatpush1.msra.mxu0 0.0
    %71 = vmatprep.subr.mxu0 0.0
    %72 = vmatpush1.msra.mxu0 0.0
    %73 = vmatprep.subr.mxu0 0.0
    %74 = vmatpush1.msra.mxu0 0.0
    %75 = vmatprep.subr.mxu0 0.0
    %76 = vmatpush1.msra.mxu0 0.0
    %77 = vmatprep.subr.mxu0 0.0
    %78 = vmatpush1.msra.mxu0 0.0
    %79 = vmatprep.subr.mxu0 0.0
    %80 = vmatpush1.msra.mxu0 0.0
    %81 = vmatprep.subr.mxu0 0.0
    %82 = vmatpush1.msra.mxu0 0.0
    %83 = vmatprep.subr.mxu0 0.0
    %84 = vmatpush1.msra.mxu0 0.0
    %85 = vmatprep.subr.mxu0 0.0
    %86 = vmatpush1.msra.mxu0 0.0
    %87 = vmatprep.subr.mxu0 0.0
    %88 = vmatpush1.msra.mxu0 0.0
    %89 = vmatprep.subr.mxu0 0.0
    %90 = vmatpush1.msra.mxu0 0.0
    %91 = vmatprep.subr.mxu0 0.0
    %92 = vmatpush1.msra.mxu0 0.0
    %93 = vmatprep.subr.mxu0 0.0
    %94 = vmatpush1.msra.mxu0 0.0
    %95 = vmatprep.subr.mxu0 0.0
    %96 = vmatpush1.msra.mxu0 0.0
    %97 = vmatprep.subr.mxu0 0.0
    %98 = vmatpush1.msra.mxu0 0.0
    %99 = vmatprep.subr.mxu0 0.0
    %100 = vmatpush1.msra.mxu0 0.0
    %101 = vmatprep.subr.mxu0 0.0
    %102 = vmatpush1.msra.mxu0 0.0
    %103 = vmatprep.subr.mxu0 0.0
    %104 = vmatpush1.msra.mxu0 0.0
    %105 = vmatprep.subr.mxu0 0.0
    %106 = vmatpush1.msra.mxu0 0.0
    %107 = vmatprep.subr.mxu0 0.0
    %108 = vmatpush1.msra.mxu0 0.0
    %109 = vmatprep.subr.mxu0 0.0
    %110 = vmatpush1.msra.mxu0 0.0
    %111 = vmatprep.mubr.f32.mxu0 0.0
    %112 = vmatmul.mubr.f32.gmra.mrb[0].mxu0 %v42
    %v113 = vpop.f32.mrb[0].mxu0
    %v114 = vadd.f32 %v38, %v113
    %v115 = vpop.f32.mrb[0].mxu0
    %116 = vmatprep.mubr.f32.mxu0 0.0
    %117 = vmatmul.mubr.f32.gmra.mrb[0].mxu0 %v45
    %v118 = vpop.f32.mrb[0].mxu0
    %v119 = vadd.f32 %v38, %v118
    %v120 = vpop.f32.mrb[0].mxu0
    %121 = vdwg.mxu0
    %v122 = vmax.f32 %v114, 0.0
    %v123 = vmax.f32 %v119, 0.0
    %v124 = vld [vmem:[%s3] sm:$0xff]
    %v125 = vld [vmem:[%s3 + $0x8] sm:$0xff]
    %v126 = vld [vmem:[%s3 + $0x10] sm:$0xff]
    %v127 = vld [vmem:[%s3 + $0x18] sm:$0xff]
    %v128 = vld [vmem:[%s3 + $0x20] sm:$0xff]
    %v129 = vld [vmem:[%s3 + $0x28] sm:$0xff]
    %v130 = vld [vmem:[%s3 + $0x30] sm:$0xff]
    %v131 = vld [vmem:[%s3 + $0x38] sm:$0xff]
    %v132 = vld [vmem:[%s4] sm:$0x1]
    %v134 = vlaneseq
    %v135 = vshrl.u32 %v134, 7
    %v136 = vsub.s32 0, %v135
    %v137 = vrot.slane %v132, %v136
    %vm139 = vcmask 523264
    %v141 = vsel %vm139, %v122, 0
    %v144 = vsel %vm139, %v123, 0
    %146 = vmatprep.subr.mxu0 0.0
    %147 = vmatpush1.msra.mxu0 %v124
    %148 = vmatprep.subr.mxu0 0.0
    %149 = vmatpush1.msra.mxu0 %v125
    %150 = vmatprep.subr.mxu0 0.0
    %151 = vmatpush1.msra.mxu0 %v126
    %152 = vmatprep.subr.mxu0 0.0
    %153 = vmatpush1.msra.mxu0 %v127
    %154 = vmatprep.subr.mxu0 0.0
    %155 = vmatpush1.msra.mxu0 %v128
    %156 = vmatprep.subr.mxu0 0.0
    %157 = vmatpush1.msra.mxu0 %v129
    %158 = vmatprep.subr.mxu0 0.0
    %159 = vmatpush1.msra.mxu0 %v130
    %160 = vmatprep.subr.mxu0 0.0
    %161 = vmatpush1.msra.mxu0 %v131
    %162 = vmatprep.subr.mxu0 0.0
    %163 = vmatpush1.msra.mxu0 0.0
    %164 = vmatprep.subr.mxu0 0.0
    %165 = vmatpush1.msra.mxu0 0.0
    %166 = vmatprep.subr.mxu0 0.0
    %167 = vmatpush1.msra.mxu0 0.0
    %168 = vmatprep.subr.mxu0 0.0
    %169 = vmatpush1.msra.mxu0 0.0
    %170 = vmatprep.subr.mxu0 0.0
    %171 = vmatpush1.msra.mxu0 0.0
    %172 = vmatprep.subr.mxu0 0.0
    %173 = vmatpush1.msra.mxu0 0.0
    %174 = vmatprep.subr.mxu0 0.0
    %175 = vmatpush1.msra.mxu0 0.0
    %176 = vmatprep.subr.mxu0 0.0
    %177 = vmatpush1.msra.mxu0 0.0
    %178 = vmatprep.subr.mxu0 0.0
    %179 = vmatpush1.msra.mxu0 0.0
    %180 = vmatprep.subr.mxu0 0.0
    %181 = vmatpush1.msra.mxu0 0.0
    %182 = vmatprep.subr.mxu0 0.0
    %183 = vmatpush1.msra.mxu0 0.0
    %184 = vmatprep.subr.mxu0 0.0
    %185 = vmatpush1.msra.mxu0 0.0
    %186 = vmatprep.subr.mxu0 0.0
    %187 = vmatpush1.msra.mxu0 0.0
    %188 = vmatprep.subr.mxu0 0.0
    %189 = vmatpush1.msra.mxu0 0.0
    %190 = vmatprep.subr.mxu0 0.0
    %191 = vmatpush1.msra.mxu0 0.0
    %192 = vmatprep.subr.mxu0 0.0
    %193 = vmatpush1.msra.mxu0 0.0
    %194 = vmatprep.subr.mxu0 0.0
    %195 = vmatpush1.msra.mxu0 0.0
    %196 = vmatprep.subr.mxu0 0.0
    %197 = vmatpush1.msra.mxu0 0.0
    %198 = vmatprep.subr.mxu0 0.0
    %199 = vmatpush1.msra.mxu0 0.0
    %200 = vmatprep.subr.mxu0 0.0
    %201 = vmatpush1.msra.mxu0 0.0
    %202 = vmatprep.subr.mxu0 0.0
    %203 = vmatpush1.msra.mxu0 0.0
    %204 = vmatprep.subr.mxu0 0.0
    %205 = vmatpush1.msra.mxu0 0.0
    %206 = vmatprep.subr.mxu0 0.0
    %207 = vmatpush1.msra.mxu0 0.0
    %208 = vmatprep.subr.mxu0 0.0
    %209 = vmatpush1.msra.mxu0 0.0
    %210 = vmatprep.mubr.f32.mxu0 0.0
    %211 = vmatmul.mubr.f32.gmra.mrb[0].mxu0 %v141
    %v212 = vpop.f32.mrb[0].mxu0
    %v213 = vadd.f32 %v137, %v212
    %v214 = vpop.f32.mrb[0].mxu0
    %215 = vmatprep.mubr.f32.mxu0 0.0
    %216 = vmatmul.mubr.f32.gmra.mrb[0].mxu0 %v144
    %v217 = vpop.f32.mrb[0].mxu0
    %v218 = vadd.f32 %v137, %v217
    %v219 = vpop.f32.mrb[0].mxu0
    %220 = vdwg.mxu0
    %v221 = vadd.f32 %v213, %v27
    %v222 = vadd.f32 %v218, %v28
    %v223 = vsel %vm40, %v221, 0.0
    %224 = vadd.xlane.f32.xlu0 %v223
    %v225 = vpop.xlane.xlu0 %224
    %v226 = vsel %vm40, %v222, 0.0
    %227 = vadd.xlane.f32.xlu0 %v226
    %v228 = vpop.xlane.xlu0 %227
    %v229 = vrcp.pop 32.0
    %v230 = vmul.f32 %v225, %v229
    %v231 = vmul.f32 %v228, %v229
    %v232 = vsub.f32 %v221, %v230
    %v233 = vsub.f32 %v222, %v231
    %v234 = vmul.f32 %v232, %v232
    %v235 = vmul.f32 %v233, %v233
    %v236 = vsel %vm40, %v234, 0.0
    %237 = vadd.xlane.f32.xlu0 %v236
    %v238 = vpop.xlane.xlu0 %237
    %v239 = vsel %vm40, %v235, 0.0
    %240 = vadd.xlane.f32.xlu0 %v239
    %v241 = vpop.xlane.xlu0 %240
    %v242 = vmul.f32 %v238, %v229
    %v243 = vmul.f32 %v241, %v229
    %v244 = vadd.f32 %v242, 1e-06
    %v245 = vadd.f32 %v243, 1e-06
    %v246 = vrsqrt.pop %v244
    %v247 = vrsqrt.pop %v245
    %v248 = vmul.f32 %v232, %v246
    %v249 = vmul.f32 %v233, %v247
    %v250 = vld [vmem:[%s5] sm:$0x1]
    %v252 = vlaneseq
    %v253 = vshrl.u32 %v252, 7
    %v254 = vsub.s32 0, %v253
    %v255 = vrot.slane %v250, %v254
    %v257 = vmul.f32 %v248, %v255
    %v258 = vmul.f32 %v249, %v255
    %v259 = vld [vmem:[%s6] sm:$0x1]
    %v261 = vlaneseq
    %v262 = vshrl.u32 %v261, 7
    %v263 = vsub.s32 0, %v262
    %v264 = vrot.slane %v259, %v263
    %v266 = vadd.f32 %v257, %v264
    %v267 = vadd.f32 %v258, %v264
    %268 = vst.msk [vmem:[#allocation2] sm:$0xff] %vm40, %v266
    %269 = vst.msk [vmem:[#allocation2 + $0x8] sm:$0xff] %vm40, %v267
    // Predicated region
    $region30: #{transformer_decoder.31} parent=1 // pred_check
      _
    $region31: #{transformer_decoder.31} parent=1 // pred_check_branch
      %271 = sbr.rel (0) target = $region33
    $region32: #{transformer_decoder.31} parent=1 // pred_region
      %s273 = ssub.s32 256, 256
      %274 = vsyncadd [#allocation3], %s273
      %s275 = sshll.u32 [#allocation2], 4
      %s276 = int_to_ptr.vmem [resolvable:$true] %s275
      %281 = dma.vmem_to_hbm [thread:$0]  %s276, 256, %s7, [#allocation3], 128, 128, 8
    $region33: #{transformer_decoder.31} parent=1 // pred_fallthru
      _
    // Predicated region
    $region34: #{transformer_decoder.31} parent=1 // pred_check
      _
    $region35: #{transformer_decoder.31} parent=1 // pred_check_branch
      %283 = sbr.rel (0) target = $region37
    $region36: #{transformer_decoder.31} parent=1 // pred_region
      %284 = dma.done [#allocation3], 256
    $region37: #{transformer_decoder.31} parent=1 // pred_fallthru
      _
    %285 = vsyncpa [#allocation3], 1

</llo_original>
